<compile_context>
chip_gen: v7x
topology: tpu7x:2x2x1
jax: 0.10.0
libtpu: 0.0.40
codegen_flags: <defaults>
</compile_context>

<pallas_src>
from typing import NamedTuple

import numpy as np

import jax
import jax.numpy as jnp
from jax.experimental import pallas as pl
from jax.experimental.pallas import tpu as pltpu


# LeNet geometry for 3x32x32 inputs (fixed by fc1 = 16*5*5).
_OH1, _PH1 = 28, 14      # conv1 output rows, pool1 output rows
_OH2, _PH2 = 10, 5       # conv2 output rows, pool2 output rows
_K = 5                   # conv kernel size


def _round_up(n, m):
    return ((n + m - 1) // m) * m


class _Layout(NamedTuple):
    """Row offsets inside the packed weight slabs (all multiples of 16)."""
    batch: int
    # 256-lane bf16 slab
    m1_off: int
    m2_off: int
    cp1_off: int
    cp2_off: int
    rp1_off: int
    rp1_rows: int
    rp1_lanes: int
    rp1_odd: int
    rp2_off: int
    rp2_rows: int
    rp2_lanes: int
    rp2_odd: int
    w256_rows: int
    # 128-lane bf16 slab (FC weights)
    wf1_off: int
    wf2_off: int
    wf3_off: int
    w128_rows: int


def _layout(batch):
    rp1_lanes = _OH1 * batch
    rp1_odd = _round_up(_PH1 * batch, 8)
    rp1_rows = _round_up(rp1_odd + _PH1 * batch, 16)
    rp2_lanes = _OH2 * batch
    rp2_odd = _round_up(_PH2 * batch, 8)
    rp2_rows = _round_up(rp2_odd + _PH2 * batch, 16)
    m1_off = 0
    m2_off = m1_off + _K * 128
    cp1_off = m2_off + _K * 128
    cp2_off = cp1_off + 256
    rp1_off = cp2_off + 256
    rp2_off = rp1_off + rp1_rows
    w256_rows = rp2_off + rp2_rows
    wf1_off = 0
    wf2_off = wf1_off + _PH2 * 128
    wf3_off = wf2_off + 128
    w128_rows = wf3_off + 128
    return _Layout(batch=batch,
                   m1_off=m1_off, m2_off=m2_off, cp1_off=cp1_off, cp2_off=cp2_off,
                   rp1_off=rp1_off, rp1_rows=rp1_rows, rp1_lanes=rp1_lanes, rp1_odd=rp1_odd,
                   rp2_off=rp2_off, rp2_rows=rp2_rows, rp2_lanes=rp2_lanes, rp2_odd=rp2_odd,
                   w256_rows=w256_rows,
                   wf1_off=wf1_off, wf2_off=wf2_off, wf3_off=wf3_off, w128_rows=w128_rows)


# ----------------------------------------------------------------------------
# Fused LeNet kernel (single grid step, everything VMEM resident)
# ----------------------------------------------------------------------------
def _lenet_kernel(x_ref,        # (H*B, 128) f32 : rows = (h, b) interleaved, lanes = (c, w) zero-padded
                  w256_ref,     # (w256_rows, 256) bf16 : conv bands + pooling selectors
                  w128_ref,     # (w128_rows, 128) bf16 : fc1 (per-row) / fc2 / fc3
                  bias_ref,     # (8, 128) f32 : conv1, conv2, fc1, fc2, fc3 biases (padded rows)
                  o_ref,        # (B, 128) f32 : logits (lanes 0..9 valid)
                  h1_ref,       # VMEM scratch (14*B, 128) f32 : pooled conv1
                  h2_ref):      # VMEM scratch (5*B, 128) f32 : pooled conv2
    f32, bf16 = jnp.float32, jnp.bfloat16
    B = o_ref.shape[0]
    lo = _layout(B)

    def mm(a, b):
        return jnp.dot(a, b, preferred_element_type=f32)

    def w256(off, rows, lanes=256):
        return w256_ref[off:off + rows, 0:lanes]

    # ---- conv1: 5 shifted banded dots, batch folded into M -----------------
    y1 = mm(x_ref[pl.ds(0, _OH1 * B), :].astype(bf16), w256(lo.m1_off, 128))
    for i in range(1, _K):
        y1 = y1 + mm(x_ref[pl.ds(i * B, _OH1 * B), :].astype(bf16),
                     w256(lo.m1_off + i * 128, 128))

    # ---- 2x2 max-pool: one fused even/odd row dot + VPU max, then columns --
    pb1 = mm(w256(lo.rp1_off, lo.rp1_rows, lo.rp1_lanes), y1.astype(bf16))
    yr1 = jnp.maximum(pb1[0:_PH1 * B, :], pb1[lo.rp1_odd:lo.rp1_odd + _PH1 * B, :])
    zc1 = mm(yr1.astype(bf16), w256(lo.cp1_off, 256))
    # bias is constant per 2x2 window and ReLU is monotone, so
    # relu(maxpool(conv)+b) == maxpool(relu(conv+b)).
    h1_ref[...] = jnp.maximum(
        jnp.maximum(zc1[:, 0:128], zc1[:, 128:256]) + bias_ref[0:1, :], 0.0)

    # ---- conv2 + 2x2 max-pool + bias + ReLU ---------------------------------
    y2 = mm(h1_ref[pl.ds(0, _OH2 * B), :].astype(bf16), w256(lo.m2_off, 128))
    for i in range(1, _K):
        y2 = y2 + mm(h1_ref[pl.ds(i * B, _OH2 * B), :].astype(bf16),
                     w256(lo.m2_off + i * 128, 128))
    pb2 = mm(w256(lo.rp2_off, lo.rp2_rows, lo.rp2_lanes), y2.astype(bf16))
    yr2 = jnp.maximum(pb2[0:_PH2 * B, :], pb2[lo.rp2_odd:lo.rp2_odd + _PH2 * B, :])
    zc2 = mm(yr2.astype(bf16), w256(lo.cp2_off, 256))
    h2_ref[...] = jnp.maximum(
        jnp.maximum(zc2[:, 0:128], zc2[:, 128:256]) + bias_ref[1:2, :], 0.0)

    # ---- fc1 (flatten reorder folded into per-pooled-row weights) + ReLU ----
    z1 = mm(h2_ref[pl.ds(0, B), :].astype(bf16),
            w128_ref[lo.wf1_off:lo.wf1_off + 128, :])
    for h in range(1, _PH2):
        z1 = z1 + mm(h2_ref[pl.ds(h * B, B), :].astype(bf16),
                     w128_ref[lo.wf1_off + h * 128:lo.wf1_off + (h + 1) * 128, :])
    z1 = jnp.maximum(z1 + bias_ref[2:3, :], 0.0)

    # ---- fc2 + ReLU, fc3 -----------------------------------------------------
    z2 = jnp.maximum(
        mm(z1.astype(bf16), w128_ref[lo.wf2_off:lo.wf2_off + 128, :]) + bias_ref[3:4, :],
        0.0)
    o_ref[...] = (mm(z2.astype(bf16), w128_ref[lo.wf3_off:lo.wf3_off + 128, :])
                  + bias_ref[4:5, :])


# ----------------------------------------------------------------------------
# Host-side parameter repacking (done once; pure layout work)
# ----------------------------------------------------------------------------
def _build_conv_band(w, w_in, k_rows, n_lanes):
    """w:(OC,C,K,K) -> M:(K, k_rows, n_lanes) with
       M[i, c*w_in + ow + j, oc*w_out + ow] = w[oc, c, i, j] (zero-padded)."""
    w = np.asarray(w, np.float32)
    OC, C, K, _ = w.shape
    w_out = w_in - K + 1
    M = np.zeros((K, k_rows, n_lanes), np.float32)
    ow = np.arange(w_out)
    for i in range(K):
        for j in range(K):
            for c in range(C):
                for oc in range(OC):
                    M[i, c * w_in + ow + j, oc * w_out + ow] = w[oc, c, i, j]
    return M


def _build_row_pool(n_out, batch, odd_off, rows, lanes):
    """(rows, lanes) 0/1 selector for (h,b)-interleaved rows: output rows
       [0, n_out*B) pick even conv rows, [odd_off, odd_off+n_out*B) pick odd."""
    sel = np.zeros((rows, lanes), np.float32)
    for ph in range(n_out):
        for b in range(batch):
            sel[ph * batch + b, (2 * ph) * batch + b] = 1.0
            sel[odd_off + ph * batch + b, (2 * ph + 1) * batch + b] = 1.0
    return sel


def _build_col_pool(n_ch, w_out):
    """(256,256) 0/1 selector: even cols -> lanes [0, n_ch*w_out),
       odd cols -> lanes 128 + [0, n_ch*w_out)."""
    sel = np.zeros((256, 256), np.float32)
    for c in range(n_ch):
        for k in range(w_out):
            sel[c * 2 * w_out + 2 * k, c * w_out + k] = 1.0
            sel[c * 2 * w_out + 2 * k + 1, 128 + c * w_out + k] = 1.0
    return sel


def pack_lenet_params(params, batch):
    p = {k: np.asarray(v, np.float32) for k, v in params.items()}
    lo = _layout(batch)

    # --- 256-lane slab: conv bands + pooling selectors (bf16) ----------------
    w256 = np.zeros((lo.w256_rows, 256), np.float32)
    w256[lo.m1_off:lo.m1_off + _K * 128] = (
        _build_conv_band(p["conv1_w"], 32, 128, 256).reshape(-1, 256))
    w256[lo.m2_off:lo.m2_off + _K * 128] = (
        _build_conv_band(p["conv2_w"], 14, 128, 256).reshape(-1, 256))
    w256[lo.cp1_off:lo.cp1_off + 256] = _build_col_pool(6, _PH1)
    w256[lo.cp2_off:lo.cp2_off + 256] = _build_col_pool(16, _PH2)
    w256[lo.rp1_off:lo.rp1_off + lo.rp1_rows, :lo.rp1_lanes] = _build_row_pool(
        _PH1, batch, lo.rp1_odd, lo.rp1_rows, lo.rp1_lanes)
    w256[lo.rp2_off:lo.rp2_off + lo.rp2_rows, :lo.rp2_lanes] = _build_row_pool(
        _PH2, batch, lo.rp2_odd, lo.rp2_rows, lo.rp2_lanes)

    # --- 128-lane slab: FC weights (bf16) -------------------------------------
    # fc1 expects PyTorch flatten order (c, h, w); fold the reorder into a
    # per-pooled-row (h) weight block: wf1[h, c*5+w, n] = fc1_w[n, c*25+h*5+w].
    wf1 = np.zeros((_PH2, 128, 128), np.float32)
    wf1[:, :16 * _PH2, :120] = (p["fc1_w"].reshape(120, 16, 5, 5)
                                .transpose(2, 1, 3, 0).reshape(_PH2, 80, 120))
    w128 = np.zeros((lo.w128_rows, 128), np.float32)
    w128[lo.wf1_off:lo.wf1_off + _PH2 * 128] = wf1.reshape(-1, 128)
    w128[lo.wf2_off:lo.wf2_off + 128][:120, :84] = p["fc2_w"].T
    w128[lo.wf3_off:lo.wf3_off + 128][:84, :10] = p["fc3_w"].T

    # --- small f32 bias slab ---------------------------------------------------
    bias = np.zeros((8, 128), np.float32)
    bias[0, :6 * _PH1] = np.repeat(p["conv1_b"], _PH1)   # lane = oc*14 + w'
    bias[1, :16 * _PH2] = np.repeat(p["conv2_b"], _PH2)  # lane = oc*5 + w'
    bias[2, :120] = p["fc1_b"]
    bias[3, :84] = p["fc2_b"]
    bias[4, :10] = p["fc3_b"]

    return (jnp.asarray(w256, jnp.bfloat16),
            jnp.asarray(w128, jnp.bfloat16),
            jnp.asarray(bias, jnp.float32))


# ----------------------------------------------------------------------------
# Forward pass: single pallas_call, 4 input DMAs, 1 output DMA
# ----------------------------------------------------------------------------
def _full_spec(shape):
    n = len(shape)
    return pl.BlockSpec(shape, lambda i, n=n: (0,) * n)


def lenet_forward(packed, x):
    w256, w128, bias = packed
    B, C, H, W = x.shape
    lo = _layout(B)
    assert w256.shape[0] == lo.w256_rows, "packed params built for a different batch"

    # Layout plumbing only (one tiny fused XLA op): rows = (h, b) interleaved,
    # lanes = (c, w) zero-padded to 128.
    x2d = jnp.transpose(x, (2, 0, 1, 3)).reshape(H * B, C * W)
    x2d = jnp.pad(x2d, ((0, 0), (0, 128 - C * W)))

    operands = (x2d, w256, w128, bias)
    out = pl.pallas_call(
        _lenet_kernel,
        out_shape=jax.ShapeDtypeStruct((B, 128), jnp.float32),
        grid=(1,),
        in_specs=[_full_spec(a.shape) for a in operands],
        out_specs=_full_spec((B, 128)),
        scratch_shapes=[pltpu.VMEM((_PH1 * B, 128), jnp.float32),   # pooled conv1
                        pltpu.VMEM((_PH2 * B, 128), jnp.float32)],  # pooled conv2
        compiler_params=pltpu.CompilerParams(dimension_semantics=("arbitrary",)),
    )(*operands)
    return out[:, :10]


# ----------------------------------------------------------------------------
# Parameters (deterministic, PyTorch-style uniform(+-1/sqrt(fan_in)))
# ----------------------------------------------------------------------------
def init_lenet_params(key):
    def uni(k, shape, fan_in):
        bound = 1.0 / float(fan_in) ** 0.5
        return jax.random.uniform(k, shape, jnp.float32, -bound, bound)

    ks = jax.random.split(key, 10)
    return {
        "conv1_w": uni(ks[0], (6, 3, 5, 5), 3 * 5 * 5),
        "conv1_b": uni(ks[1], (6,), 3 * 5 * 5),
        "conv2_w": uni(ks[2], (16, 6, 5, 5), 6 * 5 * 5),
        "conv2_b": uni(ks[3], (16,), 6 * 5 * 5),
        "fc1_w": uni(ks[4], (120, 400), 400),
        "fc1_b": uni(ks[5], (120,), 400),
        "fc2_w": uni(ks[6], (84, 120), 120),
        "fc2_b": uni(ks[7], (84,), 120),
        "fc3_w": uni(ks[8], (10, 84), 84),
        "fc3_b": uni(ks[9], (10,), 84),
    }


# ----------------------------------------------------------------------------
# Plain numpy (float64) reference for correctness checks
# ----------------------------------------------------------------------------
def _lenet_reference(params, x, emulate_bf16):
    """float64 reference.  With emulate_bf16=True, every matmul operand
    (weights, input and the activations feeding the next matmul) is rounded to
    bf16 exactly where the kernel does; biases and accumulation stay wide."""
    if emulate_bf16:
        def r(a):
            a_bf = jnp.asarray(np.asarray(a, np.float32), jnp.bfloat16)
            return np.asarray(a_bf.astype(jnp.float32)).astype(np.float64)
    else:
        def r(a):
            return np.asarray(a, np.float64)

    p = {k: np.asarray(v, np.float64) for k, v in params.items()}
    xx = r(x)
    w1, w2 = r(p["conv1_w"]), r(p["conv2_w"])
    f1, f2, f3 = r(p["fc1_w"]), r(p["fc2_w"]), r(p["fc3_w"])

    def conv2d(a, w):
        Bn, Cn, Hn, Wn = a.shape
        OC, _, K, _ = w.shape
        OH, OW = Hn - K + 1, Wn - K + 1
        out = np.zeros((Bn, OC, OH, OW), np.float64)
        for i in range(K):
            for j in range(K):
                out += np.einsum("bchw,oc->bohw",
                                 a[:, :, i:i + OH, j:j + OW], w[:, :, i, j])
        return out

    def pool2(a):
        Bn, Cn, Hn, Wn = a.shape
        return a.reshape(Bn, Cn, Hn // 2, 2, Wn // 2, 2).max(axis=(3, 5))

    y1 = r(conv2d(xx, w1))
    h1 = r(np.maximum(pool2(y1) + p["conv1_b"][None, :, None, None], 0.0))
    y2 = r(conv2d(h1, w2))
    h2 = r(np.maximum(pool2(y2) + p["conv2_b"][None, :, None, None], 0.0))
    z = h2.reshape(x.shape[0], -1)
    z = r(np.maximum(z @ f1.T + p["fc1_b"], 0.0))
    z = r(np.maximum(z @ f2.T + p["fc2_b"], 0.0))
    return z @ f3.T + p["fc3_b"]


if __name__ == "__main__":
    key = jax.random.PRNGKey(0)
    k_params, k_x = jax.random.split(key)
    params = init_lenet_params(k_params)
    batch = 2
    # LeNet's fc1 (16*5*5 = 400) fixes the input to (3, 32, 32); batch = 2.
    x = jax.random.normal(k_x, (batch, 3, 32, 32), dtype=jnp.float32)

    packed = pack_lenet_params(params, batch)
    logits = jax.jit(lenet_forward)(packed, x)
    jax.block_until_ready(logits)
    assert logits.shape == (batch, 10), logits.shape

    out = np.asarray(logits).astype(np.float64)
    # Tight check against a reference that rounds matmul operands to bf16 in
    # the same places the kernel does (validates structure + f32 accumulation).
    np.testing.assert_allclose(out, _lenet_reference(params, x, emulate_bf16=True),
                               rtol=1e-2, atol=1e-2)
    # Loose sanity check against the exact f64 reference (bf16 MXU operands).
    np.testing.assert_allclose(out, _lenet_reference(params, x, emulate_bf16=False),
                               rtol=1e-1, atol=1e-1)
    print("KERNEL_OK")
</pallas_src>

<mosaic_0001>
module attributes {stable_mosaic.version = 11 : i64} {
  func.func @_lenet_kernel(%arg0: i32, %arg1: memref<64x128xf32, #tpu.memory_space<vmem>>, %arg2: memref<1888x256xbf16, #tpu.memory_space<vmem>>, %arg3: memref<896x128xbf16, #tpu.memory_space<vmem>>, %arg4: memref<8x128xf32, #tpu.memory_space<vmem>>, %arg5: memref<2x128xf32, #tpu.memory_space<vmem>>, %arg6: memref<28x128xf32, #tpu.memory_space<vmem>>, %arg7: memref<10x128xf32, #tpu.memory_space<vmem>>) attributes {dimension_semantics = [#tpu.dimension_semantics<arbitrary>], iteration_bounds = array<i64: 1>, scalar_prefetch = 0 : i64, scratch_operands = 2 : i64, tpu.core_type = #tpu.core_type<tc>, window_params = [{pipeline_mode = #tpu.pipeline_mode<synchronous>, transform_indices = @transform_0, window_bounds = array<i64: 64, 128>}, {pipeline_mode = #tpu.pipeline_mode<synchronous>, transform_indices = @transform_1, window_bounds = array<i64: 1888, 256>}, {pipeline_mode = #tpu.pipeline_mode<synchronous>, transform_indices = @transform_2, window_bounds = array<i64: 896, 128>}, {pipeline_mode = #tpu.pipeline_mode<synchronous>, transform_indices = @transform_3, window_bounds = array<i64: 8, 128>}, {pipeline_mode = #tpu.pipeline_mode<synchronous>, transform_indices = @transform_4, window_bounds = array<i64: 2, 128>}]} {
    %c0 = arith.constant 0 : index
    %c0_0 = arith.constant 0 : index
    %0 = vector.load %arg1[%c0, %c0_0] : memref<64x128xf32, #tpu.memory_space<vmem>>, vector<56x128xf32>
    %1 = arith.truncf %0 : vector<56x128xf32> to vector<56x128xbf16>
    %c0_1 = arith.constant 0 : index
    %c0_2 = arith.constant 0 : index
    %2 = vector.load %arg2[%c0_1, %c0_2] : memref<1888x256xbf16, #tpu.memory_space<vmem>>, vector<128x256xbf16>
    %cst = arith.constant dense<0.000000e+00> : vector<56x256xf32>
    %3 = tpu.matmul %1, %2, %cst {dimension_numbers = #tpu.dot_dimension_numbers<[1], [0], [0], [1], [0, 0, 1, 1], [], []>} : vector<56x128xbf16>, vector<128x256xbf16>, vector<56x256xf32> -> vector<56x256xf32>
    %c2 = arith.constant 2 : index
    %c0_3 = arith.constant 0 : index
    %4 = vector.load %arg1[%c2, %c0_3] : memref<64x128xf32, #tpu.memory_space<vmem>>, vector<56x128xf32>
    %5 = arith.truncf %4 : vector<56x128xf32> to vector<56x128xbf16>
    %c128 = arith.constant 128 : index
    %c0_4 = arith.constant 0 : index
    %6 = vector.load %arg2[%c128, %c0_4] : memref<1888x256xbf16, #tpu.memory_space<vmem>>, vector<128x256xbf16>
    %cst_5 = arith.constant dense<0.000000e+00> : vector<56x256xf32>
    %7 = tpu.matmul %5, %6, %cst_5 {dimension_numbers = #tpu.dot_dimension_numbers<[1], [0], [0], [1], [0, 0, 1, 1], [], []>} : vector<56x128xbf16>, vector<128x256xbf16>, vector<56x256xf32> -> vector<56x256xf32>
    %8 = arith.addf %3, %7 : vector<56x256xf32>
    %c4 = arith.constant 4 : index
    %c0_6 = arith.constant 0 : index
    %9 = vector.load %arg1[%c4, %c0_6] : memref<64x128xf32, #tpu.memory_space<vmem>>, vector<56x128xf32>
    %10 = arith.truncf %9 : vector<56x128xf32> to vector<56x128xbf16>
    %c256 = arith.constant 256 : index
    %c0_7 = arith.constant 0 : index
    %11 = vector.load %arg2[%c256, %c0_7] : memref<1888x256xbf16, #tpu.memory_space<vmem>>, vector<128x256xbf16>
    %cst_8 = arith.constant dense<0.000000e+00> : vector<56x256xf32>
    %12 = tpu.matmul %10, %11, %cst_8 {dimension_numbers = #tpu.dot_dimension_numbers<[1], [0], [0], [1], [0, 0, 1, 1], [], []>} : vector<56x128xbf16>, vector<128x256xbf16>, vector<56x256xf32> -> vector<56x256xf32>
    %13 = arith.addf %8, %12 : vector<56x256xf32>
    %c6 = arith.constant 6 : index
    %c0_9 = arith.constant 0 : index
    %14 = vector.load %arg1[%c6, %c0_9] : memref<64x128xf32, #tpu.memory_space<vmem>>, vector<56x128xf32>
    %15 = arith.truncf %14 : vector<56x128xf32> to vector<56x128xbf16>
    %c384 = arith.constant 384 : index
    %c0_10 = arith.constant 0 : index
    %16 = vector.load %arg2[%c384, %c0_10] : memref<1888x256xbf16, #tpu.memory_space<vmem>>, vector<128x256xbf16>
    %cst_11 = arith.constant dense<0.000000e+00> : vector<56x256xf32>
    %17 = tpu.matmul %15, %16, %cst_11 {dimension_numbers = #tpu.dot_dimension_numbers<[1], [0], [0], [1], [0, 0, 1, 1], [], []>} : vector<56x128xbf16>, vector<128x256xbf16>, vector<56x256xf32> -> vector<56x256xf32>
    %18 = arith.addf %13, %17 : vector<56x256xf32>
    %c8 = arith.constant 8 : index
    %c0_12 = arith.constant 0 : index
    %19 = vector.load %arg1[%c8, %c0_12] : memref<64x128xf32, #tpu.memory_space<vmem>>, vector<56x128xf32>
    %20 = arith.truncf %19 : vector<56x128xf32> to vector<56x128xbf16>
    %c512 = arith.constant 512 : index
    %c0_13 = arith.constant 0 : index
    %21 = vector.load %arg2[%c512, %c0_13] : memref<1888x256xbf16, #tpu.memory_space<vmem>>, vector<128x256xbf16>
    %cst_14 = arith.constant dense<0.000000e+00> : vector<56x256xf32>
    %22 = tpu.matmul %20, %21, %cst_14 {dimension_numbers = #tpu.dot_dimension_numbers<[1], [0], [0], [1], [0, 0, 1, 1], [], []>} : vector<56x128xbf16>, vector<128x256xbf16>, vector<56x256xf32> -> vector<56x256xf32>
    %23 = arith.addf %18, %22 : vector<56x256xf32>
    %c1792 = arith.constant 1792 : index
    %c0_15 = arith.constant 0 : index
    %24 = vector.load %arg2[%c1792, %c0_15] : memref<1888x256xbf16, #tpu.memory_space<vmem>>, vector<64x56xbf16>
    %25 = arith.truncf %23 : vector<56x256xf32> to vector<56x256xbf16>
    %cst_16 = arith.constant dense<0.000000e+00> : vector<64x256xf32>
    %26 = tpu.matmul %24, %25, %cst_16 {dimension_numbers = #tpu.dot_dimension_numbers<[1], [0], [0], [1], [0, 0, 1, 1], [], []>} : vector<64x56xbf16>, vector<56x256xbf16>, vector<64x256xf32> -> vector<64x256xf32>
    %27 = vector.extract_strided_slice %26 {offsets = [0, 0], sizes = [28, 256], strides = [1, 1]} : vector<64x256xf32> to vector<28x256xf32>
    %28 = vector.extract_strided_slice %26 {offsets = [32, 0], sizes = [28, 256], strides = [1, 1]} : vector<64x256xf32> to vector<28x256xf32>
    %29 = arith.maximumf %27, %28 : vector<28x256xf32>
    %30 = arith.truncf %29 : vector<28x256xf32> to vector<28x256xbf16>
    %c1280 = arith.constant 1280 : index
    %c0_17 = arith.constant 0 : index
    %31 = vector.load %arg2[%c1280, %c0_17] : memref<1888x256xbf16, #tpu.memory_space<vmem>>, vector<256x256xbf16>
    %cst_18 = arith.constant dense<0.000000e+00> : vector<28x256xf32>
    %32 = tpu.matmul %30, %31, %cst_18 {dimension_numbers = #tpu.dot_dimension_numbers<[1], [0], [0], [1], [0, 0, 1, 1], [], []>} : vector<28x256xbf16>, vector<256x256xbf16>, vector<28x256xf32> -> vector<28x256xf32>
    %33 = vector.extract_strided_slice %32 {offsets = [0, 0], sizes = [28, 128], strides = [1, 1]} : vector<28x256xf32> to vector<28x128xf32>
    %34 = vector.extract_strided_slice %32 {offsets = [0, 128], sizes = [28, 128], strides = [1, 1]} : vector<28x256xf32> to vector<28x128xf32>
    %35 = arith.maximumf %33, %34 : vector<28x128xf32>
    %c0_19 = arith.constant 0 : index
    %c0_20 = arith.constant 0 : index
    %36 = vector.load %arg4[%c0_19, %c0_20] : memref<8x128xf32, #tpu.memory_space<vmem>>, vector<1x128xf32>
    %37 = vector.broadcast %36 : vector<1x128xf32> to vector<28x128xf32>
    %38 = arith.addf %35, %37 : vector<28x128xf32>
    %cst_21 = arith.constant 0.000000e+00 : f32
    %39 = vector.broadcast %cst_21 : f32 to vector<28x128xf32>
    %40 = arith.maximumf %38, %39 : vector<28x128xf32>
    %c0_22 = arith.constant 0 : index
    %c0_23 = arith.constant 0 : index
    %41 = vector.load %arg6[%c0_22, %c0_23] : memref<28x128xf32, #tpu.memory_space<vmem>>, vector<28x128xf32>
    tpu.vector_store %arg6[%c0_22, %c0_23], %40 {strides = array<i32>} : memref<28x128xf32, #tpu.memory_space<vmem>>, vector<28x128xf32>,
    %c0_24 = arith.constant 0 : index
    %c0_25 = arith.constant 0 : index
    %42 = vector.load %arg6[%c0_24, %c0_25] : memref<28x128xf32, #tpu.memory_space<vmem>>, vector<20x128xf32>
    %43 = arith.truncf %42 : vector<20x128xf32> to vector<20x128xbf16>
    %c640 = arith.constant 640 : index
    %c0_26 = arith.constant 0 : index
    %44 = vector.load %arg2[%c640, %c0_26] : memref<1888x256xbf16, #tpu.memory_space<vmem>>, vector<128x256xbf16>
    %cst_27 = arith.constant dense<0.000000e+00> : vector<20x256xf32>
    %45 = tpu.matmul %43, %44, %cst_27 {dimension_numbers = #tpu.dot_dimension_numbers<[1], [0], [0], [1], [0, 0, 1, 1], [], []>} : vector<20x128xbf16>, vector<128x256xbf16>, vector<20x256xf32> -> vector<20x256xf32>
    %c2_28 = arith.constant 2 : index
    %c0_29 = arith.constant 0 : index
    %46 = vector.load %arg6[%c2_28, %c0_29] : memref<28x128xf32, #tpu.memory_space<vmem>>, vector<20x128xf32>
    %47 = arith.truncf %46 : vector<20x128xf32> to vector<20x128xbf16>
    %c768 = arith.constant 768 : index
    %c0_30 = arith.constant 0 : index
    %48 = vector.load %arg2[%c768, %c0_30] : memref<1888x256xbf16, #tpu.memory_space<vmem>>, vector<128x256xbf16>
    %cst_31 = arith.constant dense<0.000000e+00> : vector<20x256xf32>
    %49 = tpu.matmul %47, %48, %cst_31 {dimension_numbers = #tpu.dot_dimension_numbers<[1], [0], [0], [1], [0, 0, 1, 1], [], []>} : vector<20x128xbf16>, vector<128x256xbf16>, vector<20x256xf32> -> vector<20x256xf32>
    %50 = arith.addf %45, %49 : vector<20x256xf32>
    %c4_32 = arith.constant 4 : index
    %c0_33 = arith.constant 0 : index
    %51 = vector.load %arg6[%c4_32, %c0_33] : memref<28x128xf32, #tpu.memory_space<vmem>>, vector<20x128xf32>
    %52 = arith.truncf %51 : vector<20x128xf32> to vector<20x128xbf16>
    %c896 = arith.constant 896 : index
    %c0_34 = arith.constant 0 : index
    %53 = vector.load %arg2[%c896, %c0_34] : memref<1888x256xbf16, #tpu.memory_space<vmem>>, vector<128x256xbf16>
    %cst_35 = arith.constant dense<0.000000e+00> : vector<20x256xf32>
    %54 = tpu.matmul %52, %53, %cst_35 {dimension_numbers = #tpu.dot_dimension_numbers<[1], [0], [0], [1], [0, 0, 1, 1], [], []>} : vector<20x128xbf16>, vector<128x256xbf16>, vector<20x256xf32> -> vector<20x256xf32>
    %55 = arith.addf %50, %54 : vector<20x256xf32>
    %c6_36 = arith.constant 6 : index
    %c0_37 = arith.constant 0 : index
    %56 = vector.load %arg6[%c6_36, %c0_37] : memref<28x128xf32, #tpu.memory_space<vmem>>, vector<20x128xf32>
    %57 = arith.truncf %56 : vector<20x128xf32> to vector<20x128xbf16>
    %c1024 = arith.constant 1024 : index
    %c0_38 = arith.constant 0 : index
    %58 = vector.load %arg2[%c1024, %c0_38] : memref<1888x256xbf16, #tpu.memory_space<vmem>>, vector<128x256xbf16>
    %cst_39 = arith.constant dense<0.000000e+00> : vector<20x256xf32>
    %59 = tpu.matmul %57, %58, %cst_39 {dimension_numbers = #tpu.dot_dimension_numbers<[1], [0], [0], [1], [0, 0, 1, 1], [], []>} : vector<20x128xbf16>, vector<128x256xbf16>, vector<20x256xf32> -> vector<20x256xf32>
    %60 = arith.addf %55, %59 : vector<20x256xf32>
    %c8_40 = arith.constant 8 : index
    %c0_41 = arith.constant 0 : index
    %61 = vector.load %arg6[%c8_40, %c0_41] : memref<28x128xf32, #tpu.memory_space<vmem>>, vector<20x128xf32>
    %62 = arith.truncf %61 : vector<20x128xf32> to vector<20x128xbf16>
    %c1152 = arith.constant 1152 : index
    %c0_42 = arith.constant 0 : index
    %63 = vector.load %arg2[%c1152, %c0_42] : memref<1888x256xbf16, #tpu.memory_space<vmem>>, vector<128x256xbf16>
    %cst_43 = arith.constant dense<0.000000e+00> : vector<20x256xf32>
    %64 = tpu.matmul %62, %63, %cst_43 {dimension_numbers = #tpu.dot_dimension_numbers<[1], [0], [0], [1], [0, 0, 1, 1], [], []>} : vector<20x128xbf16>, vector<128x256xbf16>, vector<20x256xf32> -> vector<20x256xf32>
    %65 = arith.addf %60, %64 : vector<20x256xf32>
    %c1856 = arith.constant 1856 : index
    %c0_44 = arith.constant 0 : index
    %66 = vector.load %arg2[%c1856, %c0_44] : memref<1888x256xbf16, #tpu.memory_space<vmem>>, vector<32x20xbf16>
    %67 = arith.truncf %65 : vector<20x256xf32> to vector<20x256xbf16>
    %cst_45 = arith.constant dense<0.000000e+00> : vector<32x256xf32>
    %68 = tpu.matmul %66, %67, %cst_45 {dimension_numbers = #tpu.dot_dimension_numbers<[1], [0], [0], [1], [0, 0, 1, 1], [], []>} : vector<32x20xbf16>, vector<20x256xbf16>, vector<32x256xf32> -> vector<32x256xf32>
    %69 = vector.extract_strided_slice %68 {offsets = [0, 0], sizes = [10, 256], strides = [1, 1]} : vector<32x256xf32> to vector<10x256xf32>
    %70 = vector.extract_strided_slice %68 {offsets = [16, 0], sizes = [10, 256], strides = [1, 1]} : vector<32x256xf32> to vector<10x256xf32>
    %71 = arith.maximumf %69, %70 : vector<10x256xf32>
    %72 = arith.truncf %71 : vector<10x256xf32> to vector<10x256xbf16>
    %c1536 = arith.constant 1536 : index
    %c0_46 = arith.constant 0 : index
    %73 = vector.load %arg2[%c1536, %c0_46] : memref<1888x256xbf16, #tpu.memory_space<vmem>>, vector<256x256xbf16>
    %cst_47 = arith.constant dense<0.000000e+00> : vector<10x256xf32>
    %74 = tpu.matmul %72, %73, %cst_47 {dimension_numbers = #tpu.dot_dimension_numbers<[1], [0], [0], [1], [0, 0, 1, 1], [], []>} : vector<10x256xbf16>, vector<256x256xbf16>, vector<10x256xf32> -> vector<10x256xf32>
    %75 = vector.extract_strided_slice %74 {offsets = [0, 0], sizes = [10, 128], strides = [1, 1]} : vector<10x256xf32> to vector<10x128xf32>
    %76 = vector.extract_strided_slice %74 {offsets = [0, 128], sizes = [10, 128], strides = [1, 1]} : vector<10x256xf32> to vector<10x128xf32>
    %77 = arith.maximumf %75, %76 : vector<10x128xf32>
    %c1 = arith.constant 1 : index
    %c0_48 = arith.constant 0 : index
    %78 = vector.load %arg4[%c1, %c0_48] : memref<8x128xf32, #tpu.memory_space<vmem>>, vector<1x128xf32>
    %79 = vector.broadcast %78 : vector<1x128xf32> to vector<10x128xf32>
    %80 = arith.addf %77, %79 : vector<10x128xf32>
    %cst_49 = arith.constant 0.000000e+00 : f32
    %81 = vector.broadcast %cst_49 : f32 to vector<10x128xf32>
    %82 = arith.maximumf %80, %81 : vector<10x128xf32>
    %c0_50 = arith.constant 0 : index
    %c0_51 = arith.constant 0 : index
    %83 = vector.load %arg7[%c0_50, %c0_51] : memref<10x128xf32, #tpu.memory_space<vmem>>, vector<10x128xf32>
    tpu.vector_store %arg7[%c0_50, %c0_51], %82 {strides = array<i32>} : memref<10x128xf32, #tpu.memory_space<vmem>>, vector<10x128xf32>,
    %c0_52 = arith.constant 0 : index
    %c0_53 = arith.constant 0 : index
    %84 = vector.load %arg7[%c0_52, %c0_53] : memref<10x128xf32, #tpu.memory_space<vmem>>, vector<2x128xf32>
    %85 = arith.truncf %84 : vector<2x128xf32> to vector<2x128xbf16>
    %c0_54 = arith.constant 0 : index
    %c0_55 = arith.constant 0 : index
    %86 = vector.load %arg3[%c0_54, %c0_55] : memref<896x128xbf16, #tpu.memory_space<vmem>>, vector<128x128xbf16>
    %cst_56 = arith.constant dense<0.000000e+00> : vector<2x128xf32>
    %87 = tpu.matmul %85, %86, %cst_56 {dimension_numbers = #tpu.dot_dimension_numbers<[1], [0], [0], [1], [0, 0, 1, 1], [], []>} : vector<2x128xbf16>, vector<128x128xbf16>, vector<2x128xf32> -> vector<2x128xf32>
    %c2_57 = arith.constant 2 : index
    %c0_58 = arith.constant 0 : index
    %88 = vector.load %arg7[%c2_57, %c0_58] : memref<10x128xf32, #tpu.memory_space<vmem>>, vector<2x128xf32>
    %89 = arith.truncf %88 : vector<2x128xf32> to vector<2x128xbf16>
    %c128_59 = arith.constant 128 : index
    %c0_60 = arith.constant 0 : index
    %90 = vector.load %arg3[%c128_59, %c0_60] : memref<896x128xbf16, #tpu.memory_space<vmem>>, vector<128x128xbf16>
    %cst_61 = arith.constant dense<0.000000e+00> : vector<2x128xf32>
    %91 = tpu.matmul %89, %90, %cst_61 {dimension_numbers = #tpu.dot_dimension_numbers<[1], [0], [0], [1], [0, 0, 1, 1], [], []>} : vector<2x128xbf16>, vector<128x128xbf16>, vector<2x128xf32> -> vector<2x128xf32>
    %92 = arith.addf %87, %91 : vector<2x128xf32>
    %c4_62 = arith.constant 4 : index
    %c0_63 = arith.constant 0 : index
    %93 = vector.load %arg7[%c4_62, %c0_63] : memref<10x128xf32, #tpu.memory_space<vmem>>, vector<2x128xf32>
    %94 = arith.truncf %93 : vector<2x128xf32> to vector<2x128xbf16>
    %c256_64 = arith.constant 256 : index
    %c0_65 = arith.constant 0 : index
    %95 = vector.load %arg3[%c256_64, %c0_65] : memref<896x128xbf16, #tpu.memory_space<vmem>>, vector<128x128xbf16>
    %cst_66 = arith.constant dense<0.000000e+00> : vector<2x128xf32>
    %96 = tpu.matmul %94, %95, %cst_66 {dimension_numbers = #tpu.dot_dimension_numbers<[1], [0], [0], [1], [0, 0, 1, 1], [], []>} : vector<2x128xbf16>, vector<128x128xbf16>, vector<2x128xf32> -> vector<2x128xf32>
    %97 = arith.addf %92, %96 : vector<2x128xf32>
    %c6_67 = arith.constant 6 : index
    %c0_68 = arith.constant 0 : index
    %98 = vector.load %arg7[%c6_67, %c0_68] : memref<10x128xf32, #tpu.memory_space<vmem>>, vector<2x128xf32>
    %99 = arith.truncf %98 : vector<2x128xf32> to vector<2x128xbf16>
    %c384_69 = arith.constant 384 : index
    %c0_70 = arith.constant 0 : index
    %100 = vector.load %arg3[%c384_69, %c0_70] : memref<896x128xbf16, #tpu.memory_space<vmem>>, vector<128x128xbf16>
    %cst_71 = arith.constant dense<0.000000e+00> : vector<2x128xf32>
    %101 = tpu.matmul %99, %100, %cst_71 {dimension_numbers = #tpu.dot_dimension_numbers<[1], [0], [0], [1], [0, 0, 1, 1], [], []>} : vector<2x128xbf16>, vector<128x128xbf16>, vector<2x128xf32> -> vector<2x128xf32>
    %102 = arith.addf %97, %101 : vector<2x128xf32>
    %c8_72 = arith.constant 8 : index
    %c0_73 = arith.constant 0 : index
    %103 = vector.load %arg7[%c8_72, %c0_73] : memref<10x128xf32, #tpu.memory_space<vmem>>, vector<2x128xf32>
    %104 = arith.truncf %103 : vector<2x128xf32> to vector<2x128xbf16>
    %c512_74 = arith.constant 512 : index
    %c0_75 = arith.constant 0 : index
    %105 = vector.load %arg3[%c512_74, %c0_75] : memref<896x128xbf16, #tpu.memory_space<vmem>>, vector<128x128xbf16>
    %cst_76 = arith.constant dense<0.000000e+00> : vector<2x128xf32>
    %106 = tpu.matmul %104, %105, %cst_76 {dimension_numbers = #tpu.dot_dimension_numbers<[1], [0], [0], [1], [0, 0, 1, 1], [], []>} : vector<2x128xbf16>, vector<128x128xbf16>, vector<2x128xf32> -> vector<2x128xf32>
    %107 = arith.addf %102, %106 : vector<2x128xf32>
    %c2_77 = arith.constant 2 : index
    %c0_78 = arith.constant 0 : index
    %108 = vector.load %arg4[%c2_77, %c0_78] : memref<8x128xf32, #tpu.memory_space<vmem>>, vector<1x128xf32>
    %109 = vector.broadcast %108 : vector<1x128xf32> to vector<2x128xf32>
    %110 = arith.addf %107, %109 : vector<2x128xf32>
    %cst_79 = arith.constant 0.000000e+00 : f32
    %111 = vector.broadcast %cst_79 : f32 to vector<2x128xf32>
    %112 = arith.maximumf %110, %111 : vector<2x128xf32>
    %113 = arith.truncf %112 : vector<2x128xf32> to vector<2x128xbf16>
    %c640_80 = arith.constant 640 : index
    %c0_81 = arith.constant 0 : index
    %114 = vector.load %arg3[%c640_80, %c0_81] : memref<896x128xbf16, #tpu.memory_space<vmem>>, vector<128x128xbf16>
    %cst_82 = arith.constant dense<0.000000e+00> : vector<2x128xf32>
    %115 = tpu.matmul %113, %114, %cst_82 {dimension_numbers = #tpu.dot_dimension_numbers<[1], [0], [0], [1], [0, 0, 1, 1], [], []>} : vector<2x128xbf16>, vector<128x128xbf16>, vector<2x128xf32> -> vector<2x128xf32>
    %c3 = arith.constant 3 : index
    %c0_83 = arith.constant 0 : index
    %116 = vector.load %arg4[%c3, %c0_83] : memref<8x128xf32, #tpu.memory_space<vmem>>, vector<1x128xf32>
    %117 = vector.broadcast %116 : vector<1x128xf32> to vector<2x128xf32>
    %118 = arith.addf %115, %117 : vector<2x128xf32>
    %cst_84 = arith.constant 0.000000e+00 : f32
    %119 = vector.broadcast %cst_84 : f32 to vector<2x128xf32>
    %120 = arith.maximumf %118, %119 : vector<2x128xf32>
    %121 = arith.truncf %120 : vector<2x128xf32> to vector<2x128xbf16>
    %c768_85 = arith.constant 768 : index
    %c0_86 = arith.constant 0 : index
    %122 = vector.load %arg3[%c768_85, %c0_86] : memref<896x128xbf16, #tpu.memory_space<vmem>>, vector<128x128xbf16>
    %cst_87 = arith.constant dense<0.000000e+00> : vector<2x128xf32>
    %123 = tpu.matmul %121, %122, %cst_87 {dimension_numbers = #tpu.dot_dimension_numbers<[1], [0], [0], [1], [0, 0, 1, 1], [], []>} : vector<2x128xbf16>, vector<128x128xbf16>, vector<2x128xf32> -> vector<2x128xf32>
    %c4_88 = arith.constant 4 : index
    %c0_89 = arith.constant 0 : index
    %124 = vector.load %arg4[%c4_88, %c0_89] : memref<8x128xf32, #tpu.memory_space<vmem>>, vector<1x128xf32>
    %125 = vector.broadcast %124 : vector<1x128xf32> to vector<2x128xf32>
    %126 = arith.addf %123, %125 : vector<2x128xf32>
    %c0_90 = arith.constant 0 : index
    %c0_91 = arith.constant 0 : index
    %127 = vector.load %arg5[%c0_90, %c0_91] : memref<2x128xf32, #tpu.memory_space<vmem>>, vector<2x128xf32>
    tpu.vector_store %arg5[%c0_90, %c0_91], %126 {strides = array<i32>} : memref<2x128xf32, #tpu.memory_space<vmem>>, vector<2x128xf32>,
    return
  }
  func.func @transform_0(%arg0: i32) -> (i32, i32) {
    %c0_i32 = arith.constant 0 : i32
    %c0_i32_0 = arith.constant 0 : i32
    %c0_i32_1 = arith.constant 0 : i32
    return %c0_i32, %c0_i32_0 : i32, i32
  }
  func.func @transform_1(%arg0: i32) -> (i32, i32) {
    %c0_i32 = arith.constant 0 : i32
    %c0_i32_0 = arith.constant 0 : i32
    %c0_i32_1 = arith.constant 0 : i32
    return %c0_i32, %c0_i32_0 : i32, i32
  }
  func.func @transform_2(%arg0: i32) -> (i32, i32) {
    %c0_i32 = arith.constant 0 : i32
    %c0_i32_0 = arith.constant 0 : i32
    %c0_i32_1 = arith.constant 0 : i32
    return %c0_i32, %c0_i32_0 : i32, i32
  }
  func.func @transform_3(%arg0: i32) -> (i32, i32) {
    %c0_i32 = arith.constant 0 : i32
    %c0_i32_0 = arith.constant 0 : i32
    %c0_i32_1 = arith.constant 0 : i32
    return %c0_i32, %c0_i32_0 : i32, i32
  }
  func.func @transform_4(%arg0: i32) -> (i32, i32) {
    %c0_i32 = arith.constant 0 : i32
    %c0_i32_0 = arith.constant 0 : i32
    %c0_i32_1 = arith.constant 0 : i32
    return %c0_i32, %c0_i32_0 : i32, i32
  }
}

</mosaic_0001>

<llo_original>
// kernel: lenet_forward.1
$region0: #{lenet_forward.1}
  #allocation0 [shape = 'u32[]', space=smem, size = 0x4, offset = 0x4, fixed_abs, tag = 'smem constant byte address 0x4 - core index']
  #allocation1 [shape = 'u32[144,128]{1,0:T(1,128)}', space=vmem, size = 0x12000, scoped, tag = 'internal scratch']
  #allocation2 [shape = 'f32[28,128]{1,0:T(8,128)}', space=vmem, size = 0x4000, scoped, tag = 'scratch operand']
  #allocation3 [shape = 'f32[10,128]{1,0:T(8,128)}', space=vmem, size = 0x2000, scoped, tag = 'scratch operand']
  %s0 = inlined_call_operand.vmem [shape: f32[64,128], index: 0, kind: input, shape index: {}]
  %s1 = inlined_call_operand.hbm [shape: bf16[1888,256], index: 1, kind: input, shape index: {}]
  %s2 = inlined_call_operand.vmem [shape: bf16[896,128], index: 2, kind: input, shape index: {}]
  %s3 = inlined_call_operand.vmem [shape: f32[8,128], index: 3, kind: input, shape index: {}]
  %s4 = inlined_call_operand.hbm [shape: f32[2,128], index: 4, kind: output, shape index: {}]
  %s5 = sld [smem:[#allocation0]]
  $region30: #{lenet_forward.1} parent=0
    _
  %s7 = ssub.s32 1, %s5
  %s8 = scalar_select 0, %s7, %s5
  $region1: #{lenet_forward.1} parent=0
    #allocation4 [shape = 'u8[966656]{0}', space=vmem, size = 0xec000, scoped, tag = 'input window, operand 1, single buffered']
    #allocation5 [shape = 's32[1]{0}', space=sflag, size = 0x4, scoped, tag = 'scoped memory for lenet_forward.1']
    #allocation6 [shape = 's32[1]{0}', space=sflag, size = 0x4, scoped, tag = 'scoped memory for lenet_forward.1']
    #allocation7 [shape = 'u8[1024]{0}', space=vmem, size = 0x400, scoped, tag = 'output window, operand 0, single buffered']
    %9 = vsyncpa [#allocation5], 0
    %10 = vsyncpa [#allocation6], 0
    // Predicated region
    $region2: #{lenet_forward.1} parent=1 // pred_check
      _
    $region3: #{lenet_forward.1} parent=1 // pred_check_branch
      %12 = sbr.rel (0) target = $region5
    $region4: #{lenet_forward.1} parent=1 // pred_region
      _
    $region5: #{lenet_forward.1} parent=1 // pred_fallthru
      _
    // Predicated region
    $region6: #{lenet_forward.1} parent=1 // pred_check
      _
    $region7: #{lenet_forward.1} parent=1 // pred_check_branch
      %14 = sbr.rel (0) target = $region9
    $region8: #{lenet_forward.1} parent=1 // pred_region
      %s16 = ssub.s32 30208, 30208
      %17 = vsyncadd [#allocation5], %s16
      %s18 = sshll.u32 [#allocation4], 4
      %s19 = int_to_ptr.vmem [resolvable:$true] %s18
      %24 = dma.hbm_to_vmem [thread:$0]  %s1, 30208, %s19, [#allocation5], 128, 128, 8
    $region9: #{lenet_forward.1} parent=1 // pred_fallthru
      _
    // Predicated region
    $region10: #{lenet_forward.1} parent=1 // pred_check
      _
    $region11: #{lenet_forward.1} parent=1 // pred_check_branch
      %26 = sbr.rel (0) target = $region13
    $region12: #{lenet_forward.1} parent=1 // pred_region
      _
    $region13: #{lenet_forward.1} parent=1 // pred_fallthru
      _
    // Predicated region
    $region14: #{lenet_forward.1} parent=1 // pred_check
      _
    $region15: #{lenet_forward.1} parent=1 // pred_check_branch
      %28 = sbr.rel (0) target = $region17
    $region16: #{lenet_forward.1} parent=1 // pred_region
      _
    $region17: #{lenet_forward.1} parent=1 // pred_fallthru
      _
    // Predicated region
    $region18: #{lenet_forward.1} parent=1 // pred_check
      _
    $region19: #{lenet_forward.1} parent=1 // pred_check_branch
      %30 = sbr.rel (0) target = $region21
    $region20: #{lenet_forward.1} parent=1 // pred_region
      %31 = dma.done [#allocation5], 30208
    $region21: #{lenet_forward.1} parent=1 // pred_fallthru
      _
    %v33 = vld [vmem:[%s0] sm:$0xff]
    %v34 = vld [vmem:[%s0 + $0x8] sm:$0xff]
    %v35 = vld [vmem:[%s0 + $0x10] sm:$0xff]
    %v36 = vld [vmem:[%s0 + $0x18] sm:$0xff]
    %v37 = vld [vmem:[%s0 + $0x20] sm:$0xff]
    %v38 = vld [vmem:[%s0 + $0x28] sm:$0xff]
    %v39 = vld [vmem:[%s0 + $0x30] sm:$0xff]
    %v40 = vpack.c.bf16 %v34, %v33
    %v41 = vpack.c.bf16 %v36, %v35
    %v42 = vpack.c.bf16 %v38, %v37
    %v43 = vpack.c.bf16 %v39, %v39
    %v44 = vld [vmem:[#allocation4] sm:$0xff]
    %v45 = vld [vmem:[#allocation4 + $0x8] sm:$0xff]
    %v46 = vld [vmem:[#allocation4 + $0x10] sm:$0xff]
    %v47 = vld [vmem:[#allocation4 + $0x18] sm:$0xff]
    %v48 = vld [vmem:[#allocation4 + $0x20] sm:$0xff]
    %v49 = vld [vmem:[#allocation4 + $0x28] sm:$0xff]
    %v50 = vld [vmem:[#allocation4 + $0x30] sm:$0xff]
    %v51 = vld [vmem:[#allocation4 + $0x38] sm:$0xff]
    %v52 = vld [vmem:[#allocation4 + $0x40] sm:$0xff]
    %v53 = vld [vmem:[#allocation4 + $0x48] sm:$0xff]
    %v54 = vld [vmem:[#allocation4 + $0x50] sm:$0xff]
    %v55 = vld [vmem:[#allocation4 + $0x58] sm:$0xff]
    %v56 = vld [vmem:[#allocation4 + $0x60] sm:$0xff]
    %v57 = vld [vmem:[#allocation4 + $0x68] sm:$0xff]
    %v58 = vld [vmem:[#allocation4 + $0x70] sm:$0xff]
    %v59 = vld [vmem:[#allocation4 + $0x78] sm:$0xff]
    %v60 = vld [vmem:[%s0 + $0x2] sm:$0xff]
    %v61 = vld [vmem:[%s0 + $0xa] sm:$0xff]
    %v62 = vld [vmem:[%s0 + $0x12] sm:$0xff]
    %v63 = vld [vmem:[%s0 + $0x1a] sm:$0xff]
    %v64 = vld [vmem:[%s0 + $0x22] sm:$0xff]
    %v65 = vld [vmem:[%s0 + $0x2a] sm:$0xff]
    %v66 = vld [vmem:[%s0 + $0x32] sm:$0xff]
    %v67 = vpack.c.bf16 %v61, %v60
    %v68 = vpack.c.bf16 %v63, %v62
    %v69 = vpack.c.bf16 %v65, %v64
    %v70 = vpack.c.bf16 %v66, %v66
    %v71 = vld [vmem:[#allocation4 + $0x80] sm:$0xff]
    %v72 = vld [vmem:[#allocation4 + $0x88] sm:$0xff]
    %v73 = vld [vmem:[#allocation4 + $0x90] sm:$0xff]
    %v74 = vld [vmem:[#allocation4 + $0x98] sm:$0xff]
    %v75 = vld [vmem:[#allocation4 + $0xa0] sm:$0xff]
    %v76 = vld [vmem:[#allocation4 + $0xa8] sm:$0xff]
    %v77 = vld [vmem:[#allocation4 + $0xb0] sm:$0xff]
    %v78 = vld [vmem:[#allocation4 + $0xb8] sm:$0xff]
    %v79 = vld [vmem:[#allocation4 + $0xc0] sm:$0xff]
    %v80 = vld [vmem:[#allocation4 + $0xc8] sm:$0xff]
    %v81 = vld [vmem:[#allocation4 + $0xd0] sm:$0xff]
    %v82 = vld [vmem:[#allocation4 + $0xd8] sm:$0xff]
    %v83 = vld [vmem:[#allocation4 + $0xe0] sm:$0xff]
    %v84 = vld [vmem:[#allocation4 + $0xe8] sm:$0xff]
    %v85 = vld [vmem:[#allocation4 + $0xf0] sm:$0xff]
    %v86 = vld [vmem:[#allocation4 + $0xf8] sm:$0xff]
    %v103 = vunpack.c.l.b16 %v71
    %v104 = vunpack.c.h.b16 %v71
    %v105 = vunpack.c.l.b16 %v72
    %v106 = vunpack.c.h.b16 %v72
    %v107 = vunpack.c.l.b16 %v73
    %v108 = vunpack.c.h.b16 %v73
    %v109 = vunpack.c.l.b16 %v74
    %v110 = vunpack.c.h.b16 %v74
    %v111 = vunpack.c.l.b16 %v75
    %v112 = vunpack.c.h.b16 %v75
    %v113 = vunpack.c.l.b16 %v76
    %v114 = vunpack.c.h.b16 %v76
    %v115 = vunpack.c.l.b16 %v77
    %v116 = vunpack.c.h.b16 %v77
    %v117 = vunpack.c.l.b16 %v78
    %v118 = vunpack.c.h.b16 %v78
    %v119 = vunpack.c.l.b16 %v79
    %v120 = vunpack.c.h.b16 %v79
    %v121 = vunpack.c.l.b16 %v80
    %v122 = vunpack.c.h.b16 %v80
    %v123 = vunpack.c.l.b16 %v81
    %v124 = vunpack.c.h.b16 %v81
    %v125 = vunpack.c.l.b16 %v82
    %v126 = vunpack.c.h.b16 %v82
    %v127 = vunpack.c.l.b16 %v83
    %v128 = vunpack.c.h.b16 %v83
    %v129 = vunpack.c.l.b16 %v84
    %v130 = vunpack.c.h.b16 %v84
    %v131 = vunpack.c.l.b16 %v85
    %v132 = vunpack.c.h.b16 %v85
    %v133 = vunpack.c.l.b16 %v86
    %v134 = vunpack.c.h.b16 %v86
    %v135 = vpack.c.b16 %v105, %v103
    %v136 = vpack.c.b16 %v106, %v104
    %v137 = vpack.c.b16 %v109, %v107
    %v138 = vpack.c.b16 %v110, %v108
    %v139 = vpack.c.b16 %v113, %v111
    %v140 = vpack.c.b16 %v114, %v112
    %v141 = vpack.c.b16 %v117, %v115
    %v142 = vpack.c.b16 %v118, %v116
    %v143 = vpack.c.b16 %v121, %v119
    %v144 = vpack.c.b16 %v122, %v120
    %v145 = vpack.c.b16 %v125, %v123
    %v146 = vpack.c.b16 %v126, %v124
    %v147 = vpack.c.b16 %v129, %v127
    %v148 = vpack.c.b16 %v130, %v128
    %v149 = vpack.c.b16 %v133, %v131
    %v150 = vpack.c.b16 %v134, %v132
    %167 = vmatprep.subr.bf16.mxu0 %v136
    %168 = vmatpush1.bf16.msra.mxu0 %v135
    %169 = vmatprep.subr.bf16.mxu0 %v138
    %170 = vmatpush1.bf16.msra.mxu0 %v137
    %171 = vmatprep.subr.bf16.mxu0 %v140
    %172 = vmatpush1.bf16.msra.mxu0 %v139
    %173 = vmatprep.subr.bf16.mxu0 %v142
    %174 = vmatpush1.bf16.msra.mxu0 %v141
    %175 = vmatprep.subr.bf16.mxu0 %v144
    %176 = vmatpush1.bf16.msra.mxu0 %v143
    %177 = vmatprep.subr.bf16.mxu0 %v146
    %178 = vmatpush1.bf16.msra.mxu0 %v145
    %179 = vmatprep.subr.bf16.mxu0 %v148
    %180 = vmatpush1.bf16.msra.mxu0 %v147
    %181 = vmatprep.subr.bf16.mxu0 %v150
    %182 = vmatpush1.bf16.msra.mxu0 %v149
    %183 = vmatprep.subr.bf16.mxu0 0
    %184 = vmatpush1.bf16.msra.mxu0 0
    %185 = vmatprep.subr.bf16.mxu0 0
    %186 = vmatpush1.bf16.msra.mxu0 0
    %187 = vmatprep.subr.bf16.mxu0 0
    %188 = vmatpush1.bf16.msra.mxu0 0
    %189 = vmatprep.subr.bf16.mxu0 0
    %190 = vmatpush1.bf16.msra.mxu0 0
    %191 = vmatprep.subr.bf16.mxu0 0
    %192 = vmatpush1.bf16.msra.mxu0 0
    %193 = vmatprep.subr.bf16.mxu0 0
    %194 = vmatpush1.bf16.msra.mxu0 0
    %195 = vmatprep.subr.bf16.mxu0 0
    %196 = vmatpush1.bf16.msra.mxu0 0
    %197 = vmatprep.subr.bf16.mxu0 0
    %198 = vmatpush1.bf16.msra.mxu0 0
    %199 = vmatprep.mubr.bf16.mxu0 0
    %200 = vmatmul.mubr.bf16.gmra.mrb[0].mxu0 %v67
    %v201 = vpop.f32.mrb[0].mxu0
    %v202 = vadd.f32 0.0, %v201
    %v203 = vpop.f32.mrb[0].mxu0
    %v204 = vadd.f32 0.0, %v203
    %v205 = vpop.f32.mrb[0].mxu0
    %v206 = vadd.f32 0.0, %v205
    %v207 = vpop.f32.mrb[0].mxu0
    %v208 = vadd.f32 0.0, %v207
    %209 = vmatprep.mubr.bf16.mxu0 0
    %210 = vmatmul.mubr.bf16.gmra.mrb[0].mxu0 %v68
    %v211 = vpop.f32.mrb[0].mxu0
    %v212 = vadd.f32 0.0, %v211
    %v213 = vpop.f32.mrb[0].mxu0
    %v214 = vadd.f32 0.0, %v213
    %v215 = vpop.f32.mrb[0].mxu0
    %v216 = vadd.f32 0.0, %v215
    %v217 = vpop.f32.mrb[0].mxu0
    %v218 = vadd.f32 0.0, %v217
    %219 = vmatprep.mubr.bf16.mxu0 0
    %220 = vmatmul.mubr.bf16.gmra.mrb[0].mxu0 %v69
    %v221 = vpop.f32.mrb[0].mxu0
    %v222 = vadd.f32 0.0, %v221
    %v223 = vpop.f32.mrb[0].mxu0
    %v224 = vadd.f32 0.0, %v223
    %v225 = vpop.f32.mrb[0].mxu0
    %v226 = vadd.f32 0.0, %v225
    %v227 = vpop.f32.mrb[0].mxu0
    %v228 = vadd.f32 0.0, %v227
    %229 = vmatprep.mubr.bf16.mxu0 0
    %230 = vmatmul.mubr.bf16.gmra.mrb[0].mxu0 %v70
    %v231 = vpop.f32.mrb[0].mxu0
    %v232 = vadd.f32 0.0, %v231
    %v233 = vpop.f32.mrb[0].mxu0
    %v234 = vadd.f32 0.0, %v233
    %v235 = vpop.f32.mrb[0].mxu0
    %v236 = vpop.f32.mrb[0].mxu0
    %237 = vdwg.mxu0
    %v254 = vunpack.c.l.b16 %v44
    %v255 = vunpack.c.h.b16 %v44
    %v256 = vunpack.c.l.b16 %v45
    %v257 = vunpack.c.h.b16 %v45
    %v258 = vunpack.c.l.b16 %v46
    %v259 = vunpack.c.h.b16 %v46
    %v260 = vunpack.c.l.b16 %v47
    %v261 = vunpack.c.h.b16 %v47
    %v262 = vunpack.c.l.b16 %v48
    %v263 = vunpack.c.h.b16 %v48
    %v264 = vunpack.c.l.b16 %v49
    %v265 = vunpack.c.h.b16 %v49
    %v266 = vunpack.c.l.b16 %v50
    %v267 = vunpack.c.h.b16 %v50
    %v268 = vunpack.c.l.b16 %v51
    %v269 = vunpack.c.h.b16 %v51
    %v270 = vunpack.c.l.b16 %v52
    %v271 = vunpack.c.h.b16 %v52
    %v272 = vunpack.c.l.b16 %v53
    %v273 = vunpack.c.h.b16 %v53
    %v274 = vunpack.c.l.b16 %v54
    %v275 = vunpack.c.h.b16 %v54
    %v276 = vunpack.c.l.b16 %v55
    %v277 = vunpack.c.h.b16 %v55
    %v278 = vunpack.c.l.b16 %v56
    %v279 = vunpack.c.h.b16 %v56
    %v280 = vunpack.c.l.b16 %v57
    %v281 = vunpack.c.h.b16 %v57
    %v282 = vunpack.c.l.b16 %v58
    %v283 = vunpack.c.h.b16 %v58
    %v284 = vunpack.c.l.b16 %v59
    %v285 = vunpack.c.h.b16 %v59
    %v286 = vpack.c.b16 %v256, %v254
    %v287 = vpack.c.b16 %v257, %v255
    %v288 = vpack.c.b16 %v260, %v258
    %v289 = vpack.c.b16 %v261, %v259
    %v290 = vpack.c.b16 %v264, %v262
    %v291 = vpack.c.b16 %v265, %v263
    %v292 = vpack.c.b16 %v268, %v266
    %v293 = vpack.c.b16 %v269, %v267
    %v294 = vpack.c.b16 %v272, %v270
    %v295 = vpack.c.b16 %v273, %v271
    %v296 = vpack.c.b16 %v276, %v274
    %v297 = vpack.c.b16 %v277, %v275
    %v298 = vpack.c.b16 %v280, %v278
    %v299 = vpack.c.b16 %v281, %v279
    %v300 = vpack.c.b16 %v284, %v282
    %v301 = vpack.c.b16 %v285, %v283
    %318 = vmatprep.subr.bf16.mxu0 %v287
    %319 = vmatpush1.bf16.msra.mxu0 %v286
    %320 = vmatprep.subr.bf16.mxu0 %v289
    %321 = vmatpush1.bf16.msra.mxu0 %v288
    %322 = vmatprep.subr.bf16.mxu0 %v291
    %323 = vmatpush1.bf16.msra.mxu0 %v290
    %324 = vmatprep.subr.bf16.mxu0 %v293
    %325 = vmatpush1.bf16.msra.mxu0 %v292
    %326 = vmatprep.subr.bf16.mxu0 %v295
    %327 = vmatpush1.bf16.msra.mxu0 %v294
    %328 = vmatprep.subr.bf16.mxu0 %v297
    %329 = vmatpush1.bf16.msra.mxu0 %v296
    %330 = vmatprep.subr.bf16.mxu0 %v299
    %331 = vmatpush1.bf16.msra.mxu0 %v298
    %332 = vmatprep.subr.bf16.mxu0 %v301
    %333 = vmatpush1.bf16.msra.mxu0 %v300
    %334 = vmatprep.subr.bf16.mxu0 0
    %335 = vmatpush1.bf16.msra.mxu0 0
    %336 = vmatprep.subr.bf16.mxu0 0
    %337 = vmatpush1.bf16.msra.mxu0 0
    %338 = vmatprep.subr.bf16.mxu0 0
    %339 = vmatpush1.bf16.msra.mxu0 0
    %340 = vmatprep.subr.bf16.mxu0 0
    %341 = vmatpush1.bf16.msra.mxu0 0
    %342 = vmatprep.subr.bf16.mxu0 0
    %343 = vmatpush1.bf16.msra.mxu0 0
    %344 = vmatprep.subr.bf16.mxu0 0
    %345 = vmatpush1.bf16.msra.mxu0 0
    %346 = vmatprep.subr.bf16.mxu0 0
    %347 = vmatpush1.bf16.msra.mxu0 0
    %348 = vmatprep.subr.bf16.mxu0 0
    %349 = vmatpush1.bf16.msra.mxu0 0
    %350 = vmatprep.mubr.bf16.mxu0 0
    %351 = vmatmul.mubr.bf16.gmra.mrb[0].mxu0 %v40
    %v352 = vpop.f32.mrb[0].mxu0
    %v353 = vadd.f32 %v202, %v352
    %v354 = vpop.f32.mrb[0].mxu0
    %v355 = vadd.f32 %v204, %v354
    %v356 = vpop.f32.mrb[0].mxu0
    %v357 = vadd.f32 %v206, %v356
    %v358 = vpop.f32.mrb[0].mxu0
    %v359 = vadd.f32 %v208, %v358
    %360 = vmatprep.mubr.bf16.mxu0 0
    %361 = vmatmul.mubr.bf16.gmra.mrb[0].mxu0 %v41
    %v362 = vpop.f32.mrb[0].mxu0
    %v363 = vadd.f32 %v212, %v362
    %v364 = vpop.f32.mrb[0].mxu0
    %v365 = vadd.f32 %v214, %v364
    %v366 = vpop.f32.mrb[0].mxu0
    %v367 = vadd.f32 %v216, %v366
    %v368 = vpop.f32.mrb[0].mxu0
    %v369 = vadd.f32 %v218, %v368
    %370 = vmatprep.mubr.bf16.mxu0 0
    %371 = vmatmul.mubr.bf16.gmra.mrb[0].mxu0 %v42
    %v372 = vpop.f32.mrb[0].mxu0
    %v373 = vadd.f32 %v222, %v372
    %v374 = vpop.f32.mrb[0].mxu0
    %v375 = vadd.f32 %v224, %v374
    %v376 = vpop.f32.mrb[0].mxu0
    %v377 = vadd.f32 %v226, %v376
    %v378 = vpop.f32.mrb[0].mxu0
    %v379 = vadd.f32 %v228, %v378
    %380 = vmatprep.mubr.bf16.mxu0 0
    %381 = vmatmul.mubr.bf16.gmra.mrb[0].mxu0 %v43
    %v382 = vpop.f32.mrb[0].mxu0
    %v383 = vadd.f32 %v232, %v382
    %v384 = vpop.f32.mrb[0].mxu0
    %v385 = vadd.f32 %v234, %v384
    %v386 = vpop.f32.mrb[0].mxu0
    %v387 = vpop.f32.mrb[0].mxu0
    %388 = vdwg.mxu0
    %v389 = vld [vmem:[%s0 + $0x4] sm:$0xff]
    %v390 = vld [vmem:[%s0 + $0xc] sm:$0xff]
    %v391 = vld [vmem:[%s0 + $0x14] sm:$0xff]
    %v392 = vld [vmem:[%s0 + $0x1c] sm:$0xff]
    %v393 = vld [vmem:[%s0 + $0x24] sm:$0xff]
    %v394 = vld [vmem:[%s0 + $0x2c] sm:$0xff]
    %v395 = vld [vmem:[%s0 + $0x34] sm:$0xff]
    %v396 = vpack.c.bf16 %v390, %v389
    %v397 = vpack.c.bf16 %v392, %v391
    %v398 = vpack.c.bf16 %v394, %v393
    %v399 = vpack.c.bf16 %v395, %v395
    %v400 = vld [vmem:[#allocation4 + $0x100] sm:$0xff]
    %v401 = vld [vmem:[#allocation4 + $0x108] sm:$0xff]
    %v402 = vld [vmem:[#allocation4 + $0x110] sm:$0xff]
    %v403 = vld [vmem:[#allocation4 + $0x118] sm:$0xff]
    %v404 = vld [vmem:[#allocation4 + $0x120] sm:$0xff]
    %v405 = vld [vmem:[#allocation4 + $0x128] sm:$0xff]
    %v406 = vld [vmem:[#allocation4 + $0x130] sm:$0xff]
    %v407 = vld [vmem:[#allocation4 + $0x138] sm:$0xff]
    %v408 = vld [vmem:[#allocation4 + $0x140] sm:$0xff]
    %v409 = vld [vmem:[#allocation4 + $0x148] sm:$0xff]
    %v410 = vld [vmem:[#allocation4 + $0x150] sm:$0xff]
    %v411 = vld [vmem:[#allocation4 + $0x158] sm:$0xff]
    %v412 = vld [vmem:[#allocation4 + $0x160] sm:$0xff]
    %v413 = vld [vmem:[#allocation4 + $0x168] sm:$0xff]
    %v414 = vld [vmem:[#allocation4 + $0x170] sm:$0xff]
    %v415 = vld [vmem:[#allocation4 + $0x178] sm:$0xff]
    %v432 = vunpack.c.l.b16 %v400
    %v433 = vunpack.c.h.b16 %v400
    %v434 = vunpack.c.l.b16 %v401
    %v435 = vunpack.c.h.b16 %v401
    %v436 = vunpack.c.l.b16 %v402
    %v437 = vunpack.c.h.b16 %v402
    %v438 = vunpack.c.l.b16 %v403
    %v439 = vunpack.c.h.b16 %v403
    %v440 = vunpack.c.l.b16 %v404
    %v441 = vunpack.c.h.b16 %v404
    %v442 = vunpack.c.l.b16 %v405
    %v443 = vunpack.c.h.b16 %v405
    %v444 = vunpack.c.l.b16 %v406
    %v445 = vunpack.c.h.b16 %v406
    %v446 = vunpack.c.l.b16 %v407
    %v447 = vunpack.c.h.b16 %v407
    %v448 = vunpack.c.l.b16 %v408
    %v449 = vunpack.c.h.b16 %v408
    %v450 = vunpack.c.l.b16 %v409
    %v451 = vunpack.c.h.b16 %v409
    %v452 = vunpack.c.l.b16 %v410
    %v453 = vunpack.c.h.b16 %v410
    %v454 = vunpack.c.l.b16 %v411
    %v455 = vunpack.c.h.b16 %v411
    %v456 = vunpack.c.l.b16 %v412
    %v457 = vunpack.c.h.b16 %v412
    %v458 = vunpack.c.l.b16 %v413
    %v459 = vunpack.c.h.b16 %v413
    %v460 = vunpack.c.l.b16 %v414
    %v461 = vunpack.c.h.b16 %v414
    %v462 = vunpack.c.l.b16 %v415
    %v463 = vunpack.c.h.b16 %v415
    %v464 = vpack.c.b16 %v434, %v432
    %v465 = vpack.c.b16 %v435, %v433
    %v466 = vpack.c.b16 %v438, %v436
    %v467 = vpack.c.b16 %v439, %v437
    %v468 = vpack.c.b16 %v442, %v440
    %v469 = vpack.c.b16 %v443, %v441
    %v470 = vpack.c.b16 %v446, %v444
    %v471 = vpack.c.b16 %v447, %v445
    %v472 = vpack.c.b16 %v450, %v448
    %v473 = vpack.c.b16 %v451, %v449
    %v474 = vpack.c.b16 %v454, %v452
    %v475 = vpack.c.b16 %v455, %v453
    %v476 = vpack.c.b16 %v458, %v456
    %v477 = vpack.c.b16 %v459, %v457
    %v478 = vpack.c.b16 %v462, %v460
    %v479 = vpack.c.b16 %v463, %v461
    %496 = vmatprep.subr.bf16.mxu0 %v465
    %497 = vmatpush1.bf16.msra.mxu0 %v464
    %498 = vmatprep.subr.bf16.mxu0 %v467
    %499 = vmatpush1.bf16.msra.mxu0 %v466
    %500 = vmatprep.subr.bf16.mxu0 %v469
    %501 = vmatpush1.bf16.msra.mxu0 %v468
    %502 = vmatprep.subr.bf16.mxu0 %v471
    %503 = vmatpush1.bf16.msra.mxu0 %v470
    %504 = vmatprep.subr.bf16.mxu0 %v473
    %505 = vmatpush1.bf16.msra.mxu0 %v472
    %506 = vmatprep.subr.bf16.mxu0 %v475
    %507 = vmatpush1.bf16.msra.mxu0 %v474
    %508 = vmatprep.subr.bf16.mxu0 %v477
    %509 = vmatpush1.bf16.msra.mxu0 %v476
    %510 = vmatprep.subr.bf16.mxu0 %v479
    %511 = vmatpush1.bf16.msra.mxu0 %v478
    %512 = vmatprep.subr.bf16.mxu0 0
    %513 = vmatpush1.bf16.msra.mxu0 0
    %514 = vmatprep.subr.bf16.mxu0 0
    %515 = vmatpush1.bf16.msra.mxu0 0
    %516 = vmatprep.subr.bf16.mxu0 0
    %517 = vmatpush1.bf16.msra.mxu0 0
    %518 = vmatprep.subr.bf16.mxu0 0
    %519 = vmatpush1.bf16.msra.mxu0 0
    %520 = vmatprep.subr.bf16.mxu0 0
    %521 = vmatpush1.bf16.msra.mxu0 0
    %522 = vmatprep.subr.bf16.mxu0 0
    %523 = vmatpush1.bf16.msra.mxu0 0
    %524 = vmatprep.subr.bf16.mxu0 0
    %525 = vmatpush1.bf16.msra.mxu0 0
    %526 = vmatprep.subr.bf16.mxu0 0
    %527 = vmatpush1.bf16.msra.mxu0 0
    %528 = vmatprep.mubr.bf16.mxu0 0
    %529 = vmatmul.mubr.bf16.gmra.mrb[0].mxu0 %v396
    %v530 = vpop.f32.mrb[0].mxu0
    %v531 = vadd.f32 0.0, %v530
    %v532 = vpop.f32.mrb[0].mxu0
    %v533 = vadd.f32 0.0, %v532
    %v534 = vpop.f32.mrb[0].mxu0
    %v535 = vadd.f32 0.0, %v534
    %v536 = vpop.f32.mrb[0].mxu0
    %v537 = vadd.f32 0.0, %v536
    %538 = vmatprep.mubr.bf16.mxu0 0
    %539 = vmatmul.mubr.bf16.gmra.mrb[0].mxu0 %v397
    %v540 = vpop.f32.mrb[0].mxu0
    %v541 = vadd.f32 0.0, %v540
    %v542 = vpop.f32.mrb[0].mxu0
    %v543 = vadd.f32 0.0, %v542
    %v544 = vpop.f32.mrb[0].mxu0
    %v545 = vadd.f32 0.0, %v544
    %v546 = vpop.f32.mrb[0].mxu0
    %v547 = vadd.f32 0.0, %v546
    %548 = vmatprep.mubr.bf16.mxu0 0
    %549 = vmatmul.mubr.bf16.gmra.mrb[0].mxu0 %v398
    %v550 = vpop.f32.mrb[0].mxu0
    %v551 = vadd.f32 0.0, %v550
    %v552 = vpop.f32.mrb[0].mxu0
    %v553 = vadd.f32 0.0, %v552
    %v554 = vpop.f32.mrb[0].mxu0
    %v555 = vadd.f32 0.0, %v554
    %v556 = vpop.f32.mrb[0].mxu0
    %v557 = vadd.f32 0.0, %v556
    %558 = vmatprep.mubr.bf16.mxu0 0
    %559 = vmatmul.mubr.bf16.gmra.mrb[0].mxu0 %v399
    %v560 = vpop.f32.mrb[0].mxu0
    %v561 = vadd.f32 0.0, %v560
    %v562 = vpop.f32.mrb[0].mxu0
    %v563 = vadd.f32 0.0, %v562
    %v564 = vpop.f32.mrb[0].mxu0
    %v565 = vpop.f32.mrb[0].mxu0
    %566 = vdwg.mxu0
    %v567 = vadd.f32 %v353, %v531
    %v568 = vadd.f32 %v355, %v533
    %v569 = vadd.f32 %v357, %v535
    %v570 = vadd.f32 %v359, %v537
    %v571 = vadd.f32 %v363, %v541
    %v572 = vadd.f32 %v365, %v543
    %v573 = vadd.f32 %v367, %v545
    %v574 = vadd.f32 %v369, %v547
    %v575 = vadd.f32 %v373, %v551
    %v576 = vadd.f32 %v375, %v553
    %v577 = vadd.f32 %v377, %v555
    %v578 = vadd.f32 %v379, %v557
    %v579 = vadd.f32 %v383, %v561
    %v580 = vadd.f32 %v385, %v563
    %v581 = vld [vmem:[%s0 + $0x6] sm:$0xff]
    %v582 = vld [vmem:[%s0 + $0xe] sm:$0xff]
    %v583 = vld [vmem:[%s0 + $0x16] sm:$0xff]
    %v584 = vld [vmem:[%s0 + $0x1e] sm:$0xff]
    %v585 = vld [vmem:[%s0 + $0x26] sm:$0xff]
    %v586 = vld [vmem:[%s0 + $0x2e] sm:$0xff]
    %v587 = vld [vmem:[%s0 + $0x36] sm:$0xff]
    %v588 = vpack.c.bf16 %v582, %v581
    %v589 = vpack.c.bf16 %v584, %v583
    %v590 = vpack.c.bf16 %v586, %v585
    %v591 = vpack.c.bf16 %v587, %v587
    %v592 = vld [vmem:[#allocation4 + $0x180] sm:$0xff]
    %v593 = vld [vmem:[#allocation4 + $0x188] sm:$0xff]
    %v594 = vld [vmem:[#allocation4 + $0x190] sm:$0xff]
    %v595 = vld [vmem:[#allocation4 + $0x198] sm:$0xff]
    %v596 = vld [vmem:[#allocation4 + $0x1a0] sm:$0xff]
    %v597 = vld [vmem:[#allocation4 + $0x1a8] sm:$0xff]
    %v598 = vld [vmem:[#allocation4 + $0x1b0] sm:$0xff]
    %v599 = vld [vmem:[#allocation4 + $0x1b8] sm:$0xff]
    %v600 = vld [vmem:[#allocation4 + $0x1c0] sm:$0xff]
    %v601 = vld [vmem:[#allocation4 + $0x1c8] sm:$0xff]
    %v602 = vld [vmem:[#allocation4 + $0x1d0] sm:$0xff]
    %v603 = vld [vmem:[#allocation4 + $0x1d8] sm:$0xff]
    %v604 = vld [vmem:[#allocation4 + $0x1e0] sm:$0xff]
    %v605 = vld [vmem:[#allocation4 + $0x1e8] sm:$0xff]
    %v606 = vld [vmem:[#allocation4 + $0x1f0] sm:$0xff]
    %v607 = vld [vmem:[#allocation4 + $0x1f8] sm:$0xff]
    %v624 = vunpack.c.l.b16 %v592
    %v625 = vunpack.c.h.b16 %v592
    %v626 = vunpack.c.l.b16 %v593
    %v627 = vunpack.c.h.b16 %v593
    %v628 = vunpack.c.l.b16 %v594
    %v629 = vunpack.c.h.b16 %v594
    %v630 = vunpack.c.l.b16 %v595
    %v631 = vunpack.c.h.b16 %v595
    %v632 = vunpack.c.l.b16 %v596
    %v633 = vunpack.c.h.b16 %v596
    %v634 = vunpack.c.l.b16 %v597
    %v635 = vunpack.c.h.b16 %v597
    %v636 = vunpack.c.l.b16 %v598
    %v637 = vunpack.c.h.b16 %v598
    %v638 = vunpack.c.l.b16 %v599
    %v639 = vunpack.c.h.b16 %v599
    %v640 = vunpack.c.l.b16 %v600
    %v641 = vunpack.c.h.b16 %v600
    %v642 = vunpack.c.l.b16 %v601
    %v643 = vunpack.c.h.b16 %v601
    %v644 = vunpack.c.l.b16 %v602
    %v645 = vunpack.c.h.b16 %v602
    %v646 = vunpack.c.l.b16 %v603
    %v647 = vunpack.c.h.b16 %v603
    %v648 = vunpack.c.l.b16 %v604
    %v649 = vunpack.c.h.b16 %v604
    %v650 = vunpack.c.l.b16 %v605
    %v651 = vunpack.c.h.b16 %v605
    %v652 = vunpack.c.l.b16 %v606
    %v653 = vunpack.c.h.b16 %v606
    %v654 = vunpack.c.l.b16 %v607
    %v655 = vunpack.c.h.b16 %v607
    %v656 = vpack.c.b16 %v626, %v624
    %v657 = vpack.c.b16 %v627, %v625
    %v658 = vpack.c.b16 %v630, %v628
    %v659 = vpack.c.b16 %v631, %v629
    %v660 = vpack.c.b16 %v634, %v632
    %v661 = vpack.c.b16 %v635, %v633
    %v662 = vpack.c.b16 %v638, %v636
    %v663 = vpack.c.b16 %v639, %v637
    %v664 = vpack.c.b16 %v642, %v640
    %v665 = vpack.c.b16 %v643, %v641
    %v666 = vpack.c.b16 %v646, %v644
    %v667 = vpack.c.b16 %v647, %v645
    %v668 = vpack.c.b16 %v650, %v648
    %v669 = vpack.c.b16 %v651, %v649
    %v670 = vpack.c.b16 %v654, %v652
    %v671 = vpack.c.b16 %v655, %v653
    %688 = vmatprep.subr.bf16.mxu0 %v657
    %689 = vmatpush1.bf16.msra.mxu0 %v656
    %690 = vmatprep.subr.bf16.mxu0 %v659
    %691 = vmatpush1.bf16.msra.mxu0 %v658
    %692 = vmatprep.subr.bf16.mxu0 %v661
    %693 = vmatpush1.bf16.msra.mxu0 %v660
    %694 = vmatprep.subr.bf16.mxu0 %v663
    %695 = vmatpush1.bf16.msra.mxu0 %v662
    %696 = vmatprep.subr.bf16.mxu0 %v665
    %697 = vmatpush1.bf16.msra.mxu0 %v664
    %698 = vmatprep.subr.bf16.mxu0 %v667
    %699 = vmatpush1.bf16.msra.mxu0 %v666
    %700 = vmatprep.subr.bf16.mxu0 %v669
    %701 = vmatpush1.bf16.msra.mxu0 %v668
    %702 = vmatprep.subr.bf16.mxu0 %v671
    %703 = vmatpush1.bf16.msra.mxu0 %v670
    %704 = vmatprep.subr.bf16.mxu0 0
    %705 = vmatpush1.bf16.msra.mxu0 0
    %706 = vmatprep.subr.bf16.mxu0 0
    %707 = vmatpush1.bf16.msra.mxu0 0
    %708 = vmatprep.subr.bf16.mxu0 0
    %709 = vmatpush1.bf16.msra.mxu0 0
    %710 = vmatprep.subr.bf16.mxu0 0
    %711 = vmatpush1.bf16.msra.mxu0 0
    %712 = vmatprep.subr.bf16.mxu0 0
    %713 = vmatpush1.bf16.msra.mxu0 0
    %714 = vmatprep.subr.bf16.mxu0 0
    %715 = vmatpush1.bf16.msra.mxu0 0
    %716 = vmatprep.subr.bf16.mxu0 0
    %717 = vmatpush1.bf16.msra.mxu0 0
    %718 = vmatprep.subr.bf16.mxu0 0
    %719 = vmatpush1.bf16.msra.mxu0 0
    %720 = vmatprep.mubr.bf16.mxu0 0
    %721 = vmatmul.mubr.bf16.gmra.mrb[0].mxu0 %v588
    %v722 = vpop.f32.mrb[0].mxu0
    %v723 = vadd.f32 0.0, %v722
    %v724 = vpop.f32.mrb[0].mxu0
    %v725 = vadd.f32 0.0, %v724
    %v726 = vpop.f32.mrb[0].mxu0
    %v727 = vadd.f32 0.0, %v726
    %v728 = vpop.f32.mrb[0].mxu0
    %v729 = vadd.f32 0.0, %v728
    %730 = vmatprep.mubr.bf16.mxu0 0
    %731 = vmatmul.mubr.bf16.gmra.mrb[0].mxu0 %v589
    %v732 = vpop.f32.mrb[0].mxu0
    %v733 = vadd.f32 0.0, %v732
    %v734 = vpop.f32.mrb[0].mxu0
    %v735 = vadd.f32 0.0, %v734
    %v736 = vpop.f32.mrb[0].mxu0
    %v737 = vadd.f32 0.0, %v736
    %v738 = vpop.f32.mrb[0].mxu0
    %v739 = vadd.f32 0.0, %v738
    %740 = vmatprep.mubr.bf16.mxu0 0
    %741 = vmatmul.mubr.bf16.gmra.mrb[0].mxu0 %v590
    %v742 = vpop.f32.mrb[0].mxu0
    %v743 = vadd.f32 0.0, %v742
    %v744 = vpop.f32.mrb[0].mxu0
    %v745 = vadd.f32 0.0, %v744
    %v746 = vpop.f32.mrb[0].mxu0
    %v747 = vadd.f32 0.0, %v746
    %v748 = vpop.f32.mrb[0].mxu0
    %v749 = vadd.f32 0.0, %v748
    %750 = vmatprep.mubr.bf16.mxu0 0
    %751 = vmatmul.mubr.bf16.gmra.mrb[0].mxu0 %v591
    %v752 = vpop.f32.mrb[0].mxu0
    %v753 = vadd.f32 0.0, %v752
    %v754 = vpop.f32.mrb[0].mxu0
    %v755 = vadd.f32 0.0, %v754
    %v756 = vpop.f32.mrb[0].mxu0
    %v757 = vpop.f32.mrb[0].mxu0
    %758 = vdwg.mxu0
    %v759 = vadd.f32 %v567, %v723
    %v760 = vadd.f32 %v568, %v725
    %v761 = vadd.f32 %v569, %v727
    %v762 = vadd.f32 %v570, %v729
    %v763 = vadd.f32 %v571, %v733
    %v764 = vadd.f32 %v572, %v735
    %v765 = vadd.f32 %v573, %v737
    %v766 = vadd.f32 %v574, %v739
    %v767 = vadd.f32 %v575, %v743
    %v768 = vadd.f32 %v576, %v745
    %v769 = vadd.f32 %v577, %v747
    %v770 = vadd.f32 %v578, %v749
    %v771 = vadd.f32 %v579, %v753
    %v772 = vadd.f32 %v580, %v755
    %v773 = vld [vmem:[%s0 + $0x8] sm:$0xff]
    %v774 = vld [vmem:[%s0 + $0x10] sm:$0xff]
    %v775 = vld [vmem:[%s0 + $0x18] sm:$0xff]
    %v776 = vld [vmem:[%s0 + $0x20] sm:$0xff]
    %v777 = vld [vmem:[%s0 + $0x28] sm:$0xff]
    %v778 = vld [vmem:[%s0 + $0x30] sm:$0xff]
    %v779 = vld [vmem:[%s0 + $0x38] sm:$0xff]
    %v780 = vpack.c.bf16 %v774, %v773
    %v781 = vpack.c.bf16 %v776, %v775
    %v782 = vpack.c.bf16 %v778, %v777
    %v783 = vpack.c.bf16 %v779, %v779
    %v784 = vld [vmem:[#allocation4 + $0x200] sm:$0xff]
    %v785 = vld [vmem:[#allocation4 + $0x208] sm:$0xff]
    %v786 = vld [vmem:[#allocation4 + $0x210] sm:$0xff]
    %v787 = vld [vmem:[#allocation4 + $0x218] sm:$0xff]
    %v788 = vld [vmem:[#allocation4 + $0x220] sm:$0xff]
    %v789 = vld [vmem:[#allocation4 + $0x228] sm:$0xff]
    %v790 = vld [vmem:[#allocation4 + $0x230] sm:$0xff]
    %v791 = vld [vmem:[#allocation4 + $0x238] sm:$0xff]
    %v792 = vld [vmem:[#allocation4 + $0x240] sm:$0xff]
    %v793 = vld [vmem:[#allocation4 + $0x248] sm:$0xff]
    %v794 = vld [vmem:[#allocation4 + $0x250] sm:$0xff]
    %v795 = vld [vmem:[#allocation4 + $0x258] sm:$0xff]
    %v796 = vld [vmem:[#allocation4 + $0x260] sm:$0xff]
    %v797 = vld [vmem:[#allocation4 + $0x268] sm:$0xff]
    %v798 = vld [vmem:[#allocation4 + $0x270] sm:$0xff]
    %v799 = vld [vmem:[#allocation4 + $0x278] sm:$0xff]
    %v816 = vunpack.c.l.b16 %v784
    %v817 = vunpack.c.h.b16 %v784
    %v818 = vunpack.c.l.b16 %v785
    %v819 = vunpack.c.h.b16 %v785
    %v820 = vunpack.c.l.b16 %v786
    %v821 = vunpack.c.h.b16 %v786
    %v822 = vunpack.c.l.b16 %v787
    %v823 = vunpack.c.h.b16 %v787
    %v824 = vunpack.c.l.b16 %v788
    %v825 = vunpack.c.h.b16 %v788
    %v826 = vunpack.c.l.b16 %v789
    %v827 = vunpack.c.h.b16 %v789
    %v828 = vunpack.c.l.b16 %v790
    %v829 = vunpack.c.h.b16 %v790
    %v830 = vunpack.c.l.b16 %v791
    %v831 = vunpack.c.h.b16 %v791
    %v832 = vunpack.c.l.b16 %v792
    %v833 = vunpack.c.h.b16 %v792
    %v834 = vunpack.c.l.b16 %v793
    %v835 = vunpack.c.h.b16 %v793
    %v836 = vunpack.c.l.b16 %v794
    %v837 = vunpack.c.h.b16 %v794
    %v838 = vunpack.c.l.b16 %v795
    %v839 = vunpack.c.h.b16 %v795
    %v840 = vunpack.c.l.b16 %v796
    %v841 = vunpack.c.h.b16 %v796
    %v842 = vunpack.c.l.b16 %v797
    %v843 = vunpack.c.h.b16 %v797
    %v844 = vunpack.c.l.b16 %v798
    %v845 = vunpack.c.h.b16 %v798
    %v846 = vunpack.c.l.b16 %v799
    %v847 = vunpack.c.h.b16 %v799
    %v848 = vpack.c.b16 %v818, %v816
    %v849 = vpack.c.b16 %v819, %v817
    %v850 = vpack.c.b16 %v822, %v820
    %v851 = vpack.c.b16 %v823, %v821
    %v852 = vpack.c.b16 %v826, %v824
    %v853 = vpack.c.b16 %v827, %v825
    %v854 = vpack.c.b16 %v830, %v828
    %v855 = vpack.c.b16 %v831, %v829
    %v856 = vpack.c.b16 %v834, %v832
    %v857 = vpack.c.b16 %v835, %v833
    %v858 = vpack.c.b16 %v838, %v836
    %v859 = vpack.c.b16 %v839, %v837
    %v860 = vpack.c.b16 %v842, %v840
    %v861 = vpack.c.b16 %v843, %v841
    %v862 = vpack.c.b16 %v846, %v844
    %v863 = vpack.c.b16 %v847, %v845
    %880 = vmatprep.subr.bf16.mxu0 %v849
    %881 = vmatpush1.bf16.msra.mxu0 %v848
    %882 = vmatprep.subr.bf16.mxu0 %v851
    %883 = vmatpush1.bf16.msra.mxu0 %v850
    %884 = vmatprep.subr.bf16.mxu0 %v853
    %885 = vmatpush1.bf16.msra.mxu0 %v852
    %886 = vmatprep.subr.bf16.mxu0 %v855
    %887 = vmatpush1.bf16.msra.mxu0 %v854
    %888 = vmatprep.subr.bf16.mxu0 %v857
    %889 = vmatpush1.bf16.msra.mxu0 %v856
    %890 = vmatprep.subr.bf16.mxu0 %v859
    %891 = vmatpush1.bf16.msra.mxu0 %v858
    %892 = vmatprep.subr.bf16.mxu0 %v861
    %893 = vmatpush1.bf16.msra.mxu0 %v860
    %894 = vmatprep.subr.bf16.mxu0 %v863
    %895 = vmatpush1.bf16.msra.mxu0 %v862
    %896 = vmatprep.subr.bf16.mxu0 0
    %897 = vmatpush1.bf16.msra.mxu0 0
    %898 = vmatprep.subr.bf16.mxu0 0
    %899 = vmatpush1.bf16.msra.mxu0 0
    %900 = vmatprep.subr.bf16.mxu0 0
    %901 = vmatpush1.bf16.msra.mxu0 0
    %902 = vmatprep.subr.bf16.mxu0 0
    %903 = vmatpush1.bf16.msra.mxu0 0
    %904 = vmatprep.subr.bf16.mxu0 0
    %905 = vmatpush1.bf16.msra.mxu0 0
    %906 = vmatprep.subr.bf16.mxu0 0
    %907 = vmatpush1.bf16.msra.mxu0 0
    %908 = vmatprep.subr.bf16.mxu0 0
    %909 = vmatpush1.bf16.msra.mxu0 0
    %910 = vmatprep.subr.bf16.mxu0 0
    %911 = vmatpush1.bf16.msra.mxu0 0
    %912 = vmatprep.mubr.bf16.mxu0 0
    %913 = vmatmul.mubr.bf16.gmra.mrb[0].mxu0 %v780
    %v914 = vpop.f32.mrb[0].mxu0
    %v915 = vadd.f32 0.0, %v914
    %v916 = vpop.f32.mrb[0].mxu0
    %v917 = vadd.f32 0.0, %v916
    %v918 = vpop.f32.mrb[0].mxu0
    %v919 = vadd.f32 0.0, %v918
    %v920 = vpop.f32.mrb[0].mxu0
    %v921 = vadd.f32 0.0, %v920
    %922 = vmatprep.mubr.bf16.mxu0 0
    %923 = vmatmul.mubr.bf16.gmra.mrb[0].mxu0 %v781
    %v924 = vpop.f32.mrb[0].mxu0
    %v925 = vadd.f32 0.0, %v924
    %v926 = vpop.f32.mrb[0].mxu0
    %v927 = vadd.f32 0.0, %v926
    %v928 = vpop.f32.mrb[0].mxu0
    %v929 = vadd.f32 0.0, %v928
    %v930 = vpop.f32.mrb[0].mxu0
    %v931 = vadd.f32 0.0, %v930
    %932 = vmatprep.mubr.bf16.mxu0 0
    %933 = vmatmul.mubr.bf16.gmra.mrb[0].mxu0 %v782
    %v934 = vpop.f32.mrb[0].mxu0
    %v935 = vadd.f32 0.0, %v934
    %v936 = vpop.f32.mrb[0].mxu0
    %v937 = vadd.f32 0.0, %v936
    %v938 = vpop.f32.mrb[0].mxu0
    %v939 = vadd.f32 0.0, %v938
    %v940 = vpop.f32.mrb[0].mxu0
    %v941 = vadd.f32 0.0, %v940
    %942 = vmatprep.mubr.bf16.mxu0 0
    %943 = vmatmul.mubr.bf16.gmra.mrb[0].mxu0 %v783
    %v944 = vpop.f32.mrb[0].mxu0
    %v945 = vadd.f32 0.0, %v944
    %v946 = vpop.f32.mrb[0].mxu0
    %v947 = vadd.f32 0.0, %v946
    %v948 = vpop.f32.mrb[0].mxu0
    %v949 = vpop.f32.mrb[0].mxu0
    %950 = vdwg.mxu0
    %v951 = vadd.f32 %v759, %v915
    %v952 = vadd.f32 %v760, %v917
    %v953 = vadd.f32 %v761, %v919
    %v954 = vadd.f32 %v762, %v921
    %v955 = vadd.f32 %v763, %v925
    %v956 = vadd.f32 %v764, %v927
    %v957 = vadd.f32 %v765, %v929
    %v958 = vadd.f32 %v766, %v931
    %v959 = vadd.f32 %v767, %v935
    %v960 = vadd.f32 %v768, %v937
    %v961 = vadd.f32 %v769, %v939
    %v962 = vadd.f32 %v770, %v941
    %v963 = vadd.f32 %v771, %v945
    %v964 = vadd.f32 %v772, %v947
    %v965 = vld [vmem:[#allocation4 + $0x700] sm:$0xf]
    %v966 = vld [vmem:[#allocation4 + $0x708] sm:$0xf]
    %v967 = vld [vmem:[#allocation4 + $0x710] sm:$0xf]
    %v968 = vld [vmem:[#allocation4 + $0x718] sm:$0xf]
    %v969 = vld [vmem:[#allocation4 + $0x720] sm:$0xf]
    %v970 = vld [vmem:[#allocation4 + $0x728] sm:$0xf]
    %v971 = vld [vmem:[#allocation4 + $0x730] sm:$0xf]
    %v972 = vld [vmem:[#allocation4 + $0x738] sm:$0xf]
    %v973 = vpack.c.bf16 %v953, %v951
    %v974 = vpack.c.bf16 %v954, %v952
    %v975 = vpack.c.bf16 %v957, %v955
    %v976 = vpack.c.bf16 %v958, %v956
    %v977 = vpack.c.bf16 %v961, %v959
    %v978 = vpack.c.bf16 %v962, %v960
    %v979 = vpack.c.bf16 %v963, %v963
    %v980 = vpack.c.bf16 %v964, %v964
    %v989 = vunpack.c.l.b16 %v965
    %v990 = vunpack.c.l.b16 %v966
    %v991 = vunpack.c.l.b16 %v967
    %v992 = vunpack.c.l.b16 %v968
    %v993 = vunpack.c.l.b16 %v969
    %v994 = vunpack.c.l.b16 %v970
    %v995 = vunpack.c.l.b16 %v971
    %v996 = vunpack.c.l.b16 %v972
    %v997 = vpack.c.b16 %v990, %v989
    %v998 = vpack.c.b16 %v992, %v991
    %v999 = vpack.c.b16 %v994, %v993
    %v1000 = vpack.c.b16 %v996, %v995
    %vm1001 = vcmask 457728
    %v1003 = vsel %vm1001, %v997, 0
    %v1006 = vsel %vm1001, %v998, 0
    %v1009 = vsel %vm1001, %v999, 0
    %v1012 = vsel %vm1001, %v1000, 0
    %vm1014 = vcmask 1043456
    %v1016 = vsel %vm1014, %v979, 0
    %v1019 = vsel %vm1014, %v980, 0
    %1021 = vmatprep.subr.bf16.mxu0 %v974
    %1022 = vmatpush1.bf16.msra.mxu0 %v973
    %1023 = vmatprep.subr.bf16.mxu0 %v976
    %1024 = vmatpush1.bf16.msra.mxu0 %v975
    %1025 = vmatprep.subr.bf16.mxu0 %v978
    %1026 = vmatpush1.bf16.msra.mxu0 %v977
    %1027 = vmatprep.subr.bf16.mxu0 %v1019
    %1028 = vmatpush1.bf16.msra.mxu0 %v1016
    %1029 = vmatprep.subr.bf16.mxu0 0
    %1030 = vmatpush1.bf16.msra.mxu0 0
    %1031 = vmatprep.subr.bf16.mxu0 0
    %1032 = vmatpush1.bf16.msra.mxu0 0
    %1033 = vmatprep.subr.bf16.mxu0 0
    %1034 = vmatpush1.bf16.msra.mxu0 0
    %1035 = vmatprep.subr.bf16.mxu0 0
    %1036 = vmatpush1.bf16.msra.mxu0 0
    %1037 = vmatprep.subr.bf16.mxu0 0
    %1038 = vmatpush1.bf16.msra.mxu0 0
    %1039 = vmatprep.subr.bf16.mxu0 0
    %1040 = vmatpush1.bf16.msra.mxu0 0
    %1041 = vmatprep.subr.bf16.mxu0 0
    %1042 = vmatpush1.bf16.msra.mxu0 0
    %1043 = vmatprep.subr.bf16.mxu0 0
    %1044 = vmatpush1.bf16.msra.mxu0 0
    %1045 = vmatprep.subr.bf16.mxu0 0
    %1046 = vmatpush1.bf16.msra.mxu0 0
    %1047 = vmatprep.subr.bf16.mxu0 0
    %1048 = vmatpush1.bf16.msra.mxu0 0
    %1049 = vmatprep.subr.bf16.mxu0 0
    %1050 = vmatpush1.bf16.msra.mxu0 0
    %1051 = vmatprep.subr.bf16.mxu0 0
    %1052 = vmatpush1.bf16.msra.mxu0 0
    %1053 = vmatprep.mubr.bf16.mxu0 0
    %1054 = vmatmul.mubr.bf16.gmra.mrb[0].mxu0 %v1003
    %v1055 = vpop.f32.mrb[0].mxu0
    %v1056 = vadd.f32 0.0, %v1055
    %v1057 = vpop.f32.mrb[0].mxu0
    %v1058 = vadd.f32 0.0, %v1057
    %v1059 = vpop.f32.mrb[0].mxu0
    %v1060 = vadd.f32 0.0, %v1059
    %v1061 = vpop.f32.mrb[0].mxu0
    %v1062 = vadd.f32 0.0, %v1061
    %1063 = vmatprep.mubr.bf16.mxu0 0
    %1064 = vmatmul.mubr.bf16.gmra.mrb[0].mxu0 %v1006
    %v1065 = vpop.f32.mrb[0].mxu0
    %v1066 = vadd.f32 0.0, %v1065
    %v1067 = vpop.f32.mrb[0].mxu0
    %v1068 = vadd.f32 0.0, %v1067
    %v1069 = vpop.f32.mrb[0].mxu0
    %v1070 = vadd.f32 0.0, %v1069
    %v1071 = vpop.f32.mrb[0].mxu0
    %v1072 = vadd.f32 0.0, %v1071
    %1073 = vmatprep.mubr.bf16.mxu0 0
    %1074 = vmatmul.mubr.bf16.gmra.mrb[0].mxu0 %v1009
    %v1075 = vpop.f32.mrb[0].mxu0
    %v1076 = vadd.f32 0.0, %v1075
    %v1077 = vpop.f32.mrb[0].mxu0
    %v1078 = vadd.f32 0.0, %v1077
    %v1079 = vpop.f32.mrb[0].mxu0
    %v1080 = vadd.f32 0.0, %v1079
    %v1081 = vpop.f32.mrb[0].mxu0
    %v1082 = vadd.f32 0.0, %v1081
    %1083 = vmatprep.mubr.bf16.mxu0 0
    %1084 = vmatmul.mubr.bf16.gmra.mrb[0].mxu0 %v1012
    %v1085 = vpop.f32.mrb[0].mxu0
    %v1086 = vadd.f32 0.0, %v1085
    %v1087 = vpop.f32.mrb[0].mxu0
    %v1088 = vadd.f32 0.0, %v1087
    %v1089 = vpop.f32.mrb[0].mxu0
    %v1090 = vadd.f32 0.0, %v1089
    %v1091 = vpop.f32.mrb[0].mxu0
    %v1092 = vadd.f32 0.0, %v1091
    %1093 = vdwg.mxu0
    %v1094 = vmax.f32 %v1056, %v1076
    %v1095 = vmax.f32 %v1058, %v1078
    %v1096 = vmax.f32 %v1060, %v1080
    %v1097 = vmax.f32 %v1062, %v1082
    %v1098 = vmax.f32 %v1066, %v1086
    %v1099 = vmax.f32 %v1068, %v1088
    %v1100 = vmax.f32 %v1070, %v1090
    %v1101 = vmax.f32 %v1072, %v1092
    %v1102 = vpack.c.bf16 %v1096, %v1094
    %v1103 = vpack.c.bf16 %v1097, %v1095
    %v1104 = vpack.c.bf16 %v1100, %v1098
    %v1105 = vpack.c.bf16 %v1101, %v1099
    %v1106 = vld [vmem:[#allocation4 + $0x500] sm:$0xff]
    %v1107 = vld [vmem:[#allocation4 + $0x508] sm:$0xff]
    %v1108 = vld [vmem:[#allocation4 + $0x510] sm:$0xff]
    %v1109 = vld [vmem:[#allocation4 + $0x518] sm:$0xff]
    %v1110 = vld [vmem:[#allocation4 + $0x520] sm:$0xff]
    %v1111 = vld [vmem:[#allocation4 + $0x528] sm:$0xff]
    %v1112 = vld [vmem:[#allocation4 + $0x530] sm:$0xff]
    %v1113 = vld [vmem:[#allocation4 + $0x538] sm:$0xff]
    %v1114 = vld [vmem:[#allocation4 + $0x540] sm:$0xff]
    %v1115 = vld [vmem:[#allocation4 + $0x548] sm:$0xff]
    %v1116 = vld [vmem:[#allocation4 + $0x550] sm:$0xff]
    %v1117 = vld [vmem:[#allocation4 + $0x558] sm:$0xff]
    %v1118 = vld [vmem:[#allocation4 + $0x560] sm:$0xff]
    %v1119 = vld [vmem:[#allocation4 + $0x568] sm:$0xff]
    %v1120 = vld [vmem:[#allocation4 + $0x570] sm:$0xff]
    %v1121 = vld [vmem:[#allocation4 + $0x578] sm:$0xff]
    %v1122 = vld [vmem:[#allocation4 + $0x580] sm:$0xff]
    %v1123 = vld [vmem:[#allocation4 + $0x588] sm:$0xff]
    %v1124 = vld [vmem:[#allocation4 + $0x590] sm:$0xff]
    %v1125 = vld [vmem:[#allocation4 + $0x598] sm:$0xff]
    %v1126 = vld [vmem:[#allocation4 + $0x5a0] sm:$0xff]
    %v1127 = vld [vmem:[#allocation4 + $0x5a8] sm:$0xff]
    %v1128 = vld [vmem:[#allocation4 + $0x5b0] sm:$0xff]
    %v1129 = vld [vmem:[#allocation4 + $0x5b8] sm:$0xff]
    %v1130 = vld [vmem:[#allocation4 + $0x5c0] sm:$0xff]
    %v1131 = vld [vmem:[#allocation4 + $0x5c8] sm:$0xff]
    %v1132 = vld [vmem:[#allocation4 + $0x5d0] sm:$0xff]
    %v1133 = vld [vmem:[#allocation4 + $0x5d8] sm:$0xff]
    %v1134 = vld [vmem:[#allocation4 + $0x5e0] sm:$0xff]
    %v1135 = vld [vmem:[#allocation4 + $0x5e8] sm:$0xff]
    %v1136 = vld [vmem:[#allocation4 + $0x5f0] sm:$0xff]
    %v1137 = vld [vmem:[#allocation4 + $0x5f8] sm:$0xff]
    %v1170 = vunpack.c.l.b16 %v1106
    %v1171 = vunpack.c.h.b16 %v1106
    %v1172 = vunpack.c.l.b16 %v1107
    %v1173 = vunpack.c.h.b16 %v1107
    %v1174 = vunpack.c.l.b16 %v1108
    %v1175 = vunpack.c.h.b16 %v1108
    %v1176 = vunpack.c.l.b16 %v1109
    %v1177 = vunpack.c.h.b16 %v1109
    %v1178 = vunpack.c.l.b16 %v1110
    %v1179 = vunpack.c.h.b16 %v1110
    %v1180 = vunpack.c.l.b16 %v1111
    %v1181 = vunpack.c.h.b16 %v1111
    %v1182 = vunpack.c.l.b16 %v1112
    %v1183 = vunpack.c.h.b16 %v1112
    %v1184 = vunpack.c.l.b16 %v1113
    %v1185 = vunpack.c.h.b16 %v1113
    %v1186 = vunpack.c.l.b16 %v1114
    %v1187 = vunpack.c.h.b16 %v1114
    %v1188 = vunpack.c.l.b16 %v1115
    %v1189 = vunpack.c.h.b16 %v1115
    %v1190 = vunpack.c.l.b16 %v1116
    %v1191 = vunpack.c.h.b16 %v1116
    %v1192 = vunpack.c.l.b16 %v1117
    %v1193 = vunpack.c.h.b16 %v1117
    %v1194 = vunpack.c.l.b16 %v1118
    %v1195 = vunpack.c.h.b16 %v1118
    %v1196 = vunpack.c.l.b16 %v1119
    %v1197 = vunpack.c.h.b16 %v1119
    %v1198 = vunpack.c.l.b16 %v1120
    %v1199 = vunpack.c.h.b16 %v1120
    %v1200 = vunpack.c.l.b16 %v1121
    %v1201 = vunpack.c.h.b16 %v1121
    %v1202 = vunpack.c.l.b16 %v1122
    %v1203 = vunpack.c.h.b16 %v1122
    %v1204 = vunpack.c.l.b16 %v1123
    %v1205 = vunpack.c.h.b16 %v1123
    %v1206 = vunpack.c.l.b16 %v1124
    %v1207 = vunpack.c.h.b16 %v1124
    %v1208 = vunpack.c.l.b16 %v1125
    %v1209 = vunpack.c.h.b16 %v1125
    %v1210 = vunpack.c.l.b16 %v1126
    %v1211 = vunpack.c.h.b16 %v1126
    %v1212 = vunpack.c.l.b16 %v1127
    %v1213 = vunpack.c.h.b16 %v1127
    %v1214 = vunpack.c.l.b16 %v1128
    %v1215 = vunpack.c.h.b16 %v1128
    %v1216 = vunpack.c.l.b16 %v1129
    %v1217 = vunpack.c.h.b16 %v1129
    %v1218 = vunpack.c.l.b16 %v1130
    %v1219 = vunpack.c.h.b16 %v1130
    %v1220 = vunpack.c.l.b16 %v1131
    %v1221 = vunpack.c.h.b16 %v1131
    %v1222 = vunpack.c.l.b16 %v1132
    %v1223 = vunpack.c.h.b16 %v1132
    %v1224 = vunpack.c.l.b16 %v1133
    %v1225 = vunpack.c.h.b16 %v1133
    %v1226 = vunpack.c.l.b16 %v1134
    %v1227 = vunpack.c.h.b16 %v1134
    %v1228 = vunpack.c.l.b16 %v1135
    %v1229 = vunpack.c.h.b16 %v1135
    %v1230 = vunpack.c.l.b16 %v1136
    %v1231 = vunpack.c.h.b16 %v1136
    %v1232 = vunpack.c.l.b16 %v1137
    %v1233 = vunpack.c.h.b16 %v1137
    %v1234 = vpack.c.b16 %v1172, %v1170
    %v1235 = vpack.c.b16 %v1173, %v1171
    %v1236 = vpack.c.b16 %v1176, %v1174
    %v1237 = vpack.c.b16 %v1177, %v1175
    %v1238 = vpack.c.b16 %v1180, %v1178
    %v1239 = vpack.c.b16 %v1181, %v1179
    %v1240 = vpack.c.b16 %v1184, %v1182
    %v1241 = vpack.c.b16 %v1185, %v1183
    %v1242 = vpack.c.b16 %v1188, %v1186
    %v1243 = vpack.c.b16 %v1189, %v1187
    %v1244 = vpack.c.b16 %v1192, %v1190
    %v1245 = vpack.c.b16 %v1193, %v1191
    %v1246 = vpack.c.b16 %v1196, %v1194
    %v1247 = vpack.c.b16 %v1197, %v1195
    %v1248 = vpack.c.b16 %v1200, %v1198
    %v1249 = vpack.c.b16 %v1201, %v1199
    %v1250 = vpack.c.b16 %v1204, %v1202
    %v1251 = vpack.c.b16 %v1205, %v1203
    %v1252 = vpack.c.b16 %v1208, %v1206
    %v1253 = vpack.c.b16 %v1209, %v1207
    %v1254 = vpack.c.b16 %v1212, %v1210
    %v1255 = vpack.c.b16 %v1213, %v1211
    %v1256 = vpack.c.b16 %v1216, %v1214
    %v1257 = vpack.c.b16 %v1217, %v1215
    %v1258 = vpack.c.b16 %v1220, %v1218
    %v1259 = vpack.c.b16 %v1221, %v1219
    %v1260 = vpack.c.b16 %v1224, %v1222
    %v1261 = vpack.c.b16 %v1225, %v1223
    %v1262 = vpack.c.b16 %v1228, %v1226
    %v1263 = vpack.c.b16 %v1229, %v1227
    %v1264 = vpack.c.b16 %v1232, %v1230
    %v1265 = vpack.c.b16 %v1233, %v1231
    %1298 = vmatprep.subr.bf16.mxu0 %v1235
    %1299 = vmatpush1.bf16.msra.mxu0 %v1234
    %1300 = vmatprep.subr.bf16.mxu0 %v1237
    %1301 = vmatpush1.bf16.msra.mxu0 %v1236
    %1302 = vmatprep.subr.bf16.mxu0 %v1239
    %1303 = vmatpush1.bf16.msra.mxu0 %v1238
    %1304 = vmatprep.subr.bf16.mxu0 %v1241
    %1305 = vmatpush1.bf16.msra.mxu0 %v1240
    %1306 = vmatprep.subr.bf16.mxu0 %v1243
    %1307 = vmatpush1.bf16.msra.mxu0 %v1242
    %1308 = vmatprep.subr.bf16.mxu0 %v1245
    %1309 = vmatpush1.bf16.msra.mxu0 %v1244
    %1310 = vmatprep.subr.bf16.mxu0 %v1247
    %1311 = vmatpush1.bf16.msra.mxu0 %v1246
    %1312 = vmatprep.subr.bf16.mxu0 %v1249
    %1313 = vmatpush1.bf16.msra.mxu0 %v1248
    %1314 = vmatprep.subr.bf16.mxu0 %v1251
    %1315 = vmatpush1.bf16.msra.mxu0 %v1250
    %1316 = vmatprep.subr.bf16.mxu0 %v1253
    %1317 = vmatpush1.bf16.msra.mxu0 %v1252
    %1318 = vmatprep.subr.bf16.mxu0 %v1255
    %1319 = vmatpush1.bf16.msra.mxu0 %v1254
    %1320 = vmatprep.subr.bf16.mxu0 %v1257
    %1321 = vmatpush1.bf16.msra.mxu0 %v1256
    %1322 = vmatprep.subr.bf16.mxu0 %v1259
    %1323 = vmatpush1.bf16.msra.mxu0 %v1258
    %1324 = vmatprep.subr.bf16.mxu0 %v1261
    %1325 = vmatpush1.bf16.msra.mxu0 %v1260
    %1326 = vmatprep.subr.bf16.mxu0 %v1263
    %1327 = vmatpush1.bf16.msra.mxu0 %v1262
    %1328 = vmatprep.subr.bf16.mxu0 %v1265
    %1329 = vmatpush1.bf16.msra.mxu0 %v1264
    %1330 = vmatprep.mubr.bf16.mxu0 %v1103
    %1331 = vmatmul.mubr.bf16.gmra.mrb[0].mxu0 %v1102
    %v1332 = vpop.f32.mrb[0].mxu0
    %v1333 = vadd.f32 0.0, %v1332
    %v1334 = vpop.f32.mrb[0].mxu0
    %v1335 = vadd.f32 0.0, %v1334
    %v1336 = vpop.f32.mrb[0].mxu0
    %v1337 = vadd.f32 0.0, %v1336
    %v1338 = vpop.f32.mrb[0].mxu0
    %v1339 = vadd.f32 0.0, %v1338
    %1340 = vmatprep.mubr.bf16.mxu0 %v1105
    %1341 = vmatmul.mubr.bf16.gmra.mrb[0].mxu0 %v1104
    %v1342 = vpop.f32.mrb[0].mxu0
    %v1343 = vadd.f32 0.0, %v1342
    %v1344 = vpop.f32.mrb[0].mxu0
    %v1345 = vadd.f32 0.0, %v1344
    %v1346 = vpop.f32.mrb[0].mxu0
    %v1347 = vadd.f32 0.0, %v1346
    %v1348 = vpop.f32.mrb[0].mxu0
    %v1349 = vadd.f32 0.0, %v1348
    %1350 = vdwg.mxu0
    %v1351 = vmax.f32 %v1333, %v1335
    %v1352 = vmax.f32 %v1337, %v1339
    %v1353 = vmax.f32 %v1343, %v1345
    %v1354 = vmax.f32 %v1347, %v1349
    %v1355 = vld [vmem:[%s3] sm:$0x1]
    %v1356 = vlaneseq
    %v1357 = vshrl.u32 %v1356, 7
    %v1358 = vsub.s32 0, %v1357
    %v1359 = vrot.slane %v1355, %v1358
    %v1360 = vadd.f32 %v1351, %v1359
    %v1361 = vadd.f32 %v1352, %v1359
    %v1362 = vadd.f32 %v1353, %v1359
    %v1363 = vadd.f32 %v1354, %v1359
    %v1364 = vmax.f32 %v1360, 0.0
    %v1365 = vmax.f32 %v1361, 0.0
    %v1366 = vmax.f32 %v1362, 0.0
    %v1367 = vmax.f32 %v1363, 0.0
    %1368 = vst [vmem:[#allocation2] sm:$0xff] %v1364
    %1369 = vst [vmem:[#allocation2 + $0x8] sm:$0xff] %v1365
    %1370 = vst [vmem:[#allocation2 + $0x10] sm:$0xff] %v1366
    %1371 = vst [vmem:[#allocation2 + $0x18] sm:$0xf] %v1367
    %v1372 = vld [vmem:[#allocation2] sm:$0xff]
    %v1373 = vld [vmem:[#allocation2 + $0x8] sm:$0xff]
    %v1374 = vld [vmem:[#allocation2 + $0x10] sm:$0xf]
    %v1375 = vpack.c.bf16 %v1373, %v1372
    %v1376 = vpack.c.bf16 %v1374, %v1374
    %v1377 = vld [vmem:[#allocation4 + $0x280] sm:$0xff]
    %v1378 = vld [vmem:[#allocation4 + $0x288] sm:$0xff]
    %v1379 = vld [vmem:[#allocation4 + $0x290] sm:$0xff]
    %v1380 = vld [vmem:[#allocation4 + $0x298] sm:$0xff]
    %v1381 = vld [vmem:[#allocation4 + $0x2a0] sm:$0xff]
    %v1382 = vld [vmem:[#allocation4 + $0x2a8] sm:$0xff]
    %v1383 = vld [vmem:[#allocation4 + $0x2b0] sm:$0xff]
    %v1384 = vld [vmem:[#allocation4 + $0x2b8] sm:$0xff]
    %v1385 = vld [vmem:[#allocation4 + $0x2c0] sm:$0xff]
    %v1386 = vld [vmem:[#allocation4 + $0x2c8] sm:$0xff]
    %v1387 = vld [vmem:[#allocation4 + $0x2d0] sm:$0xff]
    %v1388 = vld [vmem:[#allocation4 + $0x2d8] sm:$0xff]
    %v1389 = vld [vmem:[#allocation4 + $0x2e0] sm:$0xff]
    %v1390 = vld [vmem:[#allocation4 + $0x2e8] sm:$0xff]
    %v1391 = vld [vmem:[#allocation4 + $0x2f0] sm:$0xff]
    %v1392 = vld [vmem:[#allocation4 + $0x2f8] sm:$0xff]
    %v1393 = vld [vmem:[#allocation2 + $0x2] sm:$0xff]
    %v1394 = vld [vmem:[#allocation2 + $0xa] sm:$0xff]
    %v1395 = vld [vmem:[#allocation2 + $0x12] sm:$0xf]
    %v1396 = vpack.c.bf16 %v1394, %v1393
    %v1397 = vpack.c.bf16 %v1395, %v1395
    %v1398 = vld [vmem:[#allocation4 + $0x300] sm:$0xff]
    %v1399 = vld [vmem:[#allocation4 + $0x308] sm:$0xff]
    %v1400 = vld [vmem:[#allocation4 + $0x310] sm:$0xff]
    %v1401 = vld [vmem:[#allocation4 + $0x318] sm:$0xff]
    %v1402 = vld [vmem:[#allocation4 + $0x320] sm:$0xff]
    %v1403 = vld [vmem:[#allocation4 + $0x328] sm:$0xff]
    %v1404 = vld [vmem:[#allocation4 + $0x330] sm:$0xff]
    %v1405 = vld [vmem:[#allocation4 + $0x338] sm:$0xff]
    %v1406 = vld [vmem:[#allocation4 + $0x340] sm:$0xff]
    %v1407 = vld [vmem:[#allocation4 + $0x348] sm:$0xff]
    %v1408 = vld [vmem:[#allocation4 + $0x350] sm:$0xff]
    %v1409 = vld [vmem:[#allocation4 + $0x358] sm:$0xff]
    %v1410 = vld [vmem:[#allocation4 + $0x360] sm:$0xff]
    %v1411 = vld [vmem:[#allocation4 + $0x368] sm:$0xff]
    %v1412 = vld [vmem:[#allocation4 + $0x370] sm:$0xff]
    %v1413 = vld [vmem:[#allocation4 + $0x378] sm:$0xff]
    %v1430 = vunpack.c.l.b16 %v1398
    %v1431 = vunpack.c.h.b16 %v1398
    %v1432 = vunpack.c.l.b16 %v1399
    %v1433 = vunpack.c.h.b16 %v1399
    %v1434 = vunpack.c.l.b16 %v1400
    %v1435 = vunpack.c.h.b16 %v1400
    %v1436 = vunpack.c.l.b16 %v1401
    %v1437 = vunpack.c.h.b16 %v1401
    %v1438 = vunpack.c.l.b16 %v1402
    %v1439 = vunpack.c.h.b16 %v1402
    %v1440 = vunpack.c.l.b16 %v1403
    %v1441 = vunpack.c.h.b16 %v1403
    %v1442 = vunpack.c.l.b16 %v1404
    %v1443 = vunpack.c.h.b16 %v1404
    %v1444 = vunpack.c.l.b16 %v1405
    %v1445 = vunpack.c.h.b16 %v1405
    %v1446 = vunpack.c.l.b16 %v1406
    %v1447 = vunpack.c.h.b16 %v1406
    %v1448 = vunpack.c.l.b16 %v1407
    %v1449 = vunpack.c.h.b16 %v1407
    %v1450 = vunpack.c.l.b16 %v1408
    %v1451 = vunpack.c.h.b16 %v1408
    %v1452 = vunpack.c.l.b16 %v1409
    %v1453 = vunpack.c.h.b16 %v1409
    %v1454 = vunpack.c.l.b16 %v1410
    %v1455 = vunpack.c.h.b16 %v1410
    %v1456 = vunpack.c.l.b16 %v1411
    %v1457 = vunpack.c.h.b16 %v1411
    %v1458 = vunpack.c.l.b16 %v1412
    %v1459 = vunpack.c.h.b16 %v1412
    %v1460 = vunpack.c.l.b16 %v1413
    %v1461 = vunpack.c.h.b16 %v1413
    %v1462 = vpack.c.b16 %v1432, %v1430
    %v1463 = vpack.c.b16 %v1433, %v1431
    %v1464 = vpack.c.b16 %v1436, %v1434
    %v1465 = vpack.c.b16 %v1437, %v1435
    %v1466 = vpack.c.b16 %v1440, %v1438
    %v1467 = vpack.c.b16 %v1441, %v1439
    %v1468 = vpack.c.b16 %v1444, %v1442
    %v1469 = vpack.c.b16 %v1445, %v1443
    %v1470 = vpack.c.b16 %v1448, %v1446
    %v1471 = vpack.c.b16 %v1449, %v1447
    %v1472 = vpack.c.b16 %v1452, %v1450
    %v1473 = vpack.c.b16 %v1453, %v1451
    %v1474 = vpack.c.b16 %v1456, %v1454
    %v1475 = vpack.c.b16 %v1457, %v1455
    %v1476 = vpack.c.b16 %v1460, %v1458
    %v1477 = vpack.c.b16 %v1461, %v1459
    %1494 = vmatprep.subr.bf16.mxu0 %v1463
    %1495 = vmatpush1.bf16.msra.mxu0 %v1462
    %1496 = vmatprep.subr.bf16.mxu0 %v1465
    %1497 = vmatpush1.bf16.msra.mxu0 %v1464
    %1498 = vmatprep.subr.bf16.mxu0 %v1467
    %1499 = vmatpush1.bf16.msra.mxu0 %v1466
    %1500 = vmatprep.subr.bf16.mxu0 %v1469
    %1501 = vmatpush1.bf16.msra.mxu0 %v1468
    %1502 = vmatprep.subr.bf16.mxu0 %v1471
    %1503 = vmatpush1.bf16.msra.mxu0 %v1470
    %1504 = vmatprep.subr.bf16.mxu0 %v1473
    %1505 = vmatpush1.bf16.msra.mxu0 %v1472
    %1506 = vmatprep.subr.bf16.mxu0 %v1475
    %1507 = vmatpush1.bf16.msra.mxu0 %v1474
    %1508 = vmatprep.subr.bf16.mxu0 %v1477
    %1509 = vmatpush1.bf16.msra.mxu0 %v1476
    %1510 = vmatprep.subr.bf16.mxu0 0
    %1511 = vmatpush1.bf16.msra.mxu0 0
    %1512 = vmatprep.subr.bf16.mxu0 0
    %1513 = vmatpush1.bf16.msra.mxu0 0
    %1514 = vmatprep.subr.bf16.mxu0 0
    %1515 = vmatpush1.bf16.msra.mxu0 0
    %1516 = vmatprep.subr.bf16.mxu0 0
    %1517 = vmatpush1.bf16.msra.mxu0 0
    %1518 = vmatprep.subr.bf16.mxu0 0
    %1519 = vmatpush1.bf16.msra.mxu0 0
    %1520 = vmatprep.subr.bf16.mxu0 0
    %1521 = vmatpush1.bf16.msra.mxu0 0
    %1522 = vmatprep.subr.bf16.mxu0 0
    %1523 = vmatpush1.bf16.msra.mxu0 0
    %1524 = vmatprep.subr.bf16.mxu0 0
    %1525 = vmatpush1.bf16.msra.mxu0 0
    %1526 = vmatprep.mubr.bf16.mxu0 0
    %1527 = vmatmul.mubr.bf16.gmra.mrb[0].mxu0 %v1396
    %v1528 = vpop.f32.mrb[0].mxu0
    %v1529 = vadd.f32 0.0, %v1528
    %v1530 = vpop.f32.mrb[0].mxu0
    %v1531 = vadd.f32 0.0, %v1530
    %v1532 = vpop.f32.mrb[0].mxu0
    %v1533 = vadd.f32 0.0, %v1532
    %v1534 = vpop.f32.mrb[0].mxu0
    %v1535 = vadd.f32 0.0, %v1534
    %1536 = vmatprep.mubr.bf16.mxu0 0
    %1537 = vmatmul.mubr.bf16.gmra.mrb[0].mxu0 %v1397
    %v1538 = vpop.f32.mrb[0].mxu0
    %v1539 = vadd.f32 0.0, %v1538
    %v1540 = vpop.f32.mrb[0].mxu0
    %v1541 = vadd.f32 0.0, %v1540
    %v1542 = vpop.f32.mrb[0].mxu0
    %v1543 = vpop.f32.mrb[0].mxu0
    %1544 = vdwg.mxu0
    %v1561 = vunpack.c.l.b16 %v1377
    %v1562 = vunpack.c.h.b16 %v1377
    %v1563 = vunpack.c.l.b16 %v1378
    %v1564 = vunpack.c.h.b16 %v1378
    %v1565 = vunpack.c.l.b16 %v1379
    %v1566 = vunpack.c.h.b16 %v1379
    %v1567 = vunpack.c.l.b16 %v1380
    %v1568 = vunpack.c.h.b16 %v1380
    %v1569 = vunpack.c.l.b16 %v1381
    %v1570 = vunpack.c.h.b16 %v1381
    %v1571 = vunpack.c.l.b16 %v1382
    %v1572 = vunpack.c.h.b16 %v1382
    %v1573 = vunpack.c.l.b16 %v1383
    %v1574 = vunpack.c.h.b16 %v1383
    %v1575 = vunpack.c.l.b16 %v1384
    %v1576 = vunpack.c.h.b16 %v1384
    %v1577 = vunpack.c.l.b16 %v1385
    %v1578 = vunpack.c.h.b16 %v1385
    %v1579 = vunpack.c.l.b16 %v1386
    %v1580 = vunpack.c.h.b16 %v1386
    %v1581 = vunpack.c.l.b16 %v1387
    %v1582 = vunpack.c.h.b16 %v1387
    %v1583 = vunpack.c.l.b16 %v1388
    %v1584 = vunpack.c.h.b16 %v1388
    %v1585 = vunpack.c.l.b16 %v1389
    %v1586 = vunpack.c.h.b16 %v1389
    %v1587 = vunpack.c.l.b16 %v1390
    %v1588 = vunpack.c.h.b16 %v1390
    %v1589 = vunpack.c.l.b16 %v1391
    %v1590 = vunpack.c.h.b16 %v1391
    %v1591 = vunpack.c.l.b16 %v1392
    %v1592 = vunpack.c.h.b16 %v1392
    %v1593 = vpack.c.b16 %v1563, %v1561
    %v1594 = vpack.c.b16 %v1564, %v1562
    %v1595 = vpack.c.b16 %v1567, %v1565
    %v1596 = vpack.c.b16 %v1568, %v1566
    %v1597 = vpack.c.b16 %v1571, %v1569
    %v1598 = vpack.c.b16 %v1572, %v1570
    %v1599 = vpack.c.b16 %v1575, %v1573
    %v1600 = vpack.c.b16 %v1576, %v1574
    %v1601 = vpack.c.b16 %v1579, %v1577
    %v1602 = vpack.c.b16 %v1580, %v1578
    %v1603 = vpack.c.b16 %v1583, %v1581
    %v1604 = vpack.c.b16 %v1584, %v1582
    %v1605 = vpack.c.b16 %v1587, %v1585
    %v1606 = vpack.c.b16 %v1588, %v1586
    %v1607 = vpack.c.b16 %v1591, %v1589
    %v1608 = vpack.c.b16 %v1592, %v1590
    %1625 = vmatprep.subr.bf16.mxu0 %v1594
    %1626 = vmatpush1.bf16.msra.mxu0 %v1593
    %1627 = vmatprep.subr.bf16.mxu0 %v1596
    %1628 = vmatpush1.bf16.msra.mxu0 %v1595
    %1629 = vmatprep.subr.bf16.mxu0 %v1598
    %1630 = vmatpush1.bf16.msra.mxu0 %v1597
    %1631 = vmatprep.subr.bf16.mxu0 %v1600
    %1632 = vmatpush1.bf16.msra.mxu0 %v1599
    %1633 = vmatprep.subr.bf16.mxu0 %v1602
    %1634 = vmatpush1.bf16.msra.mxu0 %v1601
    %1635 = vmatprep.subr.bf16.mxu0 %v1604
    %1636 = vmatpush1.bf16.msra.mxu0 %v1603
    %1637 = vmatprep.subr.bf16.mxu0 %v1606
    %1638 = vmatpush1.bf16.msra.mxu0 %v1605
    %1639 = vmatprep.subr.bf16.mxu0 %v1608
    %1640 = vmatpush1.bf16.msra.mxu0 %v1607
    %1641 = vmatprep.subr.bf16.mxu0 0
    %1642 = vmatpush1.bf16.msra.mxu0 0
    %1643 = vmatprep.subr.bf16.mxu0 0
    %1644 = vmatpush1.bf16.msra.mxu0 0
    %1645 = vmatprep.subr.bf16.mxu0 0
    %1646 = vmatpush1.bf16.msra.mxu0 0
    %1647 = vmatprep.subr.bf16.mxu0 0
    %1648 = vmatpush1.bf16.msra.mxu0 0
    %1649 = vmatprep.subr.bf16.mxu0 0
    %1650 = vmatpush1.bf16.msra.mxu0 0
    %1651 = vmatprep.subr.bf16.mxu0 0
    %1652 = vmatpush1.bf16.msra.mxu0 0
    %1653 = vmatprep.subr.bf16.mxu0 0
    %1654 = vmatpush1.bf16.msra.mxu0 0
    %1655 = vmatprep.subr.bf16.mxu0 0
    %1656 = vmatpush1.bf16.msra.mxu0 0
    %1657 = vmatprep.mubr.bf16.mxu0 0
    %1658 = vmatmul.mubr.bf16.gmra.mrb[0].mxu0 %v1375
    %v1659 = vpop.f32.mrb[0].mxu0
    %v1660 = vadd.f32 %v1529, %v1659
    %v1661 = vpop.f32.mrb[0].mxu0
    %v1662 = vadd.f32 %v1531, %v1661
    %v1663 = vpop.f32.mrb[0].mxu0
    %v1664 = vadd.f32 %v1533, %v1663
    %v1665 = vpop.f32.mrb[0].mxu0
    %v1666 = vadd.f32 %v1535, %v1665
    %1667 = vmatprep.mubr.bf16.mxu0 0
    %1668 = vmatmul.mubr.bf16.gmra.mrb[0].mxu0 %v1376
    %v1669 = vpop.f32.mrb[0].mxu0
    %v1670 = vadd.f32 %v1539, %v1669
    %v1671 = vpop.f32.mrb[0].mxu0
    %v1672 = vadd.f32 %v1541, %v1671
    %v1673 = vpop.f32.mrb[0].mxu0
    %v1674 = vpop.f32.mrb[0].mxu0
    %1675 = vdwg.mxu0
    %v1676 = vld [vmem:[#allocation2 + $0x4] sm:$0xff]
    %v1677 = vld [vmem:[#allocation2 + $0xc] sm:$0xff]
    %v1678 = vld [vmem:[#allocation2 + $0x14] sm:$0xf]
    %v1679 = vpack.c.bf16 %v1677, %v1676
    %v1680 = vpack.c.bf16 %v1678, %v1678
    %v1681 = vld [vmem:[#allocation4 + $0x380] sm:$0xff]
    %v1682 = vld [vmem:[#allocation4 + $0x388] sm:$0xff]
    %v1683 = vld [vmem:[#allocation4 + $0x390] sm:$0xff]
    %v1684 = vld [vmem:[#allocation4 + $0x398] sm:$0xff]
    %v1685 = vld [vmem:[#allocation4 + $0x3a0] sm:$0xff]
    %v1686 = vld [vmem:[#allocation4 + $0x3a8] sm:$0xff]
    %v1687 = vld [vmem:[#allocation4 + $0x3b0] sm:$0xff]
    %v1688 = vld [vmem:[#allocation4 + $0x3b8] sm:$0xff]
    %v1689 = vld [vmem:[#allocation4 + $0x3c0] sm:$0xff]
    %v1690 = vld [vmem:[#allocation4 + $0x3c8] sm:$0xff]
    %v1691 = vld [vmem:[#allocation4 + $0x3d0] sm:$0xff]
    %v1692 = vld [vmem:[#allocation4 + $0x3d8] sm:$0xff]
    %v1693 = vld [vmem:[#allocation4 + $0x3e0] sm:$0xff]
    %v1694 = vld [vmem:[#allocation4 + $0x3e8] sm:$0xff]
    %v1695 = vld [vmem:[#allocation4 + $0x3f0] sm:$0xff]
    %v1696 = vld [vmem:[#allocation4 + $0x3f8] sm:$0xff]
    %v1713 = vunpack.c.l.b16 %v1681
    %v1714 = vunpack.c.h.b16 %v1681
    %v1715 = vunpack.c.l.b16 %v1682
    %v1716 = vunpack.c.h.b16 %v1682
    %v1717 = vunpack.c.l.b16 %v1683
    %v1718 = vunpack.c.h.b16 %v1683
    %v1719 = vunpack.c.l.b16 %v1684
    %v1720 = vunpack.c.h.b16 %v1684
    %v1721 = vunpack.c.l.b16 %v1685
    %v1722 = vunpack.c.h.b16 %v1685
    %v1723 = vunpack.c.l.b16 %v1686
    %v1724 = vunpack.c.h.b16 %v1686
    %v1725 = vunpack.c.l.b16 %v1687
    %v1726 = vunpack.c.h.b16 %v1687
    %v1727 = vunpack.c.l.b16 %v1688
    %v1728 = vunpack.c.h.b16 %v1688
    %v1729 = vunpack.c.l.b16 %v1689
    %v1730 = vunpack.c.h.b16 %v1689
    %v1731 = vunpack.c.l.b16 %v1690
    %v1732 = vunpack.c.h.b16 %v1690
    %v1733 = vunpack.c.l.b16 %v1691
    %v1734 = vunpack.c.h.b16 %v1691
    %v1735 = vunpack.c.l.b16 %v1692
    %v1736 = vunpack.c.h.b16 %v1692
    %v1737 = vunpack.c.l.b16 %v1693
    %v1738 = vunpack.c.h.b16 %v1693
    %v1739 = vunpack.c.l.b16 %v1694
    %v1740 = vunpack.c.h.b16 %v1694
    %v1741 = vunpack.c.l.b16 %v1695
    %v1742 = vunpack.c.h.b16 %v1695
    %v1743 = vunpack.c.l.b16 %v1696
    %v1744 = vunpack.c.h.b16 %v1696
    %v1745 = vpack.c.b16 %v1715, %v1713
    %v1746 = vpack.c.b16 %v1716, %v1714
    %v1747 = vpack.c.b16 %v1719, %v1717
    %v1748 = vpack.c.b16 %v1720, %v1718
    %v1749 = vpack.c.b16 %v1723, %v1721
    %v1750 = vpack.c.b16 %v1724, %v1722
    %v1751 = vpack.c.b16 %v1727, %v1725
    %v1752 = vpack.c.b16 %v1728, %v1726
    %v1753 = vpack.c.b16 %v1731, %v1729
    %v1754 = vpack.c.b16 %v1732, %v1730
    %v1755 = vpack.c.b16 %v1735, %v1733
    %v1756 = vpack.c.b16 %v1736, %v1734
    %v1757 = vpack.c.b16 %v1739, %v1737
    %v1758 = vpack.c.b16 %v1740, %v1738
    %v1759 = vpack.c.b16 %v1743, %v1741
    %v1760 = vpack.c.b16 %v1744, %v1742
    %1777 = vmatprep.subr.bf16.mxu0 %v1746
    %1778 = vmatpush1.bf16.msra.mxu0 %v1745
    %1779 = vmatprep.subr.bf16.mxu0 %v1748
    %1780 = vmatpush1.bf16.msra.mxu0 %v1747
    %1781 = vmatprep.subr.bf16.mxu0 %v1750
    %1782 = vmatpush1.bf16.msra.mxu0 %v1749
    %1783 = vmatprep.subr.bf16.mxu0 %v1752
    %1784 = vmatpush1.bf16.msra.mxu0 %v1751
    %1785 = vmatprep.subr.bf16.mxu0 %v1754
    %1786 = vmatpush1.bf16.msra.mxu0 %v1753
    %1787 = vmatprep.subr.bf16.mxu0 %v1756
    %1788 = vmatpush1.bf16.msra.mxu0 %v1755
    %1789 = vmatprep.subr.bf16.mxu0 %v1758
    %1790 = vmatpush1.bf16.msra.mxu0 %v1757
    %1791 = vmatprep.subr.bf16.mxu0 %v1760
    %1792 = vmatpush1.bf16.msra.mxu0 %v1759
    %1793 = vmatprep.subr.bf16.mxu0 0
    %1794 = vmatpush1.bf16.msra.mxu0 0
    %1795 = vmatprep.subr.bf16.mxu0 0
    %1796 = vmatpush1.bf16.msra.mxu0 0
    %1797 = vmatprep.subr.bf16.mxu0 0
    %1798 = vmatpush1.bf16.msra.mxu0 0
    %1799 = vmatprep.subr.bf16.mxu0 0
    %1800 = vmatpush1.bf16.msra.mxu0 0
    %1801 = vmatprep.subr.bf16.mxu0 0
    %1802 = vmatpush1.bf16.msra.mxu0 0
    %1803 = vmatprep.subr.bf16.mxu0 0
    %1804 = vmatpush1.bf16.msra.mxu0 0
    %1805 = vmatprep.subr.bf16.mxu0 0
    %1806 = vmatpush1.bf16.msra.mxu0 0
    %1807 = vmatprep.subr.bf16.mxu0 0
    %1808 = vmatpush1.bf16.msra.mxu0 0
    %1809 = vmatprep.mubr.bf16.mxu0 0
    %1810 = vmatmul.mubr.bf16.gmra.mrb[0].mxu0 %v1679
    %v1811 = vpop.f32.mrb[0].mxu0
    %v1812 = vadd.f32 0.0, %v1811
    %v1813 = vpop.f32.mrb[0].mxu0
    %v1814 = vadd.f32 0.0, %v1813
    %v1815 = vpop.f32.mrb[0].mxu0
    %v1816 = vadd.f32 0.0, %v1815
    %v1817 = vpop.f32.mrb[0].mxu0
    %v1818 = vadd.f32 0.0, %v1817
    %1819 = vmatprep.mubr.bf16.mxu0 0
    %1820 = vmatmul.mubr.bf16.gmra.mrb[0].mxu0 %v1680
    %v1821 = vpop.f32.mrb[0].mxu0
    %v1822 = vadd.f32 0.0, %v1821
    %v1823 = vpop.f32.mrb[0].mxu0
    %v1824 = vadd.f32 0.0, %v1823
    %v1825 = vpop.f32.mrb[0].mxu0
    %v1826 = vpop.f32.mrb[0].mxu0
    %1827 = vdwg.mxu0
    %v1828 = vadd.f32 %v1660, %v1812
    %v1829 = vadd.f32 %v1662, %v1814
    %v1830 = vadd.f32 %v1664, %v1816
    %v1831 = vadd.f32 %v1666, %v1818
    %v1832 = vadd.f32 %v1670, %v1822
    %v1833 = vadd.f32 %v1672, %v1824
    %v1834 = vld [vmem:[#allocation2 + $0x6] sm:$0xff]
    %v1835 = vld [vmem:[#allocation2 + $0xe] sm:$0xff]
    %v1836 = vld [vmem:[#allocation2 + $0x16] sm:$0xf]
    %v1837 = vpack.c.bf16 %v1835, %v1834
    %v1838 = vpack.c.bf16 %v1836, %v1836
    %v1839 = vld [vmem:[#allocation4 + $0x400] sm:$0xff]
    %v1840 = vld [vmem:[#allocation4 + $0x408] sm:$0xff]
    %v1841 = vld [vmem:[#allocation4 + $0x410] sm:$0xff]
    %v1842 = vld [vmem:[#allocation4 + $0x418] sm:$0xff]
    %v1843 = vld [vmem:[#allocation4 + $0x420] sm:$0xff]
    %v1844 = vld [vmem:[#allocation4 + $0x428] sm:$0xff]
    %v1845 = vld [vmem:[#allocation4 + $0x430] sm:$0xff]
    %v1846 = vld [vmem:[#allocation4 + $0x438] sm:$0xff]
    %v1847 = vld [vmem:[#allocation4 + $0x440] sm:$0xff]
    %v1848 = vld [vmem:[#allocation4 + $0x448] sm:$0xff]
    %v1849 = vld [vmem:[#allocation4 + $0x450] sm:$0xff]
    %v1850 = vld [vmem:[#allocation4 + $0x458] sm:$0xff]
    %v1851 = vld [vmem:[#allocation4 + $0x460] sm:$0xff]
    %v1852 = vld [vmem:[#allocation4 + $0x468] sm:$0xff]
    %v1853 = vld [vmem:[#allocation4 + $0x470] sm:$0xff]
    %v1854 = vld [vmem:[#allocation4 + $0x478] sm:$0xff]
    %v1871 = vunpack.c.l.b16 %v1839
    %v1872 = vunpack.c.h.b16 %v1839
    %v1873 = vunpack.c.l.b16 %v1840
    %v1874 = vunpack.c.h.b16 %v1840
    %v1875 = vunpack.c.l.b16 %v1841
    %v1876 = vunpack.c.h.b16 %v1841
    %v1877 = vunpack.c.l.b16 %v1842
    %v1878 = vunpack.c.h.b16 %v1842
    %v1879 = vunpack.c.l.b16 %v1843
    %v1880 = vunpack.c.h.b16 %v1843
    %v1881 = vunpack.c.l.b16 %v1844
    %v1882 = vunpack.c.h.b16 %v1844
    %v1883 = vunpack.c.l.b16 %v1845
    %v1884 = vunpack.c.h.b16 %v1845
    %v1885 = vunpack.c.l.b16 %v1846
    %v1886 = vunpack.c.h.b16 %v1846
    %v1887 = vunpack.c.l.b16 %v1847
    %v1888 = vunpack.c.h.b16 %v1847
    %v1889 = vunpack.c.l.b16 %v1848
    %v1890 = vunpack.c.h.b16 %v1848
    %v1891 = vunpack.c.l.b16 %v1849
    %v1892 = vunpack.c.h.b16 %v1849
    %v1893 = vunpack.c.l.b16 %v1850
    %v1894 = vunpack.c.h.b16 %v1850
    %v1895 = vunpack.c.l.b16 %v1851
    %v1896 = vunpack.c.h.b16 %v1851
    %v1897 = vunpack.c.l.b16 %v1852
    %v1898 = vunpack.c.h.b16 %v1852
    %v1899 = vunpack.c.l.b16 %v1853
    %v1900 = vunpack.c.h.b16 %v1853
    %v1901 = vunpack.c.l.b16 %v1854
    %v1902 = vunpack.c.h.b16 %v1854
    %v1903 = vpack.c.b16 %v1873, %v1871
    %v1904 = vpack.c.b16 %v1874, %v1872
    %v1905 = vpack.c.b16 %v1877, %v1875
    %v1906 = vpack.c.b16 %v1878, %v1876
    %v1907 = vpack.c.b16 %v1881, %v1879
    %v1908 = vpack.c.b16 %v1882, %v1880
    %v1909 = vpack.c.b16 %v1885, %v1883
    %v1910 = vpack.c.b16 %v1886, %v1884
    %v1911 = vpack.c.b16 %v1889, %v1887
    %v1912 = vpack.c.b16 %v1890, %v1888
    %v1913 = vpack.c.b16 %v1893, %v1891
    %v1914 = vpack.c.b16 %v1894, %v1892
    %v1915 = vpack.c.b16 %v1897, %v1895
    %v1916 = vpack.c.b16 %v1898, %v1896
    %v1917 = vpack.c.b16 %v1901, %v1899
    %v1918 = vpack.c.b16 %v1902, %v1900
    %1935 = vmatprep.subr.bf16.mxu0 %v1904
    %1936 = vmatpush1.bf16.msra.mxu0 %v1903
    %1937 = vmatprep.subr.bf16.mxu0 %v1906
    %1938 = vmatpush1.bf16.msra.mxu0 %v1905
    %1939 = vmatprep.subr.bf16.mxu0 %v1908
    %1940 = vmatpush1.bf16.msra.mxu0 %v1907
    %1941 = vmatprep.subr.bf16.mxu0 %v1910
    %1942 = vmatpush1.bf16.msra.mxu0 %v1909
    %1943 = vmatprep.subr.bf16.mxu0 %v1912
    %1944 = vmatpush1.bf16.msra.mxu0 %v1911
    %1945 = vmatprep.subr.bf16.mxu0 %v1914
    %1946 = vmatpush1.bf16.msra.mxu0 %v1913
    %1947 = vmatprep.subr.bf16.mxu0 %v1916
    %1948 = vmatpush1.bf16.msra.mxu0 %v1915
    %1949 = vmatprep.subr.bf16.mxu0 %v1918
    %1950 = vmatpush1.bf16.msra.mxu0 %v1917
    %1951 = vmatprep.subr.bf16.mxu0 0
    %1952 = vmatpush1.bf16.msra.mxu0 0
    %1953 = vmatprep.subr.bf16.mxu0 0
    %1954 = vmatpush1.bf16.msra.mxu0 0
    %1955 = vmatprep.subr.bf16.mxu0 0
    %1956 = vmatpush1.bf16.msra.mxu0 0
    %1957 = vmatprep.subr.bf16.mxu0 0
    %1958 = vmatpush1.bf16.msra.mxu0 0
    %1959 = vmatprep.subr.bf16.mxu0 0
    %1960 = vmatpush1.bf16.msra.mxu0 0
    %1961 = vmatprep.subr.bf16.mxu0 0
    %1962 = vmatpush1.bf16.msra.mxu0 0
    %1963 = vmatprep.subr.bf16.mxu0 0
    %1964 = vmatpush1.bf16.msra.mxu0 0
    %1965 = vmatprep.subr.bf16.mxu0 0
    %1966 = vmatpush1.bf16.msra.mxu0 0
    %1967 = vmatprep.mubr.bf16.mxu0 0
    %1968 = vmatmul.mubr.bf16.gmra.mrb[0].mxu0 %v1837
    %v1969 = vpop.f32.mrb[0].mxu0
    %v1970 = vadd.f32 0.0, %v1969
    %v1971 = vpop.f32.mrb[0].mxu0
    %v1972 = vadd.f32 0.0, %v1971
    %v1973 = vpop.f32.mrb[0].mxu0
    %v1974 = vadd.f32 0.0, %v1973
    %v1975 = vpop.f32.mrb[0].mxu0
    %v1976 = vadd.f32 0.0, %v1975
    %1977 = vmatprep.mubr.bf16.mxu0 0
    %1978 = vmatmul.mubr.bf16.gmra.mrb[0].mxu0 %v1838
    %v1979 = vpop.f32.mrb[0].mxu0
    %v1980 = vadd.f32 0.0, %v1979
    %v1981 = vpop.f32.mrb[0].mxu0
    %v1982 = vadd.f32 0.0, %v1981
    %v1983 = vpop.f32.mrb[0].mxu0
    %v1984 = vpop.f32.mrb[0].mxu0
    %1985 = vdwg.mxu0
    %v1986 = vadd.f32 %v1828, %v1970
    %v1987 = vadd.f32 %v1829, %v1972
    %v1988 = vadd.f32 %v1830, %v1974
    %v1989 = vadd.f32 %v1831, %v1976
    %v1990 = vadd.f32 %v1832, %v1980
    %v1991 = vadd.f32 %v1833, %v1982
    %v1992 = vld [vmem:[#allocation2 + $0x8] sm:$0xff]
    %v1993 = vld [vmem:[#allocation2 + $0x10] sm:$0xff]
    %v1994 = vld [vmem:[#allocation2 + $0x18] sm:$0xf]
    %v1995 = vpack.c.bf16 %v1993, %v1992
    %v1996 = vpack.c.bf16 %v1994, %v1994
    %v1997 = vld [vmem:[#allocation4 + $0x480] sm:$0xff]
    %v1998 = vld [vmem:[#allocation4 + $0x488] sm:$0xff]
    %v1999 = vld [vmem:[#allocation4 + $0x490] sm:$0xff]
    %v2000 = vld [vmem:[#allocation4 + $0x498] sm:$0xff]
    %v2001 = vld [vmem:[#allocation4 + $0x4a0] sm:$0xff]
    %v2002 = vld [vmem:[#allocation4 + $0x4a8] sm:$0xff]
    %v2003 = vld [vmem:[#allocation4 + $0x4b0] sm:$0xff]
    %v2004 = vld [vmem:[#allocation4 + $0x4b8] sm:$0xff]
    %v2005 = vld [vmem:[#allocation4 + $0x4c0] sm:$0xff]
    %v2006 = vld [vmem:[#allocation4 + $0x4c8] sm:$0xff]
    %v2007 = vld [vmem:[#allocation4 + $0x4d0] sm:$0xff]
    %v2008 = vld [vmem:[#allocation4 + $0x4d8] sm:$0xff]
    %v2009 = vld [vmem:[#allocation4 + $0x4e0] sm:$0xff]
    %v2010 = vld [vmem:[#allocation4 + $0x4e8] sm:$0xff]
    %v2011 = vld [vmem:[#allocation4 + $0x4f0] sm:$0xff]
    %v2012 = vld [vmem:[#allocation4 + $0x4f8] sm:$0xff]
    %v2029 = vunpack.c.l.b16 %v1997
    %v2030 = vunpack.c.h.b16 %v1997
    %v2031 = vunpack.c.l.b16 %v1998
    %v2032 = vunpack.c.h.b16 %v1998
    %v2033 = vunpack.c.l.b16 %v1999
    %v2034 = vunpack.c.h.b16 %v1999
    %v2035 = vunpack.c.l.b16 %v2000
    %v2036 = vunpack.c.h.b16 %v2000
    %v2037 = vunpack.c.l.b16 %v2001
    %v2038 = vunpack.c.h.b16 %v2001
    %v2039 = vunpack.c.l.b16 %v2002
    %v2040 = vunpack.c.h.b16 %v2002
    %v2041 = vunpack.c.l.b16 %v2003
    %v2042 = vunpack.c.h.b16 %v2003
    %v2043 = vunpack.c.l.b16 %v2004
    %v2044 = vunpack.c.h.b16 %v2004
    %v2045 = vunpack.c.l.b16 %v2005
    %v2046 = vunpack.c.h.b16 %v2005
    %v2047 = vunpack.c.l.b16 %v2006
    %v2048 = vunpack.c.h.b16 %v2006
    %v2049 = vunpack.c.l.b16 %v2007
    %v2050 = vunpack.c.h.b16 %v2007
    %v2051 = vunpack.c.l.b16 %v2008
    %v2052 = vunpack.c.h.b16 %v2008
    %v2053 = vunpack.c.l.b16 %v2009
    %v2054 = vunpack.c.h.b16 %v2009
    %v2055 = vunpack.c.l.b16 %v2010
    %v2056 = vunpack.c.h.b16 %v2010
    %v2057 = vunpack.c.l.b16 %v2011
    %v2058 = vunpack.c.h.b16 %v2011
    %v2059 = vunpack.c.l.b16 %v2012
    %v2060 = vunpack.c.h.b16 %v2012
    %v2061 = vpack.c.b16 %v2031, %v2029
    %v2062 = vpack.c.b16 %v2032, %v2030
    %v2063 = vpack.c.b16 %v2035, %v2033
    %v2064 = vpack.c.b16 %v2036, %v2034
    %v2065 = vpack.c.b16 %v2039, %v2037
    %v2066 = vpack.c.b16 %v2040, %v2038
    %v2067 = vpack.c.b16 %v2043, %v2041
    %v2068 = vpack.c.b16 %v2044, %v2042
    %v2069 = vpack.c.b16 %v2047, %v2045
    %v2070 = vpack.c.b16 %v2048, %v2046
    %v2071 = vpack.c.b16 %v2051, %v2049
    %v2072 = vpack.c.b16 %v2052, %v2050
    %v2073 = vpack.c.b16 %v2055, %v2053
    %v2074 = vpack.c.b16 %v2056, %v2054
    %v2075 = vpack.c.b16 %v2059, %v2057
    %v2076 = vpack.c.b16 %v2060, %v2058
    %2093 = vmatprep.subr.bf16.mxu0 %v2062
    %2094 = vmatpush1.bf16.msra.mxu0 %v2061
    %2095 = vmatprep.subr.bf16.mxu0 %v2064
    %2096 = vmatpush1.bf16.msra.mxu0 %v2063
    %2097 = vmatprep.subr.bf16.mxu0 %v2066
    %2098 = vmatpush1.bf16.msra.mxu0 %v2065
    %2099 = vmatprep.subr.bf16.mxu0 %v2068
    %2100 = vmatpush1.bf16.msra.mxu0 %v2067
    %2101 = vmatprep.subr.bf16.mxu0 %v2070
    %2102 = vmatpush1.bf16.msra.mxu0 %v2069
    %2103 = vmatprep.subr.bf16.mxu0 %v2072
    %2104 = vmatpush1.bf16.msra.mxu0 %v2071
    %2105 = vmatprep.subr.bf16.mxu0 %v2074
    %2106 = vmatpush1.bf16.msra.mxu0 %v2073
    %2107 = vmatprep.subr.bf16.mxu0 %v2076
    %2108 = vmatpush1.bf16.msra.mxu0 %v2075
    %2109 = vmatprep.subr.bf16.mxu0 0
    %2110 = vmatpush1.bf16.msra.mxu0 0
    %2111 = vmatprep.subr.bf16.mxu0 0
    %2112 = vmatpush1.bf16.msra.mxu0 0
    %2113 = vmatprep.subr.bf16.mxu0 0
    %2114 = vmatpush1.bf16.msra.mxu0 0
    %2115 = vmatprep.subr.bf16.mxu0 0
    %2116 = vmatpush1.bf16.msra.mxu0 0
    %2117 = vmatprep.subr.bf16.mxu0 0
    %2118 = vmatpush1.bf16.msra.mxu0 0
    %2119 = vmatprep.subr.bf16.mxu0 0
    %2120 = vmatpush1.bf16.msra.mxu0 0
    %2121 = vmatprep.subr.bf16.mxu0 0
    %2122 = vmatpush1.bf16.msra.mxu0 0
    %2123 = vmatprep.subr.bf16.mxu0 0
    %2124 = vmatpush1.bf16.msra.mxu0 0
    %2125 = vmatprep.mubr.bf16.mxu0 0
    %2126 = vmatmul.mubr.bf16.gmra.mrb[0].mxu0 %v1995
    %v2127 = vpop.f32.mrb[0].mxu0
    %v2128 = vadd.f32 0.0, %v2127
    %v2129 = vpop.f32.mrb[0].mxu0
    %v2130 = vadd.f32 0.0, %v2129
    %v2131 = vpop.f32.mrb[0].mxu0
    %v2132 = vadd.f32 0.0, %v2131
    %v2133 = vpop.f32.mrb[0].mxu0
    %v2134 = vadd.f32 0.0, %v2133
    %2135 = vmatprep.mubr.bf16.mxu0 0
    %2136 = vmatmul.mubr.bf16.gmra.mrb[0].mxu0 %v1996
    %v2137 = vpop.f32.mrb[0].mxu0
    %v2138 = vadd.f32 0.0, %v2137
    %v2139 = vpop.f32.mrb[0].mxu0
    %v2140 = vadd.f32 0.0, %v2139
    %v2141 = vpop.f32.mrb[0].mxu0
    %v2142 = vpop.f32.mrb[0].mxu0
    %2143 = vdwg.mxu0
    %v2144 = vadd.f32 %v1986, %v2128
    %v2145 = vadd.f32 %v1987, %v2130
    %v2146 = vadd.f32 %v1988, %v2132
    %v2147 = vadd.f32 %v1989, %v2134
    %v2148 = vadd.f32 %v1990, %v2138
    %v2149 = vadd.f32 %v1991, %v2140
    %v2150 = vld [vmem:[#allocation4 + $0x740] sm:$0xf]
    %v2151 = vld [vmem:[#allocation4 + $0x748] sm:$0xf]
    %v2152 = vld [vmem:[#allocation4 + $0x750] sm:$0xf]
    %v2153 = vld [vmem:[#allocation4 + $0x758] sm:$0xf]
    %v2154 = vpack.c.bf16 %v2146, %v2144
    %v2155 = vpack.c.bf16 %v2147, %v2145
    %v2156 = vpack.c.bf16 %v2148, %v2148
    %v2157 = vpack.c.bf16 %v2149, %v2149
    %v2162 = vunpack.c.l.b16 %v2150
    %v2163 = vunpack.c.l.b16 %v2151
    %v2164 = vunpack.c.l.b16 %v2152
    %v2165 = vunpack.c.l.b16 %v2153
    %v2166 = vpack.c.b16 %v2163, %v2162
    %v2167 = vpack.c.b16 %v2165, %v2164
    %vm2168 = vcmask 162816
    %v2170 = vsel %vm2168, %v2166, 0
    %v2173 = vsel %vm2168, %v2167, 0
    %vm2175 = vcmask 1041408
    %v2177 = vsel %vm2175, %v2156, 0
    %v2180 = vsel %vm2175, %v2157, 0
    %2182 = vmatprep.subr.bf16.mxu0 %v2155
    %2183 = vmatpush1.bf16.msra.mxu0 %v2154
    %2184 = vmatprep.subr.bf16.mxu0 %v2180
    %2185 = vmatpush1.bf16.msra.mxu0 %v2177
    %2186 = vmatprep.subr.bf16.mxu0 0
    %2187 = vmatpush1.bf16.msra.mxu0 0
    %2188 = vmatprep.subr.bf16.mxu0 0
    %2189 = vmatpush1.bf16.msra.mxu0 0
    %2190 = vmatprep.subr.bf16.mxu0 0
    %2191 = vmatpush1.bf16.msra.mxu0 0
    %2192 = vmatprep.subr.bf16.mxu0 0
    %2193 = vmatpush1.bf16.msra.mxu0 0
    %2194 = vmatprep.subr.bf16.mxu0 0
    %2195 = vmatpush1.bf16.msra.mxu0 0
    %2196 = vmatprep.subr.bf16.mxu0 0
    %2197 = vmatpush1.bf16.msra.mxu0 0
    %2198 = vmatprep.subr.bf16.mxu0 0
    %2199 = vmatpush1.bf16.msra.mxu0 0
    %2200 = vmatprep.subr.bf16.mxu0 0
    %2201 = vmatpush1.bf16.msra.mxu0 0
    %2202 = vmatprep.subr.bf16.mxu0 0
    %2203 = vmatpush1.bf16.msra.mxu0 0
    %2204 = vmatprep.subr.bf16.mxu0 0
    %2205 = vmatpush1.bf16.msra.mxu0 0
    %2206 = vmatprep.subr.bf16.mxu0 0
    %2207 = vmatpush1.bf16.msra.mxu0 0
    %2208 = vmatprep.subr.bf16.mxu0 0
    %2209 = vmatpush1.bf16.msra.mxu0 0
    %2210 = vmatprep.subr.bf16.mxu0 0
    %2211 = vmatpush1.bf16.msra.mxu0 0
    %2212 = vmatprep.subr.bf16.mxu0 0
    %2213 = vmatpush1.bf16.msra.mxu0 0
    %2214 = vmatprep.mubr.bf16.mxu0 0
    %2215 = vmatmul.mubr.bf16.gmra.mrb[0].mxu0 %v2170
    %v2216 = vpop.f32.mrb[0].mxu0
    %v2217 = vadd.f32 0.0, %v2216
    %v2218 = vpop.f32.mrb[0].mxu0
    %v2219 = vadd.f32 0.0, %v2218
    %v2220 = vpop.f32.mrb[0].mxu0
    %v2221 = vadd.f32 0.0, %v2220
    %v2222 = vpop.f32.mrb[0].mxu0
    %v2223 = vadd.f32 0.0, %v2222
    %2224 = vmatprep.mubr.bf16.mxu0 0
    %2225 = vmatmul.mubr.bf16.gmra.mrb[0].mxu0 %v2173
    %v2226 = vpop.f32.mrb[0].mxu0
    %v2227 = vadd.f32 0.0, %v2226
    %v2228 = vpop.f32.mrb[0].mxu0
    %v2229 = vadd.f32 0.0, %v2228
    %v2230 = vpop.f32.mrb[0].mxu0
    %v2231 = vadd.f32 0.0, %v2230
    %v2232 = vpop.f32.mrb[0].mxu0
    %v2233 = vadd.f32 0.0, %v2232
    %2234 = vdwg.mxu0
    %v2235 = vmax.f32 %v2217, %v2227
    %v2236 = vmax.f32 %v2219, %v2229
    %v2237 = vmax.f32 %v2221, %v2231
    %v2238 = vmax.f32 %v2223, %v2233
    %v2239 = vpack.c.bf16 %v2237, %v2235
    %v2240 = vpack.c.bf16 %v2238, %v2236
    %v2241 = vld [vmem:[#allocation4 + $0x600] sm:$0xff]
    %v2242 = vld [vmem:[#allocation4 + $0x608] sm:$0xff]
    %v2243 = vld [vmem:[#allocation4 + $0x610] sm:$0xff]
    %v2244 = vld [vmem:[#allocation4 + $0x618] sm:$0xff]
    %v2245 = vld [vmem:[#allocation4 + $0x620] sm:$0xff]
    %v2246 = vld [vmem:[#allocation4 + $0x628] sm:$0xff]
    %v2247 = vld [vmem:[#allocation4 + $0x630] sm:$0xff]
    %v2248 = vld [vmem:[#allocation4 + $0x638] sm:$0xff]
    %v2249 = vld [vmem:[#allocation4 + $0x640] sm:$0xff]
    %v2250 = vld [vmem:[#allocation4 + $0x648] sm:$0xff]
    %v2251 = vld [vmem:[#allocation4 + $0x650] sm:$0xff]
    %v2252 = vld [vmem:[#allocation4 + $0x658] sm:$0xff]
    %v2253 = vld [vmem:[#allocation4 + $0x660] sm:$0xff]
    %v2254 = vld [vmem:[#allocation4 + $0x668] sm:$0xff]
    %v2255 = vld [vmem:[#allocation4 + $0x670] sm:$0xff]
    %v2256 = vld [vmem:[#allocation4 + $0x678] sm:$0xff]
    %v2257 = vld [vmem:[#allocation4 + $0x680] sm:$0xff]
    %v2258 = vld [vmem:[#allocation4 + $0x688] sm:$0xff]
    %v2259 = vld [vmem:[#allocation4 + $0x690] sm:$0xff]
    %v2260 = vld [vmem:[#allocation4 + $0x698] sm:$0xff]
    %v2261 = vld [vmem:[#allocation4 + $0x6a0] sm:$0xff]
    %v2262 = vld [vmem:[#allocation4 + $0x6a8] sm:$0xff]
    %v2263 = vld [vmem:[#allocation4 + $0x6b0] sm:$0xff]
    %v2264 = vld [vmem:[#allocation4 + $0x6b8] sm:$0xff]
    %v2265 = vld [vmem:[#allocation4 + $0x6c0] sm:$0xff]
    %v2266 = vld [vmem:[#allocation4 + $0x6c8] sm:$0xff]
    %v2267 = vld [vmem:[#allocation4 + $0x6d0] sm:$0xff]
    %v2268 = vld [vmem:[#allocation4 + $0x6d8] sm:$0xff]
    %v2269 = vld [vmem:[#allocation4 + $0x6e0] sm:$0xff]
    %v2270 = vld [vmem:[#allocation4 + $0x6e8] sm:$0xff]
    %v2271 = vld [vmem:[#allocation4 + $0x6f0] sm:$0xff]
    %v2272 = vld [vmem:[#allocation4 + $0x6f8] sm:$0xff]
    %v2305 = vunpack.c.l.b16 %v2241
    %v2306 = vunpack.c.h.b16 %v2241
    %v2307 = vunpack.c.l.b16 %v2242
    %v2308 = vunpack.c.h.b16 %v2242
    %v2309 = vunpack.c.l.b16 %v2243
    %v2310 = vunpack.c.h.b16 %v2243
    %v2311 = vunpack.c.l.b16 %v2244
    %v2312 = vunpack.c.h.b16 %v2244
    %v2313 = vunpack.c.l.b16 %v2245
    %v2314 = vunpack.c.h.b16 %v2245
    %v2315 = vunpack.c.l.b16 %v2246
    %v2316 = vunpack.c.h.b16 %v2246
    %v2317 = vunpack.c.l.b16 %v2247
    %v2318 = vunpack.c.h.b16 %v2247
    %v2319 = vunpack.c.l.b16 %v2248
    %v2320 = vunpack.c.h.b16 %v2248
    %v2321 = vunpack.c.l.b16 %v2249
    %v2322 = vunpack.c.h.b16 %v2249
    %v2323 = vunpack.c.l.b16 %v2250
    %v2324 = vunpack.c.h.b16 %v2250
    %v2325 = vunpack.c.l.b16 %v2251
    %v2326 = vunpack.c.h.b16 %v2251
    %v2327 = vunpack.c.l.b16 %v2252
    %v2328 = vunpack.c.h.b16 %v2252
    %v2329 = vunpack.c.l.b16 %v2253
    %v2330 = vunpack.c.h.b16 %v2253
    %v2331 = vunpack.c.l.b16 %v2254
    %v2332 = vunpack.c.h.b16 %v2254
    %v2333 = vunpack.c.l.b16 %v2255
    %v2334 = vunpack.c.h.b16 %v2255
    %v2335 = vunpack.c.l.b16 %v2256
    %v2336 = vunpack.c.h.b16 %v2256
    %v2337 = vunpack.c.l.b16 %v2257
    %v2338 = vunpack.c.h.b16 %v2257
    %v2339 = vunpack.c.l.b16 %v2258
    %v2340 = vunpack.c.h.b16 %v2258
    %v2341 = vunpack.c.l.b16 %v2259
    %v2342 = vunpack.c.h.b16 %v2259
    %v2343 = vunpack.c.l.b16 %v2260
    %v2344 = vunpack.c.h.b16 %v2260
    %v2345 = vunpack.c.l.b16 %v2261
    %v2346 = vunpack.c.h.b16 %v2261
    %v2347 = vunpack.c.l.b16 %v2262
    %v2348 = vunpack.c.h.b16 %v2262
    %v2349 = vunpack.c.l.b16 %v2263
    %v2350 = vunpack.c.h.b16 %v2263
    %v2351 = vunpack.c.l.b16 %v2264
    %v2352 = vunpack.c.h.b16 %v2264
    %v2353 = vunpack.c.l.b16 %v2265
    %v2354 = vunpack.c.h.b16 %v2265
    %v2355 = vunpack.c.l.b16 %v2266
    %v2356 = vunpack.c.h.b16 %v2266
    %v2357 = vunpack.c.l.b16 %v2267
    %v2358 = vunpack.c.h.b16 %v2267
    %v2359 = vunpack.c.l.b16 %v2268
    %v2360 = vunpack.c.h.b16 %v2268
    %v2361 = vunpack.c.l.b16 %v2269
    %v2362 = vunpack.c.h.b16 %v2269
    %v2363 = vunpack.c.l.b16 %v2270
    %v2364 = vunpack.c.h.b16 %v2270
    %v2365 = vunpack.c.l.b16 %v2271
    %v2366 = vunpack.c.h.b16 %v2271
    %v2367 = vunpack.c.l.b16 %v2272
    %v2368 = vunpack.c.h.b16 %v2272
    %v2369 = vpack.c.b16 %v2307, %v2305
    %v2370 = vpack.c.b16 %v2308, %v2306
    %v2371 = vpack.c.b16 %v2311, %v2309
    %v2372 = vpack.c.b16 %v2312, %v2310
    %v2373 = vpack.c.b16 %v2315, %v2313
    %v2374 = vpack.c.b16 %v2316, %v2314
    %v2375 = vpack.c.b16 %v2319, %v2317
    %v2376 = vpack.c.b16 %v2320, %v2318
    %v2377 = vpack.c.b16 %v2323, %v2321
    %v2378 = vpack.c.b16 %v2324, %v2322
    %v2379 = vpack.c.b16 %v2327, %v2325
    %v2380 = vpack.c.b16 %v2328, %v2326
    %v2381 = vpack.c.b16 %v2331, %v2329
    %v2382 = vpack.c.b16 %v2332, %v2330
    %v2383 = vpack.c.b16 %v2335, %v2333
    %v2384 = vpack.c.b16 %v2336, %v2334
    %v2385 = vpack.c.b16 %v2339, %v2337
    %v2386 = vpack.c.b16 %v2340, %v2338
    %v2387 = vpack.c.b16 %v2343, %v2341
    %v2388 = vpack.c.b16 %v2344, %v2342
    %v2389 = vpack.c.b16 %v2347, %v2345
    %v2390 = vpack.c.b16 %v2348, %v2346
    %v2391 = vpack.c.b16 %v2351, %v2349
    %v2392 = vpack.c.b16 %v2352, %v2350
    %v2393 = vpack.c.b16 %v2355, %v2353
    %v2394 = vpack.c.b16 %v2356, %v2354
    %v2395 = vpack.c.b16 %v2359, %v2357
    %v2396 = vpack.c.b16 %v2360, %v2358
    %v2397 = vpack.c.b16 %v2363, %v2361
    %v2398 = vpack.c.b16 %v2364, %v2362
    %v2399 = vpack.c.b16 %v2367, %v2365
    %v2400 = vpack.c.b16 %v2368, %v2366
    %2433 = vmatprep.subr.bf16.mxu0 %v2370
    %2434 = vmatpush1.bf16.msra.mxu0 %v2369
    %2435 = vmatprep.subr.bf16.mxu0 %v2372
    %2436 = vmatpush1.bf16.msra.mxu0 %v2371
    %2437 = vmatprep.subr.bf16.mxu0 %v2374
    %2438 = vmatpush1.bf16.msra.mxu0 %v2373
    %2439 = vmatprep.subr.bf16.mxu0 %v2376
    %2440 = vmatpush1.bf16.msra.mxu0 %v2375
    %2441 = vmatprep.subr.bf16.mxu0 %v2378
    %2442 = vmatpush1.bf16.msra.mxu0 %v2377
    %2443 = vmatprep.subr.bf16.mxu0 %v2380
    %2444 = vmatpush1.bf16.msra.mxu0 %v2379
    %2445 = vmatprep.subr.bf16.mxu0 %v2382
    %2446 = vmatpush1.bf16.msra.mxu0 %v2381
    %2447 = vmatprep.subr.bf16.mxu0 %v2384
    %2448 = vmatpush1.bf16.msra.mxu0 %v2383
    %2449 = vmatprep.subr.bf16.mxu0 %v2386
    %2450 = vmatpush1.bf16.msra.mxu0 %v2385
    %2451 = vmatprep.subr.bf16.mxu0 %v2388
    %2452 = vmatpush1.bf16.msra.mxu0 %v2387
    %2453 = vmatprep.subr.bf16.mxu0 %v2390
    %2454 = vmatpush1.bf16.msra.mxu0 %v2389
    %2455 = vmatprep.subr.bf16.mxu0 %v2392
    %2456 = vmatpush1.bf16.msra.mxu0 %v2391
    %2457 = vmatprep.subr.bf16.mxu0 %v2394
    %2458 = vmatpush1.bf16.msra.mxu0 %v2393
    %2459 = vmatprep.subr.bf16.mxu0 %v2396
    %2460 = vmatpush1.bf16.msra.mxu0 %v2395
    %2461 = vmatprep.subr.bf16.mxu0 %v2398
    %2462 = vmatpush1.bf16.msra.mxu0 %v2397
    %2463 = vmatprep.subr.bf16.mxu0 %v2400
    %2464 = vmatpush1.bf16.msra.mxu0 %v2399
    %2465 = vmatprep.mubr.bf16.mxu0 %v2240
    %2466 = vmatmul.mubr.bf16.gmra.mrb[0].mxu0 %v2239
    %v2467 = vpop.f32.mrb[0].mxu0
    %v2468 = vadd.f32 0.0, %v2467
    %v2469 = vpop.f32.mrb[0].mxu0
    %v2470 = vadd.f32 0.0, %v2469
    %v2471 = vpop.f32.mrb[0].mxu0
    %v2472 = vadd.f32 0.0, %v2471
    %v2473 = vpop.f32.mrb[0].mxu0
    %v2474 = vadd.f32 0.0, %v2473
    %2475 = vdwg.mxu0
    %v2476 = vmax.f32 %v2468, %v2470
    %v2477 = vmax.f32 %v2472, %v2474
    %v2478 = vld [vmem:[%s3 + $0x1] sm:$0x1]
    %v2479 = vlaneseq
    %v2480 = vshrl.u32 %v2479, 7
    %v2481 = vsub.s32 0, %v2480
    %v2482 = vrot.slane %v2478, %v2481
    %v2483 = vadd.f32 %v2476, %v2482
    %v2484 = vadd.f32 %v2477, %v2482
    %v2485 = vmax.f32 %v2483, 0.0
    %v2486 = vmax.f32 %v2484, 0.0
    %2487 = vst [vmem:[#allocation3] sm:$0xff] %v2485
    %2488 = vst [vmem:[#allocation3 + $0x8] sm:$0x3] %v2486
    %v2489 = vld [vmem:[#allocation3] sm:$0x3]
    %v2490 = vpack.c.bf16 %v2489, %v2489
    %v2491 = vld [vmem:[%s2] sm:$0xf]
    %v2492 = vld [vmem:[%s2 + $0x4] sm:$0xf]
    %v2493 = vld [vmem:[%s2 + $0x8] sm:$0xf]
    %v2494 = vld [vmem:[%s2 + $0xc] sm:$0xf]
    %v2495 = vld [vmem:[%s2 + $0x10] sm:$0xf]
    %v2496 = vld [vmem:[%s2 + $0x14] sm:$0xf]
    %v2497 = vld [vmem:[%s2 + $0x18] sm:$0xf]
    %v2498 = vld [vmem:[%s2 + $0x1c] sm:$0xf]
    %v2499 = vld [vmem:[%s2 + $0x20] sm:$0xf]
    %v2500 = vld [vmem:[%s2 + $0x24] sm:$0xf]
    %v2501 = vld [vmem:[%s2 + $0x28] sm:$0xf]
    %v2502 = vld [vmem:[%s2 + $0x2c] sm:$0xf]
    %v2503 = vld [vmem:[%s2 + $0x30] sm:$0xf]
    %v2504 = vld [vmem:[%s2 + $0x34] sm:$0xf]
    %v2505 = vld [vmem:[%s2 + $0x38] sm:$0xf]
    %v2506 = vld [vmem:[%s2 + $0x3c] sm:$0xf]
    %v2507 = vld [vmem:[#allocation3 + $0x2] sm:$0x3]
    %v2508 = vpack.c.bf16 %v2507, %v2507
    %v2509 = vld [vmem:[%s2 + $0x40] sm:$0xf]
    %v2510 = vld [vmem:[%s2 + $0x44] sm:$0xf]
    %v2511 = vld [vmem:[%s2 + $0x48] sm:$0xf]
    %v2512 = vld [vmem:[%s2 + $0x4c] sm:$0xf]
    %v2513 = vld [vmem:[%s2 + $0x50] sm:$0xf]
    %v2514 = vld [vmem:[%s2 + $0x54] sm:$0xf]
    %v2515 = vld [vmem:[%s2 + $0x58] sm:$0xf]
    %v2516 = vld [vmem:[%s2 + $0x5c] sm:$0xf]
    %v2517 = vld [vmem:[%s2 + $0x60] sm:$0xf]
    %v2518 = vld [vmem:[%s2 + $0x64] sm:$0xf]
    %v2519 = vld [vmem:[%s2 + $0x68] sm:$0xf]
    %v2520 = vld [vmem:[%s2 + $0x6c] sm:$0xf]
    %v2521 = vld [vmem:[%s2 + $0x70] sm:$0xf]
    %v2522 = vld [vmem:[%s2 + $0x74] sm:$0xf]
    %v2523 = vld [vmem:[%s2 + $0x78] sm:$0xf]
    %v2524 = vld [vmem:[%s2 + $0x7c] sm:$0xf]
    %v2541 = vunpack.c.l.b16 %v2509
    %v2542 = vunpack.c.l.b16 %v2510
    %v2543 = vunpack.c.l.b16 %v2511
    %v2544 = vunpack.c.l.b16 %v2512
    %v2545 = vunpack.c.l.b16 %v2513
    %v2546 = vunpack.c.l.b16 %v2514
    %v2547 = vunpack.c.l.b16 %v2515
    %v2548 = vunpack.c.l.b16 %v2516
    %v2549 = vunpack.c.l.b16 %v2517
    %v2550 = vunpack.c.l.b16 %v2518
    %v2551 = vunpack.c.l.b16 %v2519
    %v2552 = vunpack.c.l.b16 %v2520
    %v2553 = vunpack.c.l.b16 %v2521
    %v2554 = vunpack.c.l.b16 %v2522
    %v2555 = vunpack.c.l.b16 %v2523
    %v2556 = vunpack.c.l.b16 %v2524
    %v2557 = vpack.c.b16 %v2542, %v2541
    %v2558 = vpack.c.b16 %v2544, %v2543
    %v2559 = vpack.c.b16 %v2546, %v2545
    %v2560 = vpack.c.b16 %v2548, %v2547
    %v2561 = vpack.c.b16 %v2550, %v2549
    %v2562 = vpack.c.b16 %v2552, %v2551
    %v2563 = vpack.c.b16 %v2554, %v2553
    %v2564 = vpack.c.b16 %v2556, %v2555
    %2573 = vmatprep.subr.bf16.mxu0 0
    %2574 = vmatpush1.bf16.msra.mxu0 %v2557
    %2575 = vmatprep.subr.bf16.mxu0 0
    %2576 = vmatpush1.bf16.msra.mxu0 %v2558
    %2577 = vmatprep.subr.bf16.mxu0 0
    %2578 = vmatpush1.bf16.msra.mxu0 %v2559
    %2579 = vmatprep.subr.bf16.mxu0 0
    %2580 = vmatpush1.bf16.msra.mxu0 %v2560
    %2581 = vmatprep.subr.bf16.mxu0 0
    %2582 = vmatpush1.bf16.msra.mxu0 %v2561
    %2583 = vmatprep.subr.bf16.mxu0 0
    %2584 = vmatpush1.bf16.msra.mxu0 %v2562
    %2585 = vmatprep.subr.bf16.mxu0 0
    %2586 = vmatpush1.bf16.msra.mxu0 %v2563
    %2587 = vmatprep.subr.bf16.mxu0 0
    %2588 = vmatpush1.bf16.msra.mxu0 %v2564
    %2589 = vmatprep.subr.bf16.mxu0 0
    %2590 = vmatpush1.bf16.msra.mxu0 0
    %2591 = vmatprep.subr.bf16.mxu0 0
    %2592 = vmatpush1.bf16.msra.mxu0 0
    %2593 = vmatprep.subr.bf16.mxu0 0
    %2594 = vmatpush1.bf16.msra.mxu0 0
    %2595 = vmatprep.subr.bf16.mxu0 0
    %2596 = vmatpush1.bf16.msra.mxu0 0
    %2597 = vmatprep.subr.bf16.mxu0 0
    %2598 = vmatpush1.bf16.msra.mxu0 0
    %2599 = vmatprep.subr.bf16.mxu0 0
    %2600 = vmatpush1.bf16.msra.mxu0 0
    %2601 = vmatprep.subr.bf16.mxu0 0
    %2602 = vmatpush1.bf16.msra.mxu0 0
    %2603 = vmatprep.subr.bf16.mxu0 0
    %2604 = vmatpush1.bf16.msra.mxu0 0
    %2605 = vmatprep.mubr.bf16.mxu0 0
    %2606 = vmatmul.mubr.bf16.gmra.mrb[0].mxu0 %v2508
    %v2607 = vpop.f32.mrb[0].mxu0
    %v2608 = vadd.f32 0.0, %v2607
    %v2609 = vpop.f32.mrb[0].mxu0
    %v2610 = vpop.f32.mrb[0].mxu0
    %v2611 = vpop.f32.mrb[0].mxu0
    %2612 = vdwg.mxu0
    %v2629 = vunpack.c.l.b16 %v2491
    %v2630 = vunpack.c.l.b16 %v2492
    %v2631 = vunpack.c.l.b16 %v2493
    %v2632 = vunpack.c.l.b16 %v2494
    %v2633 = vunpack.c.l.b16 %v2495
    %v2634 = vunpack.c.l.b16 %v2496
    %v2635 = vunpack.c.l.b16 %v2497
    %v2636 = vunpack.c.l.b16 %v2498
    %v2637 = vunpack.c.l.b16 %v2499
    %v2638 = vunpack.c.l.b16 %v2500
    %v2639 = vunpack.c.l.b16 %v2501
    %v2640 = vunpack.c.l.b16 %v2502
    %v2641 = vunpack.c.l.b16 %v2503
    %v2642 = vunpack.c.l.b16 %v2504
    %v2643 = vunpack.c.l.b16 %v2505
    %v2644 = vunpack.c.l.b16 %v2506
    %v2645 = vpack.c.b16 %v2630, %v2629
    %v2646 = vpack.c.b16 %v2632, %v2631
    %v2647 = vpack.c.b16 %v2634, %v2633
    %v2648 = vpack.c.b16 %v2636, %v2635
    %v2649 = vpack.c.b16 %v2638, %v2637
    %v2650 = vpack.c.b16 %v2640, %v2639
    %v2651 = vpack.c.b16 %v2642, %v2641
    %v2652 = vpack.c.b16 %v2644, %v2643
    %2661 = vmatprep.subr.bf16.mxu0 0
    %2662 = vmatpush1.bf16.msra.mxu0 %v2645
    %2663 = vmatprep.subr.bf16.mxu0 0
    %2664 = vmatpush1.bf16.msra.mxu0 %v2646
    %2665 = vmatprep.subr.bf16.mxu0 0
    %2666 = vmatpush1.bf16.msra.mxu0 %v2647
    %2667 = vmatprep.subr.bf16.mxu0 0
    %2668 = vmatpush1.bf16.msra.mxu0 %v2648
    %2669 = vmatprep.subr.bf16.mxu0 0
    %2670 = vmatpush1.bf16.msra.mxu0 %v2649
    %2671 = vmatprep.subr.bf16.mxu0 0
    %2672 = vmatpush1.bf16.msra.mxu0 %v2650
    %2673 = vmatprep.subr.bf16.mxu0 0
    %2674 = vmatpush1.bf16.msra.mxu0 %v2651
    %2675 = vmatprep.subr.bf16.mxu0 0
    %2676 = vmatpush1.bf16.msra.mxu0 %v2652
    %2677 = vmatprep.subr.bf16.mxu0 0
    %2678 = vmatpush1.bf16.msra.mxu0 0
    %2679 = vmatprep.subr.bf16.mxu0 0
    %2680 = vmatpush1.bf16.msra.mxu0 0
    %2681 = vmatprep.subr.bf16.mxu0 0
    %2682 = vmatpush1.bf16.msra.mxu0 0
    %2683 = vmatprep.subr.bf16.mxu0 0
    %2684 = vmatpush1.bf16.msra.mxu0 0
    %2685 = vmatprep.subr.bf16.mxu0 0
    %2686 = vmatpush1.bf16.msra.mxu0 0
    %2687 = vmatprep.subr.bf16.mxu0 0
    %2688 = vmatpush1.bf16.msra.mxu0 0
    %2689 = vmatprep.subr.bf16.mxu0 0
    %2690 = vmatpush1.bf16.msra.mxu0 0
    %2691 = vmatprep.subr.bf16.mxu0 0
    %2692 = vmatpush1.bf16.msra.mxu0 0
    %2693 = vmatprep.mubr.bf16.mxu0 0
    %2694 = vmatmul.mubr.bf16.gmra.mrb[0].mxu0 %v2490
    %v2695 = vpop.f32.mrb[0].mxu0
    %v2696 = vadd.f32 %v2608, %v2695
    %v2697 = vpop.f32.mrb[0].mxu0
    %v2698 = vpop.f32.mrb[0].mxu0
    %v2699 = vpop.f32.mrb[0].mxu0
    %2700 = vdwg.mxu0
    %v2701 = vld [vmem:[#allocation3 + $0x4] sm:$0x3]
    %v2702 = vpack.c.bf16 %v2701, %v2701
    %v2703 = vld [vmem:[%s2 + $0x80] sm:$0xf]
    %v2704 = vld [vmem:[%s2 + $0x84] sm:$0xf]
    %v2705 = vld [vmem:[%s2 + $0x88] sm:$0xf]
    %v2706 = vld [vmem:[%s2 + $0x8c] sm:$0xf]
    %v2707 = vld [vmem:[%s2 + $0x90] sm:$0xf]
    %v2708 = vld [vmem:[%s2 + $0x94] sm:$0xf]
    %v2709 = vld [vmem:[%s2 + $0x98] sm:$0xf]
    %v2710 = vld [vmem:[%s2 + $0x9c] sm:$0xf]
    %v2711 = vld [vmem:[%s2 + $0xa0] sm:$0xf]
    %v2712 = vld [vmem:[%s2 + $0xa4] sm:$0xf]
    %v2713 = vld [vmem:[%s2 + $0xa8] sm:$0xf]
    %v2714 = vld [vmem:[%s2 + $0xac] sm:$0xf]
    %v2715 = vld [vmem:[%s2 + $0xb0] sm:$0xf]
    %v2716 = vld [vmem:[%s2 + $0xb4] sm:$0xf]
    %v2717 = vld [vmem:[%s2 + $0xb8] sm:$0xf]
    %v2718 = vld [vmem:[%s2 + $0xbc] sm:$0xf]
    %v2735 = vunpack.c.l.b16 %v2703
    %v2736 = vunpack.c.l.b16 %v2704
    %v2737 = vunpack.c.l.b16 %v2705
    %v2738 = vunpack.c.l.b16 %v2706
    %v2739 = vunpack.c.l.b16 %v2707
    %v2740 = vunpack.c.l.b16 %v2708
    %v2741 = vunpack.c.l.b16 %v2709
    %v2742 = vunpack.c.l.b16 %v2710
    %v2743 = vunpack.c.l.b16 %v2711
    %v2744 = vunpack.c.l.b16 %v2712
    %v2745 = vunpack.c.l.b16 %v2713
    %v2746 = vunpack.c.l.b16 %v2714
    %v2747 = vunpack.c.l.b16 %v2715
    %v2748 = vunpack.c.l.b16 %v2716
    %v2749 = vunpack.c.l.b16 %v2717
    %v2750 = vunpack.c.l.b16 %v2718
    %v2751 = vpack.c.b16 %v2736, %v2735
    %v2752 = vpack.c.b16 %v2738, %v2737
    %v2753 = vpack.c.b16 %v2740, %v2739
    %v2754 = vpack.c.b16 %v2742, %v2741
    %v2755 = vpack.c.b16 %v2744, %v2743
    %v2756 = vpack.c.b16 %v2746, %v2745
    %v2757 = vpack.c.b16 %v2748, %v2747
    %v2758 = vpack.c.b16 %v2750, %v2749
    %2767 = vmatprep.subr.bf16.mxu0 0
    %2768 = vmatpush1.bf16.msra.mxu0 %v2751
    %2769 = vmatprep.subr.bf16.mxu0 0
    %2770 = vmatpush1.bf16.msra.mxu0 %v2752
    %2771 = vmatprep.subr.bf16.mxu0 0
    %2772 = vmatpush1.bf16.msra.mxu0 %v2753
    %2773 = vmatprep.subr.bf16.mxu0 0
    %2774 = vmatpush1.bf16.msra.mxu0 %v2754
    %2775 = vmatprep.subr.bf16.mxu0 0
    %2776 = vmatpush1.bf16.msra.mxu0 %v2755
    %2777 = vmatprep.subr.bf16.mxu0 0
    %2778 = vmatpush1.bf16.msra.mxu0 %v2756
    %2779 = vmatprep.subr.bf16.mxu0 0
    %2780 = vmatpush1.bf16.msra.mxu0 %v2757
    %2781 = vmatprep.subr.bf16.mxu0 0
    %2782 = vmatpush1.bf16.msra.mxu0 %v2758
    %2783 = vmatprep.subr.bf16.mxu0 0
    %2784 = vmatpush1.bf16.msra.mxu0 0
    %2785 = vmatprep.subr.bf16.mxu0 0
    %2786 = vmatpush1.bf16.msra.mxu0 0
    %2787 = vmatprep.subr.bf16.mxu0 0
    %2788 = vmatpush1.bf16.msra.mxu0 0
    %2789 = vmatprep.subr.bf16.mxu0 0
    %2790 = vmatpush1.bf16.msra.mxu0 0
    %2791 = vmatprep.subr.bf16.mxu0 0
    %2792 = vmatpush1.bf16.msra.mxu0 0
    %2793 = vmatprep.subr.bf16.mxu0 0
    %2794 = vmatpush1.bf16.msra.mxu0 0
    %2795 = vmatprep.subr.bf16.mxu0 0
    %2796 = vmatpush1.bf16.msra.mxu0 0
    %2797 = vmatprep.subr.bf16.mxu0 0
    %2798 = vmatpush1.bf16.msra.mxu0 0
    %2799 = vmatprep.mubr.bf16.mxu0 0
    %2800 = vmatmul.mubr.bf16.gmra.mrb[0].mxu0 %v2702
    %v2801 = vpop.f32.mrb[0].mxu0
    %v2802 = vadd.f32 0.0, %v2801
    %v2803 = vpop.f32.mrb[0].mxu0
    %v2804 = vpop.f32.mrb[0].mxu0
    %v2805 = vpop.f32.mrb[0].mxu0
    %2806 = vdwg.mxu0
    %v2807 = vadd.f32 %v2696, %v2802
    %v2808 = vld [vmem:[#allocation3 + $0x6] sm:$0x3]
    %v2809 = vpack.c.bf16 %v2808, %v2808
    %v2810 = vld [vmem:[%s2 + $0xc0] sm:$0xf]
    %v2811 = vld [vmem:[%s2 + $0xc4] sm:$0xf]
    %v2812 = vld [vmem:[%s2 + $0xc8] sm:$0xf]
    %v2813 = vld [vmem:[%s2 + $0xcc] sm:$0xf]
    %v2814 = vld [vmem:[%s2 + $0xd0] sm:$0xf]
    %v2815 = vld [vmem:[%s2 + $0xd4] sm:$0xf]
    %v2816 = vld [vmem:[%s2 + $0xd8] sm:$0xf]
    %v2817 = vld [vmem:[%s2 + $0xdc] sm:$0xf]
    %v2818 = vld [vmem:[%s2 + $0xe0] sm:$0xf]
    %v2819 = vld [vmem:[%s2 + $0xe4] sm:$0xf]
    %v2820 = vld [vmem:[%s2 + $0xe8] sm:$0xf]
    %v2821 = vld [vmem:[%s2 + $0xec] sm:$0xf]
    %v2822 = vld [vmem:[%s2 + $0xf0] sm:$0xf]
    %v2823 = vld [vmem:[%s2 + $0xf4] sm:$0xf]
    %v2824 = vld [vmem:[%s2 + $0xf8] sm:$0xf]
    %v2825 = vld [vmem:[%s2 + $0xfc] sm:$0xf]
    %v2842 = vunpack.c.l.b16 %v2810
    %v2843 = vunpack.c.l.b16 %v2811
    %v2844 = vunpack.c.l.b16 %v2812
    %v2845 = vunpack.c.l.b16 %v2813
    %v2846 = vunpack.c.l.b16 %v2814
    %v2847 = vunpack.c.l.b16 %v2815
    %v2848 = vunpack.c.l.b16 %v2816
    %v2849 = vunpack.c.l.b16 %v2817
    %v2850 = vunpack.c.l.b16 %v2818
    %v2851 = vunpack.c.l.b16 %v2819
    %v2852 = vunpack.c.l.b16 %v2820
    %v2853 = vunpack.c.l.b16 %v2821
    %v2854 = vunpack.c.l.b16 %v2822
    %v2855 = vunpack.c.l.b16 %v2823
    %v2856 = vunpack.c.l.b16 %v2824
    %v2857 = vunpack.c.l.b16 %v2825
    %v2858 = vpack.c.b16 %v2843, %v2842
    %v2859 = vpack.c.b16 %v2845, %v2844
    %v2860 = vpack.c.b16 %v2847, %v2846
    %v2861 = vpack.c.b16 %v2849, %v2848
    %v2862 = vpack.c.b16 %v2851, %v2850
    %v2863 = vpack.c.b16 %v2853, %v2852
    %v2864 = vpack.c.b16 %v2855, %v2854
    %v2865 = vpack.c.b16 %v2857, %v2856
    %2874 = vmatprep.subr.bf16.mxu0 0
    %2875 = vmatpush1.bf16.msra.mxu0 %v2858
    %2876 = vmatprep.subr.bf16.mxu0 0
    %2877 = vmatpush1.bf16.msra.mxu0 %v2859
    %2878 = vmatprep.subr.bf16.mxu0 0
    %2879 = vmatpush1.bf16.msra.mxu0 %v2860
    %2880 = vmatprep.subr.bf16.mxu0 0
    %2881 = vmatpush1.bf16.msra.mxu0 %v2861
    %2882 = vmatprep.subr.bf16.mxu0 0
    %2883 = vmatpush1.bf16.msra.mxu0 %v2862
    %2884 = vmatprep.subr.bf16.mxu0 0
    %2885 = vmatpush1.bf16.msra.mxu0 %v2863
    %2886 = vmatprep.subr.bf16.mxu0 0
    %2887 = vmatpush1.bf16.msra.mxu0 %v2864
    %2888 = vmatprep.subr.bf16.mxu0 0
    %2889 = vmatpush1.bf16.msra.mxu0 %v2865
    %2890 = vmatprep.subr.bf16.mxu0 0
    %2891 = vmatpush1.bf16.msra.mxu0 0
    %2892 = vmatprep.subr.bf16.mxu0 0
    %2893 = vmatpush1.bf16.msra.mxu0 0
    %2894 = vmatprep.subr.bf16.mxu0 0
    %2895 = vmatpush1.bf16.msra.mxu0 0
    %2896 = vmatprep.subr.bf16.mxu0 0
    %2897 = vmatpush1.bf16.msra.mxu0 0
    %2898 = vmatprep.subr.bf16.mxu0 0
    %2899 = vmatpush1.bf16.msra.mxu0 0
    %2900 = vmatprep.subr.bf16.mxu0 0
    %2901 = vmatpush1.bf16.msra.mxu0 0
    %2902 = vmatprep.subr.bf16.mxu0 0
    %2903 = vmatpush1.bf16.msra.mxu0 0
    %2904 = vmatprep.subr.bf16.mxu0 0
    %2905 = vmatpush1.bf16.msra.mxu0 0
    %2906 = vmatprep.mubr.bf16.mxu0 0
    %2907 = vmatmul.mubr.bf16.gmra.mrb[0].mxu0 %v2809
    %v2908 = vpop.f32.mrb[0].mxu0
    %v2909 = vadd.f32 0.0, %v2908
    %v2910 = vpop.f32.mrb[0].mxu0
    %v2911 = vpop.f32.mrb[0].mxu0
    %v2912 = vpop.f32.mrb[0].mxu0
    %2913 = vdwg.mxu0
    %v2914 = vadd.f32 %v2807, %v2909
    %v2915 = vld [vmem:[#allocation3 + $0x8] sm:$0x3]
    %v2916 = vpack.c.bf16 %v2915, %v2915
    %v2917 = vld [vmem:[%s2 + $0x100] sm:$0xf]
    %v2918 = vld [vmem:[%s2 + $0x104] sm:$0xf]
    %v2919 = vld [vmem:[%s2 + $0x108] sm:$0xf]
    %v2920 = vld [vmem:[%s2 + $0x10c] sm:$0xf]
    %v2921 = vld [vmem:[%s2 + $0x110] sm:$0xf]
    %v2922 = vld [vmem:[%s2 + $0x114] sm:$0xf]
    %v2923 = vld [vmem:[%s2 + $0x118] sm:$0xf]
    %v2924 = vld [vmem:[%s2 + $0x11c] sm:$0xf]
    %v2925 = vld [vmem:[%s2 + $0x120] sm:$0xf]
    %v2926 = vld [vmem:[%s2 + $0x124] sm:$0xf]
    %v2927 = vld [vmem:[%s2 + $0x128] sm:$0xf]
    %v2928 = vld [vmem:[%s2 + $0x12c] sm:$0xf]
    %v2929 = vld [vmem:[%s2 + $0x130] sm:$0xf]
    %v2930 = vld [vmem:[%s2 + $0x134] sm:$0xf]
    %v2931 = vld [vmem:[%s2 + $0x138] sm:$0xf]
    %v2932 = vld [vmem:[%s2 + $0x13c] sm:$0xf]
    %v2949 = vunpack.c.l.b16 %v2917
    %v2950 = vunpack.c.l.b16 %v2918
    %v2951 = vunpack.c.l.b16 %v2919
    %v2952 = vunpack.c.l.b16 %v2920
    %v2953 = vunpack.c.l.b16 %v2921
    %v2954 = vunpack.c.l.b16 %v2922
    %v2955 = vunpack.c.l.b16 %v2923
    %v2956 = vunpack.c.l.b16 %v2924
    %v2957 = vunpack.c.l.b16 %v2925
    %v2958 = vunpack.c.l.b16 %v2926
    %v2959 = vunpack.c.l.b16 %v2927
    %v2960 = vunpack.c.l.b16 %v2928
    %v2961 = vunpack.c.l.b16 %v2929
    %v2962 = vunpack.c.l.b16 %v2930
    %v2963 = vunpack.c.l.b16 %v2931
    %v2964 = vunpack.c.l.b16 %v2932
    %v2965 = vpack.c.b16 %v2950, %v2949
    %v2966 = vpack.c.b16 %v2952, %v2951
    %v2967 = vpack.c.b16 %v2954, %v2953
    %v2968 = vpack.c.b16 %v2956, %v2955
    %v2969 = vpack.c.b16 %v2958, %v2957
    %v2970 = vpack.c.b16 %v2960, %v2959
    %v2971 = vpack.c.b16 %v2962, %v2961
    %v2972 = vpack.c.b16 %v2964, %v2963
    %2981 = vmatprep.subr.bf16.mxu0 0
    %2982 = vmatpush1.bf16.msra.mxu0 %v2965
    %2983 = vmatprep.subr.bf16.mxu0 0
    %2984 = vmatpush1.bf16.msra.mxu0 %v2966
    %2985 = vmatprep.subr.bf16.mxu0 0
    %2986 = vmatpush1.bf16.msra.mxu0 %v2967
    %2987 = vmatprep.subr.bf16.mxu0 0
    %2988 = vmatpush1.bf16.msra.mxu0 %v2968
    %2989 = vmatprep.subr.bf16.mxu0 0
    %2990 = vmatpush1.bf16.msra.mxu0 %v2969
    %2991 = vmatprep.subr.bf16.mxu0 0
    %2992 = vmatpush1.bf16.msra.mxu0 %v2970
    %2993 = vmatprep.subr.bf16.mxu0 0
    %2994 = vmatpush1.bf16.msra.mxu0 %v2971
    %2995 = vmatprep.subr.bf16.mxu0 0
    %2996 = vmatpush1.bf16.msra.mxu0 %v2972
    %2997 = vmatprep.subr.bf16.mxu0 0
    %2998 = vmatpush1.bf16.msra.mxu0 0
    %2999 = vmatprep.subr.bf16.mxu0 0
    %3000 = vmatpush1.bf16.msra.mxu0 0
    %3001 = vmatprep.subr.bf16.mxu0 0
    %3002 = vmatpush1.bf16.msra.mxu0 0
    %3003 = vmatprep.subr.bf16.mxu0 0
    %3004 = vmatpush1.bf16.msra.mxu0 0
    %3005 = vmatprep.subr.bf16.mxu0 0
    %3006 = vmatpush1.bf16.msra.mxu0 0
    %3007 = vmatprep.subr.bf16.mxu0 0
    %3008 = vmatpush1.bf16.msra.mxu0 0
    %3009 = vmatprep.subr.bf16.mxu0 0
    %3010 = vmatpush1.bf16.msra.mxu0 0
    %3011 = vmatprep.subr.bf16.mxu0 0
    %3012 = vmatpush1.bf16.msra.mxu0 0
    %3013 = vmatprep.mubr.bf16.mxu0 0
    %3014 = vmatmul.mubr.bf16.gmra.mrb[0].mxu0 %v2916
    %v3015 = vpop.f32.mrb[0].mxu0
    %v3016 = vadd.f32 0.0, %v3015
    %v3017 = vpop.f32.mrb[0].mxu0
    %v3018 = vpop.f32.mrb[0].mxu0
    %v3019 = vpop.f32.mrb[0].mxu0
    %3020 = vdwg.mxu0
    %v3021 = vadd.f32 %v2914, %v3016
    %v3022 = vld [vmem:[%s3 + $0x2] sm:$0x1]
    %v3023 = vlaneseq
    %v3024 = vshrl.u32 %v3023, 7
    %v3025 = vsub.s32 0, %v3024
    %v3026 = vrot.slane %v3022, %v3025
    %v3027 = vadd.f32 %v3021, %v3026
    %v3028 = vmax.f32 %v3027, 0.0
    %v3029 = vpack.c.bf16 %v3028, %v3028
    %v3030 = vld [vmem:[%s2 + $0x140] sm:$0xf]
    %v3031 = vld [vmem:[%s2 + $0x144] sm:$0xf]
    %v3032 = vld [vmem:[%s2 + $0x148] sm:$0xf]
    %v3033 = vld [vmem:[%s2 + $0x14c] sm:$0xf]
    %v3034 = vld [vmem:[%s2 + $0x150] sm:$0xf]
    %v3035 = vld [vmem:[%s2 + $0x154] sm:$0xf]
    %v3036 = vld [vmem:[%s2 + $0x158] sm:$0xf]
    %v3037 = vld [vmem:[%s2 + $0x15c] sm:$0xf]
    %v3038 = vld [vmem:[%s2 + $0x160] sm:$0xf]
    %v3039 = vld [vmem:[%s2 + $0x164] sm:$0xf]
    %v3040 = vld [vmem:[%s2 + $0x168] sm:$0xf]
    %v3041 = vld [vmem:[%s2 + $0x16c] sm:$0xf]
    %v3042 = vld [vmem:[%s2 + $0x170] sm:$0xf]
    %v3043 = vld [vmem:[%s2 + $0x174] sm:$0xf]
    %v3044 = vld [vmem:[%s2 + $0x178] sm:$0xf]
    %v3045 = vld [vmem:[%s2 + $0x17c] sm:$0xf]
    %v3046 = vld [vmem:[%s3 + $0x3] sm:$0x1]
    %v3047 = vlaneseq
    %v3048 = vshrl.u32 %v3047, 7
    %v3049 = vsub.s32 0, %v3048
    %v3050 = vrot.slane %v3046, %v3049
    %v3067 = vunpack.c.l.b16 %v3030
    %v3068 = vunpack.c.l.b16 %v3031
    %v3069 = vunpack.c.l.b16 %v3032
    %v3070 = vunpack.c.l.b16 %v3033
    %v3071 = vunpack.c.l.b16 %v3034
    %v3072 = vunpack.c.l.b16 %v3035
    %v3073 = vunpack.c.l.b16 %v3036
    %v3074 = vunpack.c.l.b16 %v3037
    %v3075 = vunpack.c.l.b16 %v3038
    %v3076 = vunpack.c.l.b16 %v3039
    %v3077 = vunpack.c.l.b16 %v3040
    %v3078 = vunpack.c.l.b16 %v3041
    %v3079 = vunpack.c.l.b16 %v3042
    %v3080 = vunpack.c.l.b16 %v3043
    %v3081 = vunpack.c.l.b16 %v3044
    %v3082 = vunpack.c.l.b16 %v3045
    %v3083 = vpack.c.b16 %v3068, %v3067
    %v3084 = vpack.c.b16 %v3070, %v3069
    %v3085 = vpack.c.b16 %v3072, %v3071
    %v3086 = vpack.c.b16 %v3074, %v3073
    %v3087 = vpack.c.b16 %v3076, %v3075
    %v3088 = vpack.c.b16 %v3078, %v3077
    %v3089 = vpack.c.b16 %v3080, %v3079
    %v3090 = vpack.c.b16 %v3082, %v3081
    %3099 = vmatprep.subr.bf16.mxu0 0
    %3100 = vmatpush1.bf16.msra.mxu0 %v3083
    %3101 = vmatprep.subr.bf16.mxu0 0
    %3102 = vmatpush1.bf16.msra.mxu0 %v3084
    %3103 = vmatprep.subr.bf16.mxu0 0
    %3104 = vmatpush1.bf16.msra.mxu0 %v3085
    %3105 = vmatprep.subr.bf16.mxu0 0
    %3106 = vmatpush1.bf16.msra.mxu0 %v3086
    %3107 = vmatprep.subr.bf16.mxu0 0
    %3108 = vmatpush1.bf16.msra.mxu0 %v3087
    %3109 = vmatprep.subr.bf16.mxu0 0
    %3110 = vmatpush1.bf16.msra.mxu0 %v3088
    %3111 = vmatprep.subr.bf16.mxu0 0
    %3112 = vmatpush1.bf16.msra.mxu0 %v3089
    %3113 = vmatprep.subr.bf16.mxu0 0
    %3114 = vmatpush1.bf16.msra.mxu0 %v3090
    %3115 = vmatprep.subr.bf16.mxu0 0
    %3116 = vmatpush1.bf16.msra.mxu0 0
    %3117 = vmatprep.subr.bf16.mxu0 0
    %3118 = vmatpush1.bf16.msra.mxu0 0
    %3119 = vmatprep.subr.bf16.mxu0 0
    %3120 = vmatpush1.bf16.msra.mxu0 0
    %3121 = vmatprep.subr.bf16.mxu0 0
    %3122 = vmatpush1.bf16.msra.mxu0 0
    %3123 = vmatprep.subr.bf16.mxu0 0
    %3124 = vmatpush1.bf16.msra.mxu0 0
    %3125 = vmatprep.subr.bf16.mxu0 0
    %3126 = vmatpush1.bf16.msra.mxu0 0
    %3127 = vmatprep.subr.bf16.mxu0 0
    %3128 = vmatpush1.bf16.msra.mxu0 0
    %3129 = vmatprep.subr.bf16.mxu0 0
    %3130 = vmatpush1.bf16.msra.mxu0 0
    %3131 = vmatprep.mubr.bf16.mxu0 0
    %3132 = vmatmul.mubr.bf16.gmra.mrb[0].mxu0 %v3029
    %v3133 = vpop.f32.mrb[0].mxu0
    %v3134 = vadd.f32 %v3050, %v3133
    %v3135 = vpop.f32.mrb[0].mxu0
    %v3136 = vpop.f32.mrb[0].mxu0
    %v3137 = vpop.f32.mrb[0].mxu0
    %3138 = vdwg.mxu0
    %v3139 = vmax.f32 %v3134, 0.0
    %v3140 = vpack.c.bf16 %v3139, %v3139
    %v3141 = vld [vmem:[%s2 + $0x180] sm:$0xf]
    %v3142 = vld [vmem:[%s2 + $0x184] sm:$0xf]
    %v3143 = vld [vmem:[%s2 + $0x188] sm:$0xf]
    %v3144 = vld [vmem:[%s2 + $0x18c] sm:$0xf]
    %v3145 = vld [vmem:[%s2 + $0x190] sm:$0xf]
    %v3146 = vld [vmem:[%s2 + $0x194] sm:$0xf]
    %v3147 = vld [vmem:[%s2 + $0x198] sm:$0xf]
    %v3148 = vld [vmem:[%s2 + $0x19c] sm:$0xf]
    %v3149 = vld [vmem:[%s2 + $0x1a0] sm:$0xf]
    %v3150 = vld [vmem:[%s2 + $0x1a4] sm:$0xf]
    %v3151 = vld [vmem:[%s2 + $0x1a8] sm:$0xf]
    %v3152 = vld [vmem:[%s2 + $0x1ac] sm:$0xf]
    %v3153 = vld [vmem:[%s2 + $0x1b0] sm:$0xf]
    %v3154 = vld [vmem:[%s2 + $0x1b4] sm:$0xf]
    %v3155 = vld [vmem:[%s2 + $0x1b8] sm:$0xf]
    %v3156 = vld [vmem:[%s2 + $0x1bc] sm:$0xf]
    %v3157 = vld [vmem:[%s3 + $0x4] sm:$0x1]
    %v3158 = vlaneseq
    %v3159 = vshrl.u32 %v3158, 7
    %v3160 = vsub.s32 0, %v3159
    %v3161 = vrot.slane %v3157, %v3160
    %v3178 = vunpack.c.l.b16 %v3141
    %v3179 = vunpack.c.l.b16 %v3142
    %v3180 = vunpack.c.l.b16 %v3143
    %v3181 = vunpack.c.l.b16 %v3144
    %v3182 = vunpack.c.l.b16 %v3145
    %v3183 = vunpack.c.l.b16 %v3146
    %v3184 = vunpack.c.l.b16 %v3147
    %v3185 = vunpack.c.l.b16 %v3148
    %v3186 = vunpack.c.l.b16 %v3149
    %v3187 = vunpack.c.l.b16 %v3150
    %v3188 = vunpack.c.l.b16 %v3151
    %v3189 = vunpack.c.l.b16 %v3152
    %v3190 = vunpack.c.l.b16 %v3153
    %v3191 = vunpack.c.l.b16 %v3154
    %v3192 = vunpack.c.l.b16 %v3155
    %v3193 = vunpack.c.l.b16 %v3156
    %v3194 = vpack.c.b16 %v3179, %v3178
    %v3195 = vpack.c.b16 %v3181, %v3180
    %v3196 = vpack.c.b16 %v3183, %v3182
    %v3197 = vpack.c.b16 %v3185, %v3184
    %v3198 = vpack.c.b16 %v3187, %v3186
    %v3199 = vpack.c.b16 %v3189, %v3188
    %v3200 = vpack.c.b16 %v3191, %v3190
    %v3201 = vpack.c.b16 %v3193, %v3192
    %3210 = vmatprep.subr.bf16.mxu0 0
    %3211 = vmatpush1.bf16.msra.mxu0 %v3194
    %3212 = vmatprep.subr.bf16.mxu0 0
    %3213 = vmatpush1.bf16.msra.mxu0 %v3195
    %3214 = vmatprep.subr.bf16.mxu0 0
    %3215 = vmatpush1.bf16.msra.mxu0 %v3196
    %3216 = vmatprep.subr.bf16.mxu0 0
    %3217 = vmatpush1.bf16.msra.mxu0 %v3197
    %3218 = vmatprep.subr.bf16.mxu0 0
    %3219 = vmatpush1.bf16.msra.mxu0 %v3198
    %3220 = vmatprep.subr.bf16.mxu0 0
    %3221 = vmatpush1.bf16.msra.mxu0 %v3199
    %3222 = vmatprep.subr.bf16.mxu0 0
    %3223 = vmatpush1.bf16.msra.mxu0 %v3200
    %3224 = vmatprep.subr.bf16.mxu0 0
    %3225 = vmatpush1.bf16.msra.mxu0 %v3201
    %3226 = vmatprep.subr.bf16.mxu0 0
    %3227 = vmatpush1.bf16.msra.mxu0 0
    %3228 = vmatprep.subr.bf16.mxu0 0
    %3229 = vmatpush1.bf16.msra.mxu0 0
    %3230 = vmatprep.subr.bf16.mxu0 0
    %3231 = vmatpush1.bf16.msra.mxu0 0
    %3232 = vmatprep.subr.bf16.mxu0 0
    %3233 = vmatpush1.bf16.msra.mxu0 0
    %3234 = vmatprep.subr.bf16.mxu0 0
    %3235 = vmatpush1.bf16.msra.mxu0 0
    %3236 = vmatprep.subr.bf16.mxu0 0
    %3237 = vmatpush1.bf16.msra.mxu0 0
    %3238 = vmatprep.subr.bf16.mxu0 0
    %3239 = vmatpush1.bf16.msra.mxu0 0
    %3240 = vmatprep.subr.bf16.mxu0 0
    %3241 = vmatpush1.bf16.msra.mxu0 0
    %3242 = vmatprep.mubr.bf16.mxu0 0
    %3243 = vmatmul.mubr.bf16.gmra.mrb[0].mxu0 %v3140
    %v3244 = vpop.f32.mrb[0].mxu0
    %v3245 = vadd.f32 %v3161, %v3244
    %v3246 = vpop.f32.mrb[0].mxu0
    %v3247 = vpop.f32.mrb[0].mxu0
    %v3248 = vpop.f32.mrb[0].mxu0
    %3249 = vdwg.mxu0
    %3250 = vst [vmem:[#allocation7] sm:$0x3] %v3245
    // Predicated region
    $region22: #{lenet_forward.1} parent=1 // pred_check
      _
    $region23: #{lenet_forward.1} parent=1 // pred_check_branch
      %3252 = sbr.rel (0) target = $region25
    $region24: #{lenet_forward.1} parent=1 // pred_region
      %s3254 = ssub.s32 32, 32
      %3255 = vsyncadd [#allocation6], %s3254
      %s3257 = sshll.u32 [#allocation7], 4
      %s3258 = int_to_ptr.vmem [resolvable:$true] %s3257
      %3260 = dma.vmem_to_hbm [thread:$0]  %s3258, 32, %s4, [#allocation6]
    $region25: #{lenet_forward.1} parent=1 // pred_fallthru
      _
    // Predicated region
    $region26: #{lenet_forward.1} parent=1 // pred_check
      _
    $region27: #{lenet_forward.1} parent=1 // pred_check_branch
      %3262 = sbr.rel (0) target = $region29
    $region28: #{lenet_forward.1} parent=1 // pred_region
      %3263 = dma.done [#allocation6], 32
    $region29: #{lenet_forward.1} parent=1 // pred_fallthru
      _
    %3264 = vsyncpa [#allocation5], 1
    %3265 = vsyncpa [#allocation6], 1

</llo_original>
